<compile_context>
chip_gen: v7x
topology: tpu7x:2x2x1
jax: 0.10.0
libtpu: 0.0.40
codegen_flags: <defaults>
</compile_context>

<pallas_src>
import jax
import jax.numpy as jnp
import numpy as np
from jax import lax
from jax.experimental import pallas as pl
from jax.experimental.pallas import tpu as pltpu

EPS = 1e-5


def _round_up(x, m):
    return (x + m - 1) // m * m


def _cdiv(a, b):
    return -(-a // b)


def _vmem_limit_bytes():
    cap = 128 * 1024 * 1024
    try:
        cap = int(pltpu.get_tpu_info().vmem_capacity_bytes)
    except Exception:
        pass
    # leave headroom for double-buffered blocks + Mosaic internal scratch
    return min(cap * 5 // 8, 100 * 1024 * 1024)


def _choose_block_h(N, H, wp8, cinp, cin, cout, vmem_limit):
    """Band height along low-res H: aim for >=8 grid steps, fit the VMEM budget."""
    nb_target = max(1, _cdiv(8, N))
    bh = max(1, _cdiv(H, nb_target))

    def footprint(b):
        rin, rout = (b + 3) * wp8, b * wp8
        return (2 * rin * cinp * 2            # double-buffered input block (bf16)
                + 2 * 4 * rout * cout * 2     # double-buffered 4-phase output (bf16)
                + 9 * rout * cinp * 2         # resident shifted windows (bf16)
                + 2 * rout * (cin + cout) * 4)  # f32 accumulator / epilogue temps

    budget = max(1 << 20, vmem_limit // 3)
    while bh > 1 and footprint(bh) > budget:
        bh = max(1, bh // 2)
    return min(bh, H)


# --------------------------------------------------------------------------
# Fused kernel: per band of low-res rows, per output parity (a, b):
#   Z  = sum_{i,j in {0,1}} Xwin[a+i, b+j] @ M[a,b,i,j]        (deconv∘conv3x3∘bn1)
#   act = relu(Z + b1)
#   O  = relu(act @ W2 + b2 + Xwin[1,1] @ Wu[a,b])              (conv1x1∘bn2 + skip)
# Xwin[r, s] is the flattened padded input band shifted by (r rows, s cols); the
# row shift r*wp8 is sublane-aligned (wp8 % 8 == 0).
# --------------------------------------------------------------------------
def _make_fused_kernel(wp8, out_rows):
    def kernel(x_ref, m_ref, wu_ref, w2_ref, b1_ref, b2_ref, o_ref):
        # 9 distinct shifted windows of the padded band, each loaded once.
        win = [[x_ref[pl.ds(r * wp8 + s, out_rows), :] for s in range(3)]
               for r in range(3)]
        w2 = w2_ref[...]
        b1 = b1_ref[...]
        b2 = b2_ref[...]
        for a in range(2):
            for b in range(2):
                ph = 2 * a + b
                acc = jnp.dot(win[a][b], m_ref[4 * ph + 0],
                              preferred_element_type=jnp.float32)
                acc = acc + jnp.dot(win[a][b + 1], m_ref[4 * ph + 1],
                                    preferred_element_type=jnp.float32)
                acc = acc + jnp.dot(win[a + 1][b], m_ref[4 * ph + 2],
                                    preferred_element_type=jnp.float32)
                acc = acc + jnp.dot(win[a + 1][b + 1], m_ref[4 * ph + 3],
                                    preferred_element_type=jnp.float32)
                act = jnp.maximum(acc + b1, 0.0)                 # bn1 bias + ReLU
                main = jnp.dot(act.astype(w2.dtype), w2,
                               preferred_element_type=jnp.float32)
                skip = jnp.dot(win[1][1], wu_ref[ph],
                               preferred_element_type=jnp.float32)
                o_ref[ph] = jnp.maximum(main + b2 + skip, 0.0).astype(o_ref.dtype)
    return kernel


def _bn_fold(gamma, beta, mean, var):
    s = gamma / jnp.sqrt(var + EPS)
    return s, beta - mean * s


# (dh, parity') contributions per (output parity a, low-res tap offset i)
_CONTRIBS = (([(0, 1)], [(1, 0), (2, 1)]),     # a = 0: i=0 -> dh=0/ph'=1 ; i=1 -> dh=1,2
             ([(0, 0), (1, 1)], [(2, 0)]))     # a = 1


# --------------------------------------------------------------------------
# Forward pass (NCHW in/out, matching the PyTorch module; eval-mode BN)
# --------------------------------------------------------------------------
def deconv_block_forward(x_nchw, p, block_h=None):
    N, Cin, H, W = x_nchw.shape
    Cout = p["conv2_w"].shape[0]
    Cinp = Cin + 1                               # + ones channel carrying the biases
    Wp8 = _round_up(W + 2, 8)                    # padded width, sublane-aligned

    vmem_limit = _vmem_limit_bytes()
    if block_h is None:
        block_h = _choose_block_h(N, H, Wp8, Cinp, Cin, Cout, vmem_limit)
    nb = _cdiv(H, block_h)

    # ---- fold BN, compose convt∘conv3x3 into 16 per-phase 2x2 taps (f32 prep) ----
    s1, b1 = _bn_fold(*p["bn1"])
    s2, b2 = _bn_fold(*p["bn2"])
    su, bu = _bn_fold(*p["up_bn"])

    kp = jnp.transpose(p["conv1_w"], (2, 3, 1, 0)) * s1[None, None, None, :]   # (3,3,Ci,Ci)
    wt = jnp.transpose(p["convt_w"], (2, 3, 0, 1))                             # (2,2,Ci,Ci)
    wt_aug = jnp.concatenate(
        [wt, jnp.broadcast_to(p["convt_b"], (2, 2, 1, Cin))], axis=2)          # (2,2,Ci+1,Ci)

    m_taps = []
    for a in range(2):
        for b in range(2):
            for i in range(2):
                for j in range(2):
                    acc = jnp.zeros((Cinp, Cin), jnp.float32)
                    for dh, ah in _CONTRIBS[a][i]:
                        for dw, bw in _CONTRIBS[b][j]:
                            acc = acc + wt_aug[ah, bw] @ kp[dh, dw]
                    m_taps.append(acc)
    m = jnp.stack(m_taps).astype(jnp.bfloat16)                                 # (16,Ci+1,Ci)

    wu = jnp.transpose(p["up_w"], (2, 3, 0, 1)) * su[None, None, None, :]      # (2,2,Ci,Co)
    wu_aug = jnp.concatenate(
        [wu, jnp.broadcast_to(bu, (2, 2, 1, Cout))], axis=2)
    wu_aug = wu_aug.reshape(4, Cinp, Cout).astype(jnp.bfloat16)                # (4,Ci+1,Co)

    w2 = (p["conv2_w"].reshape(Cout, Cin).T * s2[None, :]).astype(jnp.bfloat16)
    b1v = b1.reshape(1, Cin).astype(jnp.float32)
    b2v = b2.reshape(1, Cout).astype(jnp.float32)

    # ---- input: NHWC + ones channel, halo pad, banded gather (small tensor) ----
    xa = jnp.transpose(x_nchw, (0, 2, 3, 1)).astype(jnp.float32)
    xa = jnp.concatenate([xa, jnp.ones((N, H, W, 1), xa.dtype)], axis=-1)      # (N,H,W,Ci+1)
    Hp = nb * block_h + 3
    xa = jnp.pad(xa, ((0, 0), (1, Hp - H - 1), (1, Wp8 - W - 1), (0, 0)))
    row_idx = jnp.arange(nb)[:, None] * block_h + jnp.arange(block_h + 3)[None, :]
    xb = xa[:, row_idx]                                                        # (N,nb,BH+3,Wp8,Ci+1)
    xb = xb.reshape(N * nb, (block_h + 3) * Wp8, Cinp).astype(jnp.bfloat16)

    G = N * nb
    Rin = (block_h + 3) * Wp8
    L = block_h * Wp8

    out = pl.pallas_call(
        _make_fused_kernel(Wp8, L),
        out_shape=jax.ShapeDtypeStruct((G, 4, L, Cout), jnp.bfloat16),
        grid=(G,),
        in_specs=[
            pl.BlockSpec((None, Rin, Cinp), lambda g: (g, 0, 0)),   # input band (+halo)
            pl.BlockSpec((16, Cinp, Cin), lambda g: (0, 0, 0)),     # fused 2x2 taps (resident)
            pl.BlockSpec((4, Cinp, Cout), lambda g: (0, 0, 0)),     # skip weights (BN folded)
            pl.BlockSpec((Cin, Cout), lambda g: (0, 0)),            # conv1x1 (BN2 folded)
            pl.BlockSpec((1, Cin), lambda g: (0, 0)),               # bn1 bias
            pl.BlockSpec((1, Cout), lambda g: (0, 0)),              # bn2 bias
        ],
        out_specs=pl.BlockSpec((None, 4, L, Cout), lambda g: (g, 0, 0, 0)),
        compiler_params=pltpu.CompilerParams(
            dimension_semantics=("parallel",),
            vmem_limit_bytes=vmem_limit),
    )(xb, m, wu_aug, w2, b1v, b2v)

    # ---- single XLA pass: strip dummy columns, interleave phases, go to NCHW ----
    # NOTE: nothing may consume `out` before this slice (dummy columns / padded
    #       band rows hold finite garbage by construction).
    o = out.reshape(N, nb, 2, 2, block_h, Wp8, Cout)[..., :W, :]
    o = jnp.transpose(o, (0, 6, 1, 4, 2, 5, 3))                    # (N,Co,nb,h,a,w,b)
    o = o.reshape(N, Cout, nb * block_h * 2, 2 * W)[:, :, :2 * H, :]
    return o.astype(jnp.float32)


# --------------------------------------------------------------------------
# Deterministic parameter init (same shapes as the PyTorch module)
# --------------------------------------------------------------------------
def init_params(key, inplanes, planes):
    ks = jax.random.split(key, 17)
    nrm = lambda k, shape, s=0.2: jax.random.normal(k, shape, jnp.float32) * s
    uni = lambda k, shape: jax.random.uniform(k, shape, jnp.float32, 0.5, 1.5)
    return {
        "convt_w": nrm(ks[0], (inplanes, inplanes, 2, 2)),
        "convt_b": nrm(ks[1], (inplanes,), 0.1),
        "conv1_w": nrm(ks[2], (inplanes, inplanes, 3, 3)),
        "bn1": (uni(ks[3], (inplanes,)), nrm(ks[4], (inplanes,), 0.1),
                nrm(ks[5], (inplanes,), 0.1), uni(ks[6], (inplanes,))),
        "conv2_w": nrm(ks[7], (planes, inplanes, 1, 1)),
        "bn2": (uni(ks[8], (planes,)), nrm(ks[9], (planes,), 0.1),
                nrm(ks[10], (planes,), 0.1), uni(ks[11], (planes,))),
        "up_w": nrm(ks[12], (inplanes, planes, 2, 2)),
        "up_bn": (uni(ks[13], (planes,)), nrm(ks[14], (planes,), 0.1),
                  nrm(ks[15], (planes,), 0.1), uni(ks[16], (planes,))),
    }


# --------------------------------------------------------------------------
# Pure-JAX reference (lax convs + explicit transposed-conv) for verification
# --------------------------------------------------------------------------
def _convtranspose2x2_ref(x, w, b=None):
    y = jnp.einsum("nchw,cokl->nohkwl", x, w)
    N, Co, H, _, W, _ = y.shape
    y = y.reshape(N, Co, 2 * H, 2 * W)
    if b is not None:
        y = y + b[None, :, None, None]
    return y


def _bn_ref(x, gamma, beta, mean, var):
    return (x - mean[None, :, None, None]) / jnp.sqrt(var[None, :, None, None] + EPS) \
        * gamma[None, :, None, None] + beta[None, :, None, None]


def reference_forward(x, p):
    dn = ("NCHW", "OIHW", "NCHW")
    hp = lax.Precision.HIGHEST
    out = _convtranspose2x2_ref(x, p["convt_w"], p["convt_b"])
    out = lax.conv_general_dilated(out, p["conv1_w"], (1, 1), ((1, 1), (1, 1)),
                                   dimension_numbers=dn, precision=hp)
    out = _bn_ref(out, *p["bn1"])
    out = jnp.maximum(out, 0.0)
    out = lax.conv_general_dilated(out, p["conv2_w"], (1, 1), "VALID",
                                   dimension_numbers=dn, precision=hp)
    out = _bn_ref(out, *p["bn2"])
    up = _convtranspose2x2_ref(x, p["up_w"])
    up = _bn_ref(up, *p["up_bn"])
    return jnp.maximum(out + up, 0.0)


if __name__ == "__main__":
    inplanes, planes = 4, 8
    N, H, W = 2, 16, 16

    key = jax.random.PRNGKey(0)
    kx, kp = jax.random.split(key)
    x = jax.random.normal(kx, (N, inplanes, H, W), jnp.float32)
    params = init_params(kp, inplanes, planes)

    out = jax.block_until_ready(deconv_block_forward(x, params))
    ref = jax.block_until_ready(reference_forward(x, params))

    assert out.shape == (N, planes, 2 * H, 2 * W), out.shape
    # bf16 activations/weights and bf16 output store (f32 accumulation) vs an
    # all-f32 HIGHEST-precision reference.
    np.testing.assert_allclose(np.asarray(out), np.asarray(ref), rtol=3e-2, atol=3e-2)
    print("KERNEL_OK")
</pallas_src>

<mosaic_0001>
module attributes {stable_mosaic.version = 11 : i64} {
  func.func @kernel(%arg0: i32, %arg1: memref<1x168x5xbf16, #tpu.memory_space<vmem>>, %arg2: memref<16x5x4xbf16, #tpu.memory_space<vmem>>, %arg3: memref<4x5x8xbf16, #tpu.memory_space<vmem>>, %arg4: memref<4x8xbf16, #tpu.memory_space<vmem>>, %arg5: memref<1x4xf32, #tpu.memory_space<vmem>>, %arg6: memref<1x8xf32, #tpu.memory_space<vmem>>, %arg7: memref<1x4x96x8xbf16, #tpu.memory_space<vmem>>) attributes {dimension_semantics = [#tpu.dimension_semantics<parallel>], iteration_bounds = array<i64: 8>, scalar_prefetch = 0 : i64, scratch_operands = 0 : i64, tpu.core_type = #tpu.core_type<tc>, window_params = [{transform_indices = @transform_0, window_bounds = array<i64: 1, 168, 5>}, {pipeline_mode = #tpu.pipeline_mode<synchronous>, transform_indices = @transform_1, window_bounds = array<i64: 16, 5, 4>}, {pipeline_mode = #tpu.pipeline_mode<synchronous>, transform_indices = @transform_2, window_bounds = array<i64: 4, 5, 8>}, {pipeline_mode = #tpu.pipeline_mode<synchronous>, transform_indices = @transform_3, window_bounds = array<i64: 4, 8>}, {pipeline_mode = #tpu.pipeline_mode<synchronous>, transform_indices = @transform_4, window_bounds = array<i64: 1, 4>}, {pipeline_mode = #tpu.pipeline_mode<synchronous>, transform_indices = @transform_5, window_bounds = array<i64: 1, 8>}, {transform_indices = @transform_6, window_bounds = array<i64: 1, 4, 96, 8>}]} {
    %c0 = arith.constant 0 : index
    %c0_0 = arith.constant 0 : index
    %c0_1 = arith.constant 0 : index
    %0 = vector.load %arg1[%c0, %c0_0, %c0_1] : memref<1x168x5xbf16, #tpu.memory_space<vmem>>, vector<1x96x5xbf16>
    %1 = vector.shape_cast %0 : vector<1x96x5xbf16> to vector<96x5xbf16>
    %c0_2 = arith.constant 0 : index
    %c1 = arith.constant 1 : index
    %c0_3 = arith.constant 0 : index
    %2 = vector.load %arg1[%c0_2, %c1, %c0_3] : memref<1x168x5xbf16, #tpu.memory_space<vmem>>, vector<1x96x5xbf16>
    %3 = vector.shape_cast %2 : vector<1x96x5xbf16> to vector<96x5xbf16>
    %c0_4 = arith.constant 0 : index
    %c2 = arith.constant 2 : index
    %c0_5 = arith.constant 0 : index
    %4 = vector.load %arg1[%c0_4, %c2, %c0_5] : memref<1x168x5xbf16, #tpu.memory_space<vmem>>, vector<1x96x5xbf16>
    %5 = vector.shape_cast %4 : vector<1x96x5xbf16> to vector<96x5xbf16>
    %c0_6 = arith.constant 0 : index
    %c24 = arith.constant 24 : index
    %c0_7 = arith.constant 0 : index
    %6 = vector.load %arg1[%c0_6, %c24, %c0_7] : memref<1x168x5xbf16, #tpu.memory_space<vmem>>, vector<1x96x5xbf16>
    %7 = vector.shape_cast %6 : vector<1x96x5xbf16> to vector<96x5xbf16>
    %c0_8 = arith.constant 0 : index
    %c25 = arith.constant 25 : index
    %c0_9 = arith.constant 0 : index
    %8 = vector.load %arg1[%c0_8, %c25, %c0_9] : memref<1x168x5xbf16, #tpu.memory_space<vmem>>, vector<1x96x5xbf16>
    %9 = vector.shape_cast %8 : vector<1x96x5xbf16> to vector<96x5xbf16>
    %c0_10 = arith.constant 0 : index
    %c26 = arith.constant 26 : index
    %c0_11 = arith.constant 0 : index
    %10 = vector.load %arg1[%c0_10, %c26, %c0_11] : memref<1x168x5xbf16, #tpu.memory_space<vmem>>, vector<1x96x5xbf16>
    %11 = vector.shape_cast %10 : vector<1x96x5xbf16> to vector<96x5xbf16>
    %c0_12 = arith.constant 0 : index
    %c48 = arith.constant 48 : index
    %c0_13 = arith.constant 0 : index
    %12 = vector.load %arg1[%c0_12, %c48, %c0_13] : memref<1x168x5xbf16, #tpu.memory_space<vmem>>, vector<1x96x5xbf16>
    %13 = vector.shape_cast %12 : vector<1x96x5xbf16> to vector<96x5xbf16>
    %c0_14 = arith.constant 0 : index
    %c49 = arith.constant 49 : index
    %c0_15 = arith.constant 0 : index
    %14 = vector.load %arg1[%c0_14, %c49, %c0_15] : memref<1x168x5xbf16, #tpu.memory_space<vmem>>, vector<1x96x5xbf16>
    %15 = vector.shape_cast %14 : vector<1x96x5xbf16> to vector<96x5xbf16>
    %c0_16 = arith.constant 0 : index
    %c50 = arith.constant 50 : index
    %c0_17 = arith.constant 0 : index
    %16 = vector.load %arg1[%c0_16, %c50, %c0_17] : memref<1x168x5xbf16, #tpu.memory_space<vmem>>, vector<1x96x5xbf16>
    %17 = vector.shape_cast %16 : vector<1x96x5xbf16> to vector<96x5xbf16>
    %c0_18 = arith.constant 0 : index
    %c0_19 = arith.constant 0 : index
    %18 = vector.load %arg4[%c0_18, %c0_19] : memref<4x8xbf16, #tpu.memory_space<vmem>>, vector<4x8xbf16>
    %c0_20 = arith.constant 0 : index
    %c0_21 = arith.constant 0 : index
    %19 = vector.load %arg5[%c0_20, %c0_21] : memref<1x4xf32, #tpu.memory_space<vmem>>, vector<1x4xf32>
    %c0_22 = arith.constant 0 : index
    %c0_23 = arith.constant 0 : index
    %20 = vector.load %arg6[%c0_22, %c0_23] : memref<1x8xf32, #tpu.memory_space<vmem>>, vector<1x8xf32>
    %c0_24 = arith.constant 0 : index
    %c0_25 = arith.constant 0 : index
    %c0_26 = arith.constant 0 : index
    %21 = vector.load %arg2[%c0_24, %c0_25, %c0_26] : memref<16x5x4xbf16, #tpu.memory_space<vmem>>, vector<1x5x4xbf16>
    %22 = vector.shape_cast %21 : vector<1x5x4xbf16> to vector<5x4xbf16>
    %cst = arith.constant dense<0.000000e+00> : vector<96x4xf32>
    %23 = tpu.matmul %1, %22, %cst {dimension_numbers = #tpu.dot_dimension_numbers<[1], [0], [0], [1], [0, 0, 1, 1], [], []>} : vector<96x5xbf16>, vector<5x4xbf16>, vector<96x4xf32> -> vector<96x4xf32>
    %c1_27 = arith.constant 1 : index
    %c0_28 = arith.constant 0 : index
    %c0_29 = arith.constant 0 : index
    %24 = vector.load %arg2[%c1_27, %c0_28, %c0_29] : memref<16x5x4xbf16, #tpu.memory_space<vmem>>, vector<1x5x4xbf16>
    %25 = vector.shape_cast %24 : vector<1x5x4xbf16> to vector<5x4xbf16>
    %cst_30 = arith.constant dense<0.000000e+00> : vector<96x4xf32>
    %26 = tpu.matmul %3, %25, %cst_30 {dimension_numbers = #tpu.dot_dimension_numbers<[1], [0], [0], [1], [0, 0, 1, 1], [], []>} : vector<96x5xbf16>, vector<5x4xbf16>, vector<96x4xf32> -> vector<96x4xf32>
    %27 = arith.addf %23, %26 : vector<96x4xf32>
    %c2_31 = arith.constant 2 : index
    %c0_32 = arith.constant 0 : index
    %c0_33 = arith.constant 0 : index
    %28 = vector.load %arg2[%c2_31, %c0_32, %c0_33] : memref<16x5x4xbf16, #tpu.memory_space<vmem>>, vector<1x5x4xbf16>
    %29 = vector.shape_cast %28 : vector<1x5x4xbf16> to vector<5x4xbf16>
    %cst_34 = arith.constant dense<0.000000e+00> : vector<96x4xf32>
    %30 = tpu.matmul %7, %29, %cst_34 {dimension_numbers = #tpu.dot_dimension_numbers<[1], [0], [0], [1], [0, 0, 1, 1], [], []>} : vector<96x5xbf16>, vector<5x4xbf16>, vector<96x4xf32> -> vector<96x4xf32>
    %31 = arith.addf %27, %30 : vector<96x4xf32>
    %c3 = arith.constant 3 : index
    %c0_35 = arith.constant 0 : index
    %c0_36 = arith.constant 0 : index
    %32 = vector.load %arg2[%c3, %c0_35, %c0_36] : memref<16x5x4xbf16, #tpu.memory_space<vmem>>, vector<1x5x4xbf16>
    %33 = vector.shape_cast %32 : vector<1x5x4xbf16> to vector<5x4xbf16>
    %cst_37 = arith.constant dense<0.000000e+00> : vector<96x4xf32>
    %34 = tpu.matmul %9, %33, %cst_37 {dimension_numbers = #tpu.dot_dimension_numbers<[1], [0], [0], [1], [0, 0, 1, 1], [], []>} : vector<96x5xbf16>, vector<5x4xbf16>, vector<96x4xf32> -> vector<96x4xf32>
    %35 = arith.addf %31, %34 : vector<96x4xf32>
    %36 = vector.broadcast %19 : vector<1x4xf32> to vector<96x4xf32>
    %37 = arith.addf %35, %36 : vector<96x4xf32>
    %cst_38 = arith.constant 0.000000e+00 : f32
    %38 = vector.broadcast %cst_38 : f32 to vector<96x4xf32>
    %39 = arith.maximumf %37, %38 : vector<96x4xf32>
    %40 = arith.truncf %39 : vector<96x4xf32> to vector<96x4xbf16>
    %cst_39 = arith.constant dense<0.000000e+00> : vector<96x8xf32>
    %41 = tpu.matmul %40, %18, %cst_39 {dimension_numbers = #tpu.dot_dimension_numbers<[1], [0], [0], [1], [0, 0, 1, 1], [], []>} : vector<96x4xbf16>, vector<4x8xbf16>, vector<96x8xf32> -> vector<96x8xf32>
    %c0_40 = arith.constant 0 : index
    %c0_41 = arith.constant 0 : index
    %c0_42 = arith.constant 0 : index
    %42 = vector.load %arg3[%c0_40, %c0_41, %c0_42] : memref<4x5x8xbf16, #tpu.memory_space<vmem>>, vector<1x5x8xbf16>
    %43 = vector.shape_cast %42 : vector<1x5x8xbf16> to vector<5x8xbf16>
    %cst_43 = arith.constant dense<0.000000e+00> : vector<96x8xf32>
    %44 = tpu.matmul %9, %43, %cst_43 {dimension_numbers = #tpu.dot_dimension_numbers<[1], [0], [0], [1], [0, 0, 1, 1], [], []>} : vector<96x5xbf16>, vector<5x8xbf16>, vector<96x8xf32> -> vector<96x8xf32>
    %45 = vector.broadcast %20 : vector<1x8xf32> to vector<96x8xf32>
    %46 = arith.addf %41, %45 : vector<96x8xf32>
    %47 = arith.addf %46, %44 : vector<96x8xf32>
    %cst_44 = arith.constant 0.000000e+00 : f32
    %48 = vector.broadcast %cst_44 : f32 to vector<96x8xf32>
    %49 = arith.maximumf %47, %48 : vector<96x8xf32>
    %50 = arith.truncf %49 : vector<96x8xf32> to vector<96x8xbf16>
    %c0_45 = arith.constant 0 : index
    %c0_46 = arith.constant 0 : index
    %c0_47 = arith.constant 0 : index
    %c0_48 = arith.constant 0 : index
    %51 = vector.load %arg7[%c0_45, %c0_46, %c0_47, %c0_48] : memref<1x4x96x8xbf16, #tpu.memory_space<vmem>>, vector<1x1x96x8xbf16>
    %52 = vector.shape_cast %51 : vector<1x1x96x8xbf16> to vector<96x8xbf16>
    %53 = vector.shape_cast %50 : vector<96x8xbf16> to vector<1x1x96x8xbf16>
    tpu.vector_store %arg7[%c0_45, %c0_46, %c0_47, %c0_48], %53 {strides = array<i32>} : memref<1x4x96x8xbf16, #tpu.memory_space<vmem>>, vector<1x1x96x8xbf16>,
    %c4 = arith.constant 4 : index
    %c0_49 = arith.constant 0 : index
    %c0_50 = arith.constant 0 : index
    %54 = vector.load %arg2[%c4, %c0_49, %c0_50] : memref<16x5x4xbf16, #tpu.memory_space<vmem>>, vector<1x5x4xbf16>
    %55 = vector.shape_cast %54 : vector<1x5x4xbf16> to vector<5x4xbf16>
    %cst_51 = arith.constant dense<0.000000e+00> : vector<96x4xf32>
    %56 = tpu.matmul %3, %55, %cst_51 {dimension_numbers = #tpu.dot_dimension_numbers<[1], [0], [0], [1], [0, 0, 1, 1], [], []>} : vector<96x5xbf16>, vector<5x4xbf16>, vector<96x4xf32> -> vector<96x4xf32>
    %c5 = arith.constant 5 : index
    %c0_52 = arith.constant 0 : index
    %c0_53 = arith.constant 0 : index
    %57 = vector.load %arg2[%c5, %c0_52, %c0_53] : memref<16x5x4xbf16, #tpu.memory_space<vmem>>, vector<1x5x4xbf16>
    %58 = vector.shape_cast %57 : vector<1x5x4xbf16> to vector<5x4xbf16>
    %cst_54 = arith.constant dense<0.000000e+00> : vector<96x4xf32>
    %59 = tpu.matmul %5, %58, %cst_54 {dimension_numbers = #tpu.dot_dimension_numbers<[1], [0], [0], [1], [0, 0, 1, 1], [], []>} : vector<96x5xbf16>, vector<5x4xbf16>, vector<96x4xf32> -> vector<96x4xf32>
    %60 = arith.addf %56, %59 : vector<96x4xf32>
    %c6 = arith.constant 6 : index
    %c0_55 = arith.constant 0 : index
    %c0_56 = arith.constant 0 : index
    %61 = vector.load %arg2[%c6, %c0_55, %c0_56] : memref<16x5x4xbf16, #tpu.memory_space<vmem>>, vector<1x5x4xbf16>
    %62 = vector.shape_cast %61 : vector<1x5x4xbf16> to vector<5x4xbf16>
    %cst_57 = arith.constant dense<0.000000e+00> : vector<96x4xf32>
    %63 = tpu.matmul %9, %62, %cst_57 {dimension_numbers = #tpu.dot_dimension_numbers<[1], [0], [0], [1], [0, 0, 1, 1], [], []>} : vector<96x5xbf16>, vector<5x4xbf16>, vector<96x4xf32> -> vector<96x4xf32>
    %64 = arith.addf %60, %63 : vector<96x4xf32>
    %c7 = arith.constant 7 : index
    %c0_58 = arith.constant 0 : index
    %c0_59 = arith.constant 0 : index
    %65 = vector.load %arg2[%c7, %c0_58, %c0_59] : memref<16x5x4xbf16, #tpu.memory_space<vmem>>, vector<1x5x4xbf16>
    %66 = vector.shape_cast %65 : vector<1x5x4xbf16> to vector<5x4xbf16>
    %cst_60 = arith.constant dense<0.000000e+00> : vector<96x4xf32>
    %67 = tpu.matmul %11, %66, %cst_60 {dimension_numbers = #tpu.dot_dimension_numbers<[1], [0], [0], [1], [0, 0, 1, 1], [], []>} : vector<96x5xbf16>, vector<5x4xbf16>, vector<96x4xf32> -> vector<96x4xf32>
    %68 = arith.addf %64, %67 : vector<96x4xf32>
    %69 = vector.broadcast %19 : vector<1x4xf32> to vector<96x4xf32>
    %70 = arith.addf %68, %69 : vector<96x4xf32>
    %cst_61 = arith.constant 0.000000e+00 : f32
    %71 = vector.broadcast %cst_61 : f32 to vector<96x4xf32>
    %72 = arith.maximumf %70, %71 : vector<96x4xf32>
    %73 = arith.truncf %72 : vector<96x4xf32> to vector<96x4xbf16>
    %cst_62 = arith.constant dense<0.000000e+00> : vector<96x8xf32>
    %74 = tpu.matmul %73, %18, %cst_62 {dimension_numbers = #tpu.dot_dimension_numbers<[1], [0], [0], [1], [0, 0, 1, 1], [], []>} : vector<96x4xbf16>, vector<4x8xbf16>, vector<96x8xf32> -> vector<96x8xf32>
    %c1_63 = arith.constant 1 : index
    %c0_64 = arith.constant 0 : index
    %c0_65 = arith.constant 0 : index
    %75 = vector.load %arg3[%c1_63, %c0_64, %c0_65] : memref<4x5x8xbf16, #tpu.memory_space<vmem>>, vector<1x5x8xbf16>
    %76 = vector.shape_cast %75 : vector<1x5x8xbf16> to vector<5x8xbf16>
    %cst_66 = arith.constant dense<0.000000e+00> : vector<96x8xf32>
    %77 = tpu.matmul %9, %76, %cst_66 {dimension_numbers = #tpu.dot_dimension_numbers<[1], [0], [0], [1], [0, 0, 1, 1], [], []>} : vector<96x5xbf16>, vector<5x8xbf16>, vector<96x8xf32> -> vector<96x8xf32>
    %78 = vector.broadcast %20 : vector<1x8xf32> to vector<96x8xf32>
    %79 = arith.addf %74, %78 : vector<96x8xf32>
    %80 = arith.addf %79, %77 : vector<96x8xf32>
    %cst_67 = arith.constant 0.000000e+00 : f32
    %81 = vector.broadcast %cst_67 : f32 to vector<96x8xf32>
    %82 = arith.maximumf %80, %81 : vector<96x8xf32>
    %83 = arith.truncf %82 : vector<96x8xf32> to vector<96x8xbf16>
    %c0_68 = arith.constant 0 : index
    %c1_69 = arith.constant 1 : index
    %c0_70 = arith.constant 0 : index
    %c0_71 = arith.constant 0 : index
    %84 = vector.load %arg7[%c0_68, %c1_69, %c0_70, %c0_71] : memref<1x4x96x8xbf16, #tpu.memory_space<vmem>>, vector<1x1x96x8xbf16>
    %85 = vector.shape_cast %84 : vector<1x1x96x8xbf16> to vector<96x8xbf16>
    %86 = vector.shape_cast %83 : vector<96x8xbf16> to vector<1x1x96x8xbf16>
    tpu.vector_store %arg7[%c0_68, %c1_69, %c0_70, %c0_71], %86 {strides = array<i32>} : memref<1x4x96x8xbf16, #tpu.memory_space<vmem>>, vector<1x1x96x8xbf16>,
    %c8 = arith.constant 8 : index
    %c0_72 = arith.constant 0 : index
    %c0_73 = arith.constant 0 : index
    %87 = vector.load %arg2[%c8, %c0_72, %c0_73] : memref<16x5x4xbf16, #tpu.memory_space<vmem>>, vector<1x5x4xbf16>
    %88 = vector.shape_cast %87 : vector<1x5x4xbf16> to vector<5x4xbf16>
    %cst_74 = arith.constant dense<0.000000e+00> : vector<96x4xf32>
    %89 = tpu.matmul %7, %88, %cst_74 {dimension_numbers = #tpu.dot_dimension_numbers<[1], [0], [0], [1], [0, 0, 1, 1], [], []>} : vector<96x5xbf16>, vector<5x4xbf16>, vector<96x4xf32> -> vector<96x4xf32>
    %c9 = arith.constant 9 : index
    %c0_75 = arith.constant 0 : index
    %c0_76 = arith.constant 0 : index
    %90 = vector.load %arg2[%c9, %c0_75, %c0_76] : memref<16x5x4xbf16, #tpu.memory_space<vmem>>, vector<1x5x4xbf16>
    %91 = vector.shape_cast %90 : vector<1x5x4xbf16> to vector<5x4xbf16>
    %cst_77 = arith.constant dense<0.000000e+00> : vector<96x4xf32>
    %92 = tpu.matmul %9, %91, %cst_77 {dimension_numbers = #tpu.dot_dimension_numbers<[1], [0], [0], [1], [0, 0, 1, 1], [], []>} : vector<96x5xbf16>, vector<5x4xbf16>, vector<96x4xf32> -> vector<96x4xf32>
    %93 = arith.addf %89, %92 : vector<96x4xf32>
    %c10 = arith.constant 10 : index
    %c0_78 = arith.constant 0 : index
    %c0_79 = arith.constant 0 : index
    %94 = vector.load %arg2[%c10, %c0_78, %c0_79] : memref<16x5x4xbf16, #tpu.memory_space<vmem>>, vector<1x5x4xbf16>
    %95 = vector.shape_cast %94 : vector<1x5x4xbf16> to vector<5x4xbf16>
    %cst_80 = arith.constant dense<0.000000e+00> : vector<96x4xf32>
    %96 = tpu.matmul %13, %95, %cst_80 {dimension_numbers = #tpu.dot_dimension_numbers<[1], [0], [0], [1], [0, 0, 1, 1], [], []>} : vector<96x5xbf16>, vector<5x4xbf16>, vector<96x4xf32> -> vector<96x4xf32>
    %97 = arith.addf %93, %96 : vector<96x4xf32>
    %c11 = arith.constant 11 : index
    %c0_81 = arith.constant 0 : index
    %c0_82 = arith.constant 0 : index
    %98 = vector.load %arg2[%c11, %c0_81, %c0_82] : memref<16x5x4xbf16, #tpu.memory_space<vmem>>, vector<1x5x4xbf16>
    %99 = vector.shape_cast %98 : vector<1x5x4xbf16> to vector<5x4xbf16>
    %cst_83 = arith.constant dense<0.000000e+00> : vector<96x4xf32>
    %100 = tpu.matmul %15, %99, %cst_83 {dimension_numbers = #tpu.dot_dimension_numbers<[1], [0], [0], [1], [0, 0, 1, 1], [], []>} : vector<96x5xbf16>, vector<5x4xbf16>, vector<96x4xf32> -> vector<96x4xf32>
    %101 = arith.addf %97, %100 : vector<96x4xf32>
    %102 = vector.broadcast %19 : vector<1x4xf32> to vector<96x4xf32>
    %103 = arith.addf %101, %102 : vector<96x4xf32>
    %cst_84 = arith.constant 0.000000e+00 : f32
    %104 = vector.broadcast %cst_84 : f32 to vector<96x4xf32>
    %105 = arith.maximumf %103, %104 : vector<96x4xf32>
    %106 = arith.truncf %105 : vector<96x4xf32> to vector<96x4xbf16>
    %cst_85 = arith.constant dense<0.000000e+00> : vector<96x8xf32>
    %107 = tpu.matmul %106, %18, %cst_85 {dimension_numbers = #tpu.dot_dimension_numbers<[1], [0], [0], [1], [0, 0, 1, 1], [], []>} : vector<96x4xbf16>, vector<4x8xbf16>, vector<96x8xf32> -> vector<96x8xf32>
    %c2_86 = arith.constant 2 : index
    %c0_87 = arith.constant 0 : index
    %c0_88 = arith.constant 0 : index
    %108 = vector.load %arg3[%c2_86, %c0_87, %c0_88] : memref<4x5x8xbf16, #tpu.memory_space<vmem>>, vector<1x5x8xbf16>
    %109 = vector.shape_cast %108 : vector<1x5x8xbf16> to vector<5x8xbf16>
    %cst_89 = arith.constant dense<0.000000e+00> : vector<96x8xf32>
    %110 = tpu.matmul %9, %109, %cst_89 {dimension_numbers = #tpu.dot_dimension_numbers<[1], [0], [0], [1], [0, 0, 1, 1], [], []>} : vector<96x5xbf16>, vector<5x8xbf16>, vector<96x8xf32> -> vector<96x8xf32>
    %111 = vector.broadcast %20 : vector<1x8xf32> to vector<96x8xf32>
    %112 = arith.addf %107, %111 : vector<96x8xf32>
    %113 = arith.addf %112, %110 : vector<96x8xf32>
    %cst_90 = arith.constant 0.000000e+00 : f32
    %114 = vector.broadcast %cst_90 : f32 to vector<96x8xf32>
    %115 = arith.maximumf %113, %114 : vector<96x8xf32>
    %116 = arith.truncf %115 : vector<96x8xf32> to vector<96x8xbf16>
    %c0_91 = arith.constant 0 : index
    %c2_92 = arith.constant 2 : index
    %c0_93 = arith.constant 0 : index
    %c0_94 = arith.constant 0 : index
    %117 = vector.load %arg7[%c0_91, %c2_92, %c0_93, %c0_94] : memref<1x4x96x8xbf16, #tpu.memory_space<vmem>>, vector<1x1x96x8xbf16>
    %118 = vector.shape_cast %117 : vector<1x1x96x8xbf16> to vector<96x8xbf16>
    %119 = vector.shape_cast %116 : vector<96x8xbf16> to vector<1x1x96x8xbf16>
    tpu.vector_store %arg7[%c0_91, %c2_92, %c0_93, %c0_94], %119 {strides = array<i32>} : memref<1x4x96x8xbf16, #tpu.memory_space<vmem>>, vector<1x1x96x8xbf16>,
    %c12 = arith.constant 12 : index
    %c0_95 = arith.constant 0 : index
    %c0_96 = arith.constant 0 : index
    %120 = vector.load %arg2[%c12, %c0_95, %c0_96] : memref<16x5x4xbf16, #tpu.memory_space<vmem>>, vector<1x5x4xbf16>
    %121 = vector.shape_cast %120 : vector<1x5x4xbf16> to vector<5x4xbf16>
    %cst_97 = arith.constant dense<0.000000e+00> : vector<96x4xf32>
    %122 = tpu.matmul %9, %121, %cst_97 {dimension_numbers = #tpu.dot_dimension_numbers<[1], [0], [0], [1], [0, 0, 1, 1], [], []>} : vector<96x5xbf16>, vector<5x4xbf16>, vector<96x4xf32> -> vector<96x4xf32>
    %c13 = arith.constant 13 : index
    %c0_98 = arith.constant 0 : index
    %c0_99 = arith.constant 0 : index
    %123 = vector.load %arg2[%c13, %c0_98, %c0_99] : memref<16x5x4xbf16, #tpu.memory_space<vmem>>, vector<1x5x4xbf16>
    %124 = vector.shape_cast %123 : vector<1x5x4xbf16> to vector<5x4xbf16>
    %cst_100 = arith.constant dense<0.000000e+00> : vector<96x4xf32>
    %125 = tpu.matmul %11, %124, %cst_100 {dimension_numbers = #tpu.dot_dimension_numbers<[1], [0], [0], [1], [0, 0, 1, 1], [], []>} : vector<96x5xbf16>, vector<5x4xbf16>, vector<96x4xf32> -> vector<96x4xf32>
    %126 = arith.addf %122, %125 : vector<96x4xf32>
    %c14 = arith.constant 14 : index
    %c0_101 = arith.constant 0 : index
    %c0_102 = arith.constant 0 : index
    %127 = vector.load %arg2[%c14, %c0_101, %c0_102] : memref<16x5x4xbf16, #tpu.memory_space<vmem>>, vector<1x5x4xbf16>
    %128 = vector.shape_cast %127 : vector<1x5x4xbf16> to vector<5x4xbf16>
    %cst_103 = arith.constant dense<0.000000e+00> : vector<96x4xf32>
    %129 = tpu.matmul %15, %128, %cst_103 {dimension_numbers = #tpu.dot_dimension_numbers<[1], [0], [0], [1], [0, 0, 1, 1], [], []>} : vector<96x5xbf16>, vector<5x4xbf16>, vector<96x4xf32> -> vector<96x4xf32>
    %130 = arith.addf %126, %129 : vector<96x4xf32>
    %c15 = arith.constant 15 : index
    %c0_104 = arith.constant 0 : index
    %c0_105 = arith.constant 0 : index
    %131 = vector.load %arg2[%c15, %c0_104, %c0_105] : memref<16x5x4xbf16, #tpu.memory_space<vmem>>, vector<1x5x4xbf16>
    %132 = vector.shape_cast %131 : vector<1x5x4xbf16> to vector<5x4xbf16>
    %cst_106 = arith.constant dense<0.000000e+00> : vector<96x4xf32>
    %133 = tpu.matmul %17, %132, %cst_106 {dimension_numbers = #tpu.dot_dimension_numbers<[1], [0], [0], [1], [0, 0, 1, 1], [], []>} : vector<96x5xbf16>, vector<5x4xbf16>, vector<96x4xf32> -> vector<96x4xf32>
    %134 = arith.addf %130, %133 : vector<96x4xf32>
    %135 = vector.broadcast %19 : vector<1x4xf32> to vector<96x4xf32>
    %136 = arith.addf %134, %135 : vector<96x4xf32>
    %cst_107 = arith.constant 0.000000e+00 : f32
    %137 = vector.broadcast %cst_107 : f32 to vector<96x4xf32>
    %138 = arith.maximumf %136, %137 : vector<96x4xf32>
    %139 = arith.truncf %138 : vector<96x4xf32> to vector<96x4xbf16>
    %cst_108 = arith.constant dense<0.000000e+00> : vector<96x8xf32>
    %140 = tpu.matmul %139, %18, %cst_108 {dimension_numbers = #tpu.dot_dimension_numbers<[1], [0], [0], [1], [0, 0, 1, 1], [], []>} : vector<96x4xbf16>, vector<4x8xbf16>, vector<96x8xf32> -> vector<96x8xf32>
    %c3_109 = arith.constant 3 : index
    %c0_110 = arith.constant 0 : index
    %c0_111 = arith.constant 0 : index
    %141 = vector.load %arg3[%c3_109, %c0_110, %c0_111] : memref<4x5x8xbf16, #tpu.memory_space<vmem>>, vector<1x5x8xbf16>
    %142 = vector.shape_cast %141 : vector<1x5x8xbf16> to vector<5x8xbf16>
    %cst_112 = arith.constant dense<0.000000e+00> : vector<96x8xf32>
    %143 = tpu.matmul %9, %142, %cst_112 {dimension_numbers = #tpu.dot_dimension_numbers<[1], [0], [0], [1], [0, 0, 1, 1], [], []>} : vector<96x5xbf16>, vector<5x8xbf16>, vector<96x8xf32> -> vector<96x8xf32>
    %144 = vector.broadcast %20 : vector<1x8xf32> to vector<96x8xf32>
    %145 = arith.addf %140, %144 : vector<96x8xf32>
    %146 = arith.addf %145, %143 : vector<96x8xf32>
    %cst_113 = arith.constant 0.000000e+00 : f32
    %147 = vector.broadcast %cst_113 : f32 to vector<96x8xf32>
    %148 = arith.maximumf %146, %147 : vector<96x8xf32>
    %149 = arith.truncf %148 : vector<96x8xf32> to vector<96x8xbf16>
    %c0_114 = arith.constant 0 : index
    %c3_115 = arith.constant 3 : index
    %c0_116 = arith.constant 0 : index
    %c0_117 = arith.constant 0 : index
    %150 = vector.load %arg7[%c0_114, %c3_115, %c0_116, %c0_117] : memref<1x4x96x8xbf16, #tpu.memory_space<vmem>>, vector<1x1x96x8xbf16>
    %151 = vector.shape_cast %150 : vector<1x1x96x8xbf16> to vector<96x8xbf16>
    %152 = vector.shape_cast %149 : vector<96x8xbf16> to vector<1x1x96x8xbf16>
    tpu.vector_store %arg7[%c0_114, %c3_115, %c0_116, %c0_117], %152 {strides = array<i32>} : memref<1x4x96x8xbf16, #tpu.memory_space<vmem>>, vector<1x1x96x8xbf16>,
    return
  }
  func.func @transform_0(%arg0: i32) -> (i32, i32, i32) {
    %c0_i32 = arith.constant 0 : i32
    %c0_i32_0 = arith.constant 0 : i32
    %c0_i32_1 = arith.constant 0 : i32
    return %arg0, %c0_i32, %c0_i32_0 : i32, i32, i32
  }
  func.func @transform_1(%arg0: i32) -> (i32, i32, i32) {
    %c0_i32 = arith.constant 0 : i32
    %c0_i32_0 = arith.constant 0 : i32
    %c0_i32_1 = arith.constant 0 : i32
    %c0_i32_2 = arith.constant 0 : i32
    return %c0_i32, %c0_i32_0, %c0_i32_1 : i32, i32, i32
  }
  func.func @transform_2(%arg0: i32) -> (i32, i32, i32) {
    %c0_i32 = arith.constant 0 : i32
    %c0_i32_0 = arith.constant 0 : i32
    %c0_i32_1 = arith.constant 0 : i32
    %c0_i32_2 = arith.constant 0 : i32
    return %c0_i32, %c0_i32_0, %c0_i32_1 : i32, i32, i32
  }
  func.func @transform_3(%arg0: i32) -> (i32, i32) {
    %c0_i32 = arith.constant 0 : i32
    %c0_i32_0 = arith.constant 0 : i32
    %c0_i32_1 = arith.constant 0 : i32
    return %c0_i32, %c0_i32_0 : i32, i32
  }
  func.func @transform_4(%arg0: i32) -> (i32, i32) {
    %c0_i32 = arith.constant 0 : i32
    %c0_i32_0 = arith.constant 0 : i32
    %c0_i32_1 = arith.constant 0 : i32
    return %c0_i32, %c0_i32_0 : i32, i32
  }
  func.func @transform_5(%arg0: i32) -> (i32, i32) {
    %c0_i32 = arith.constant 0 : i32
    %c0_i32_0 = arith.constant 0 : i32
    %c0_i32_1 = arith.constant 0 : i32
    return %c0_i32, %c0_i32_0 : i32, i32
  }
  func.func @transform_6(%arg0: i32) -> (i32, i32, i32, i32) {
    %c0_i32 = arith.constant 0 : i32
    %c0_i32_0 = arith.constant 0 : i32
    %c0_i32_1 = arith.constant 0 : i32
    %c0_i32_2 = arith.constant 0 : i32
    return %arg0, %c0_i32, %c0_i32_0, %c0_i32_1 : i32, i32, i32, i32
  }
}

</mosaic_0001>

<llo_original>
// kernel: tpu_custom_call.1
$region0: #{tpu_custom_call.1}
  #allocation0 [shape = 'u32[]', space=smem, size = 0x4, offset = 0x4, fixed_abs, tag = 'smem constant byte address 0x4 - core index']
  #allocation1 [shape = 'u32[144,128]{1,0:T(1,128)}', space=vmem, size = 0x12000, scoped, tag = 'internal scratch']
  %s0 = inlined_call_operand.hbm [shape: bf16[8,168,5], index: 0, kind: input, shape index: {}]
  %s1 = inlined_call_operand.hbm [shape: bf16[16,5,4], index: 1, kind: input, shape index: {}]
  %s2 = inlined_call_operand.hbm [shape: bf16[4,5,8], index: 2, kind: input, shape index: {}]
  %s3 = inlined_call_operand.hbm [shape: bf16[4,8], index: 3, kind: input, shape index: {}]
  %s4 = inlined_call_operand.hbm [shape: f32[1,4], index: 4, kind: input, shape index: {}]
  %s5 = inlined_call_operand.hbm [shape: f32[1,8], index: 5, kind: input, shape index: {}]
  %s6 = inlined_call_operand.hbm [shape: bf16[8,4,96,8], index: 6, kind: output, shape index: {}]
  %s7 = sld [smem:[#allocation0]]
  $region81: #{tpu_custom_call.1} parent=0
    _
  %s9 = ssub.s32 1, %s7
  %s10 = scalar_select 0, %s9, %s7
  $region1: #{tpu_custom_call.1} parent=0
    #allocation2 [shape = 'u8[86016]{0}', space=vmem, size = 0x15000, scoped, tag = 'input window, operand 0']
    #allocation3 [shape = 's32[2]{0}', space=sflag, size = 0x8, scoped, tag = 'scoped memory for tpu_custom_call.1']
    #allocation4 [shape = 's32[2]{0}', space=sflag, size = 0x8, scoped, tag = 'scoped memory for tpu_custom_call.1']
    #allocation5 [shape = 'u8[32768]{0}', space=vmem, size = 0x8000, scoped, tag = 'input window, operand 1, single buffered']
    #allocation6 [shape = 's32[1]{0}', space=sflag, size = 0x4, scoped, tag = 'scoped memory for tpu_custom_call.1']
    #allocation7 [shape = 'u8[8192]{0}', space=vmem, size = 0x2000, scoped, tag = 'input window, operand 2, single buffered']
    #allocation8 [shape = 'u8[1024]{0}', space=vmem, size = 0x400, scoped, tag = 'input window, operand 3, single buffered']
    #allocation9 [shape = 's32[1]{0}', space=sflag, size = 0x4, scoped, tag = 'scoped memory for tpu_custom_call.1']
    #allocation10 [shape = 'u8[512]{0}', space=vmem, size = 0x400, scoped, tag = 'input window, operand 4, single buffered']
    #allocation11 [shape = 'u8[512]{0}', space=vmem, size = 0x400, scoped, tag = 'input window, operand 5, single buffered']
    #allocation12 [shape = 's32[1]{0}', space=sflag, size = 0x4, scoped, tag = 'scoped memory for tpu_custom_call.1']
    #allocation13 [shape = 'u8[196608]{0}', space=vmem, size = 0x30000, scoped, tag = 'output window, operand 0']
    %11 = vsyncpa [#allocation3], 0
    %s12 = scalar_lea.sflag [#allocation3], 1
    %13 = vsyncpa %s12, 0
    %14 = vsyncpa [#allocation6], 0
    %15 = vsyncpa [#allocation9], 0
    %16 = vsyncpa [#allocation12], 0
    %17 = vsyncpa [#allocation4], 0
    %s18 = scalar_lea.sflag [#allocation4], 1
    %19 = vsyncpa %s18, 0
    loop: start=0, step=1, limit=10
    $region2: #{tpu_custom_call.1} parent=1 // loop_pre_header
      _
    $region3: #{tpu_custom_call.1} parent=1 // loop_header
      %s21 = sphi 0, %s25
      %p22 = scmp.ge.s32.totalorder %s21, 10
      %s31 = sphi 0, %s33
      %s34 = sphi 0, %s31
      %s35 = sphi 0, %s34
      %s51 = sphi 0, %s35
      %s55 = sphi 0, %s55
      %s57 = sphi 0, %s55
      %s58 = sphi 0, %s57
      %s72 = sphi 0, %s58
      %s76 = sphi 0, %s76
      %s78 = sphi 0, %s76
      %s79 = sphi 0, %s78
      %s93 = sphi 0, %s79
      %s97 = sphi 0, %s97
      %s99 = sphi 0, %s97
      %s100 = sphi 0, %s99
      %s114 = sphi 0, %s100
      %s118 = sphi 0, %s118
      %s120 = sphi 0, %s118
      %s121 = sphi 0, %s120
      %s135 = sphi 0, %s121
      %s139 = sphi 0, %s139
      %s141 = sphi 0, %s139
      %s142 = sphi 0, %s141
      %s156 = sphi 0, %s142
      %s162 = sphi 0, %s164
      %s165 = sphi 0, %s162
      %s166 = sphi 0, %s165
      %s182 = sphi 0, %s166
    $region4: #{tpu_custom_call.1} parent=1 // loop_header_branch
      %24 = sbr.rel (%p22) target = $region8
    $region5: #{tpu_custom_call.1} parent=1 // loop_body
      %s26 = ssub.s32 %s21, 1
      %s27 = ssub.s32 %s21, 2
      %s28 = sadd.s32 %s21, 1
      %s29 = ssub.s32 %s21, %s28
      %p30 = scmp.eq.s32.totalorder %s29, 0
      %s32 = sadd.s32 %s31, 1
      %s33 = scalar_select %p30, %s31, %s32
      %p36 = pneg %p30
      %p37 = scmp.eq.s32.totalorder %s21, 7
      %p38 = por %p36, %p37
      %p39 = scmp.ne.s32.totalorder %s31, %s34
      %p40 = scmp.eq.s32.totalorder %s21, 0
      %p41 = por %p39, %p40
      %p42 = scmp.ne.s32.totalorder %s31, %s34
      %p43 = scmp.eq.s32.totalorder %s26, 7
      %p44 = por %p42, %p43
      %p45 = scmp.ne.s32.totalorder %s34, %s35
      %p46 = scmp.eq.s32.totalorder %s26, 0
      %p47 = por %p45, %p46
      %p48 = scmp.ne.s32.totalorder %s34, %s35
      %p49 = scmp.eq.s32.totalorder %s27, 7
      %p50 = por %p48, %p49
      %p52 = scmp.ne.s32.totalorder %s35, %s51
      %p53 = scmp.eq.s32.totalorder %s27, 0
      %p54 = por %p52, %p53
      %s56 = sadd.s32 %s55, 1
      %p59 = scmp.eq.s32.totalorder %s21, 7
      %p60 = scmp.ne.s32.totalorder %s55, %s57
      %p61 = scmp.eq.s32.totalorder %s21, 0
      %p62 = por %p60, %p61
      %p63 = scmp.ne.s32.totalorder %s55, %s57
      %p64 = scmp.eq.s32.totalorder %s26, 7
      %p65 = por %p63, %p64
      %p66 = scmp.ne.s32.totalorder %s57, %s58
      %p67 = scmp.eq.s32.totalorder %s26, 0
      %p68 = por %p66, %p67
      %p69 = scmp.ne.s32.totalorder %s57, %s58
      %p70 = scmp.eq.s32.totalorder %s27, 7
      %p71 = por %p69, %p70
      %p73 = scmp.ne.s32.totalorder %s58, %s72
      %p74 = scmp.eq.s32.totalorder %s27, 0
      %p75 = por %p73, %p74
      %s77 = sadd.s32 %s76, 1
      %p80 = scmp.eq.s32.totalorder %s21, 7
      %p81 = scmp.ne.s32.totalorder %s76, %s78
      %p82 = scmp.eq.s32.totalorder %s21, 0
      %p83 = por %p81, %p82
      %p84 = scmp.ne.s32.totalorder %s76, %s78
      %p85 = scmp.eq.s32.totalorder %s26, 7
      %p86 = por %p84, %p85
      %p87 = scmp.ne.s32.totalorder %s78, %s79
      %p88 = scmp.eq.s32.totalorder %s26, 0
      %p89 = por %p87, %p88
      %p90 = scmp.ne.s32.totalorder %s78, %s79
      %p91 = scmp.eq.s32.totalorder %s27, 7
      %p92 = por %p90, %p91
      %p94 = scmp.ne.s32.totalorder %s79, %s93
      %p95 = scmp.eq.s32.totalorder %s27, 0
      %p96 = por %p94, %p95
      %s98 = sadd.s32 %s97, 1
      %p101 = scmp.eq.s32.totalorder %s21, 7
      %p102 = scmp.ne.s32.totalorder %s97, %s99
      %p103 = scmp.eq.s32.totalorder %s21, 0
      %p104 = por %p102, %p103
      %p105 = scmp.ne.s32.totalorder %s97, %s99
      %p106 = scmp.eq.s32.totalorder %s26, 7
      %p107 = por %p105, %p106
      %p108 = scmp.ne.s32.totalorder %s99, %s100
      %p109 = scmp.eq.s32.totalorder %s26, 0
      %p110 = por %p108, %p109
      %p111 = scmp.ne.s32.totalorder %s99, %s100
      %p112 = scmp.eq.s32.totalorder %s27, 7
      %p113 = por %p111, %p112
      %p115 = scmp.ne.s32.totalorder %s100, %s114
      %p116 = scmp.eq.s32.totalorder %s27, 0
      %p117 = por %p115, %p116
      %s119 = sadd.s32 %s118, 1
      %p122 = scmp.eq.s32.totalorder %s21, 7
      %p123 = scmp.ne.s32.totalorder %s118, %s120
      %p124 = scmp.eq.s32.totalorder %s21, 0
      %p125 = por %p123, %p124
      %p126 = scmp.ne.s32.totalorder %s118, %s120
      %p127 = scmp.eq.s32.totalorder %s26, 7
      %p128 = por %p126, %p127
      %p129 = scmp.ne.s32.totalorder %s120, %s121
      %p130 = scmp.eq.s32.totalorder %s26, 0
      %p131 = por %p129, %p130
      %p132 = scmp.ne.s32.totalorder %s120, %s121
      %p133 = scmp.eq.s32.totalorder %s27, 7
      %p134 = por %p132, %p133
      %p136 = scmp.ne.s32.totalorder %s121, %s135
      %p137 = scmp.eq.s32.totalorder %s27, 0
      %p138 = por %p136, %p137
      %s140 = sadd.s32 %s139, 1
      %p143 = scmp.eq.s32.totalorder %s21, 7
      %p144 = scmp.ne.s32.totalorder %s139, %s141
      %p145 = scmp.eq.s32.totalorder %s21, 0
      %p146 = por %p144, %p145
      %p147 = scmp.ne.s32.totalorder %s139, %s141
      %p148 = scmp.eq.s32.totalorder %s26, 7
      %p149 = por %p147, %p148
      %p150 = scmp.ne.s32.totalorder %s141, %s142
      %p151 = scmp.eq.s32.totalorder %s26, 0
      %p152 = por %p150, %p151
      %p153 = scmp.ne.s32.totalorder %s141, %s142
      %p154 = scmp.eq.s32.totalorder %s27, 7
      %p155 = por %p153, %p154
      %p157 = scmp.ne.s32.totalorder %s142, %s156
      %p158 = scmp.eq.s32.totalorder %s27, 0
      %p159 = por %p157, %p158
      %s160 = ssub.s32 %s21, %s28
      %p161 = scmp.eq.s32.totalorder %s160, 0
      %s163 = sadd.s32 %s162, 1
      %s164 = scalar_select %p161, %s162, %s163
      %p167 = pneg %p161
      %p168 = scmp.eq.s32.totalorder %s21, 7
      %p169 = por %p167, %p168
      %p170 = scmp.ne.s32.totalorder %s162, %s165
      %p171 = scmp.eq.s32.totalorder %s21, 0
      %p172 = por %p170, %p171
      %p173 = scmp.ne.s32.totalorder %s162, %s165
      %p174 = scmp.eq.s32.totalorder %s26, 7
      %p175 = por %p173, %p174
      %p176 = scmp.ne.s32.totalorder %s165, %s166
      %p177 = scmp.eq.s32.totalorder %s26, 0
      %p178 = por %p176, %p177
      %p179 = scmp.ne.s32.totalorder %s165, %s166
      %p180 = scmp.eq.s32.totalorder %s27, 7
      %p181 = por %p179, %p180
      %p183 = scmp.ne.s32.totalorder %s166, %s182
      %p184 = scmp.eq.s32.totalorder %s27, 0
      %p185 = por %p183, %p184
      %p186 = scmp.le.s32.totalorder 1, %s21
      %p187 = scmp.lt.s32.totalorder %s21, 9
      %p188 = pnand %p186, %p187
      %p189 = pneg %p188
      // Predicated region
      $region9: #{tpu_custom_call.1} parent=5 // pred_check
        _
      $region10: #{tpu_custom_call.1} parent=5 // pred_check_branch
        %191 = sbr.rel (%p188) target = $region12
      $region11: #{tpu_custom_call.1} parent=5 // pred_region
        %s192 = ssub.s32 %s21, 1
        // Predicated region
        $region13: #{tpu_custom_call.1} parent=11 // pred_check
          %p193 = pneg %p68
        $region14: #{tpu_custom_call.1} parent=11 // pred_check_branch
          %195 = sbr.rel (%p193) target = $region16
        $region15: #{tpu_custom_call.1} parent=11 // pred_region
          %s197 = ssub.s32 1024, 1024
          %198 = vsyncadd [#allocation6], %s197
          %s199 = sshll.u32 [#allocation5], 4
          %s200 = int_to_ptr.vmem [resolvable:$true] %s199
          %205 = dma.hbm_to_vmem [thread:$0]  %s1, 1024, %s200, [#allocation6], 64, 64, 4
        $region16: #{tpu_custom_call.1} parent=11 // pred_fallthru
          _
        // Predicated region
        $region17: #{tpu_custom_call.1} parent=11 // pred_check
          %p206 = pneg %p89
        $region18: #{tpu_custom_call.1} parent=11 // pred_check_branch
          %208 = sbr.rel (%p206) target = $region20
        $region19: #{tpu_custom_call.1} parent=11 // pred_region
          %s210 = ssub.s32 256, 256
          %211 = vsyncadd [#allocation6], %s210
          %s212 = sshll.u32 [#allocation7], 4
          %s213 = int_to_ptr.vmem [resolvable:$true] %s212
          %218 = dma.hbm_to_vmem [thread:$0]  %s2, 256, %s213, [#allocation6], 64, 64, 4
        $region20: #{tpu_custom_call.1} parent=11 // pred_fallthru
          _
        // Predicated region
        $region21: #{tpu_custom_call.1} parent=11 // pred_check
          %p219 = pneg %p110
        $region22: #{tpu_custom_call.1} parent=11 // pred_check_branch
          %221 = sbr.rel (%p219) target = $region24
        $region23: #{tpu_custom_call.1} parent=11 // pred_region
          %s223 = ssub.s32 32, 32
          %224 = vsyncadd [#allocation9], %s223
          %s226 = sshll.u32 [#allocation8], 4
          %s227 = int_to_ptr.vmem [resolvable:$true] %s226
          %229 = dma.hbm_to_vmem [thread:$0]  %s3, 32, %s227, [#allocation9]
        $region24: #{tpu_custom_call.1} parent=11 // pred_fallthru
          _
        // Predicated region
        $region25: #{tpu_custom_call.1} parent=11 // pred_check
          %p230 = pneg %p131
        $region26: #{tpu_custom_call.1} parent=11 // pred_check_branch
          %232 = sbr.rel (%p230) target = $region28
        $region27: #{tpu_custom_call.1} parent=11 // pred_region
          %s234 = ssub.s32 16, 16
          %235 = vsyncadd [#allocation9], %s234
          %s237 = sshll.u32 [#allocation10], 4
          %s238 = int_to_ptr.vmem [resolvable:$true] %s237
          %240 = dma.hbm_to_vmem [thread:$0]  %s4, 16, %s238, [#allocation9]
        $region28: #{tpu_custom_call.1} parent=11 // pred_fallthru
          _
        // Predicated region
        $region29: #{tpu_custom_call.1} parent=11 // pred_check
          %p241 = pneg %p152
        $region30: #{tpu_custom_call.1} parent=11 // pred_check_branch
          %243 = sbr.rel (%p241) target = $region32
        $region31: #{tpu_custom_call.1} parent=11 // pred_region
          %s245 = ssub.s32 16, 16
          %246 = vsyncadd [#allocation12], %s245
          %s248 = sshll.u32 [#allocation11], 4
          %s249 = int_to_ptr.vmem [resolvable:$true] %s248
          %251 = dma.hbm_to_vmem [thread:$0]  %s5, 16, %s249, [#allocation12]
        $region32: #{tpu_custom_call.1} parent=11 // pred_fallthru
          _
      $region12: #{tpu_custom_call.1} parent=5 // pred_fallthru
        _
      %p252 = scmp.lt.s32.totalorder %s21, 8
      // Predicated region
      $region33: #{tpu_custom_call.1} parent=5 // pred_check
        %p253 = pneg %p252
      $region34: #{tpu_custom_call.1} parent=5 // pred_check_branch
        %255 = sbr.rel (%p253) target = $region36
      $region35: #{tpu_custom_call.1} parent=5 // pred_region
        // Predicated region
        $region37: #{tpu_custom_call.1} parent=35 // pred_check
          %p256 = pneg %p41
        $region38: #{tpu_custom_call.1} parent=35 // pred_check_branch
          %258 = sbr.rel (%p256) target = $region40
        $region39: #{tpu_custom_call.1} parent=35 // pred_region
          %s259 = sand.u32 %s31, 1
          %s260 = scalar_lea.sflag [#allocation3], %s259
          %s261 = sand.u32 %s31, 1
          %s262 = smul.addr %s261, 84
          %s263 = scalar_lea.vmem [#allocation2], %s262
          %s265 = ssub.s32 1344, 1344
          %266 = vsyncadd %s260, %s265
          %s267 = smul.addr %s21, 21
          %s268 = smul.addr %s267, 64
          %s269 = scalar_lea.hbm %s0, %s268
          %s270 = sshll.u32 %s263, 4
          %s271 = int_to_ptr.vmem [resolvable:$true] %s270
          %276 = dma.hbm_to_vmem [thread:$0]  %s269, 1344, %s271, %s260, 64, 64, 4
        $region40: #{tpu_custom_call.1} parent=35 // pred_fallthru
          _
      $region36: #{tpu_custom_call.1} parent=5 // pred_fallthru
        _
      %p277 = scmp.le.s32.totalorder 1, %s21
      %p278 = scmp.lt.s32.totalorder %s21, 9
      %p279 = pnand %p277, %p278
      %p280 = pneg %p279
      // Predicated region
      $region41: #{tpu_custom_call.1} parent=5 // pred_check
        _
      $region42: #{tpu_custom_call.1} parent=5 // pred_check_branch
        %282 = sbr.rel (%p279) target = $region44
      $region43: #{tpu_custom_call.1} parent=5 // pred_region
        %s283 = ssub.s32 %s21, 1
        %s284 = sand.u32 %s34, 1
        %s285 = scalar_lea.sflag [#allocation3], %s284
        %s286 = sand.u32 %s34, 1
        %s287 = smul.addr %s286, 84
        %s288 = scalar_lea.vmem [#allocation2], %s287
        // Predicated region
        $region45: #{tpu_custom_call.1} parent=43 // pred_check
          %p289 = pneg %p47
        $region46: #{tpu_custom_call.1} parent=43 // pred_check_branch
          %291 = sbr.rel (%p289) target = $region48
        $region47: #{tpu_custom_call.1} parent=43 // pred_region
          %292 = dma.done %s285, 1344
        $region48: #{tpu_custom_call.1} parent=43 // pred_fallthru
          _
        // Predicated region
        $region49: #{tpu_custom_call.1} parent=43 // pred_check
          %p293 = pneg %p68
        $region50: #{tpu_custom_call.1} parent=43 // pred_check_branch
          %295 = sbr.rel (%p293) target = $region52
        $region51: #{tpu_custom_call.1} parent=43 // pred_region
          %296 = dma.done [#allocation6], 1024
        $region52: #{tpu_custom_call.1} parent=43 // pred_fallthru
          _
        // Predicated region
        $region53: #{tpu_custom_call.1} parent=43 // pred_check
          %p297 = pneg %p89
        $region54: #{tpu_custom_call.1} parent=43 // pred_check_branch
          %299 = sbr.rel (%p297) target = $region56
        $region55: #{tpu_custom_call.1} parent=43 // pred_region
          %300 = dma.done [#allocation6], 256
        $region56: #{tpu_custom_call.1} parent=43 // pred_fallthru
          _
        // Predicated region
        $region57: #{tpu_custom_call.1} parent=43 // pred_check
          %p301 = pneg %p110
        $region58: #{tpu_custom_call.1} parent=43 // pred_check_branch
          %303 = sbr.rel (%p301) target = $region60
        $region59: #{tpu_custom_call.1} parent=43 // pred_region
          %304 = dma.done [#allocation9], 32
        $region60: #{tpu_custom_call.1} parent=43 // pred_fallthru
          _
        // Predicated region
        $region61: #{tpu_custom_call.1} parent=43 // pred_check
          %p305 = pneg %p131
        $region62: #{tpu_custom_call.1} parent=43 // pred_check_branch
          %307 = sbr.rel (%p305) target = $region64
        $region63: #{tpu_custom_call.1} parent=43 // pred_region
          %308 = dma.done [#allocation9], 16
        $region64: #{tpu_custom_call.1} parent=43 // pred_fallthru
          _
        // Predicated region
        $region65: #{tpu_custom_call.1} parent=43 // pred_check
          %p309 = pneg %p152
        $region66: #{tpu_custom_call.1} parent=43 // pred_check_branch
          %311 = sbr.rel (%p309) target = $region68
        $region67: #{tpu_custom_call.1} parent=43 // pred_region
          %312 = dma.done [#allocation12], 16
        $region68: #{tpu_custom_call.1} parent=43 // pred_fallthru
          _
        %s313 = sand.u32 %s34, 1
        %s314 = scalar_lea.sflag [#allocation3], %s313
        %s315 = sand.u32 %s34, 1
        %s316 = smul.addr %s315, 84
        %s317 = scalar_lea.vmem [#allocation2], %s316
        %p318 = pneg %p47
        %p319 = pneg %p44
        %p320 = pneg %p68
        %p321 = pneg %p65
        %p322 = pneg %p89
        %p323 = pneg %p86
        %p324 = pneg %p110
        %p325 = pneg %p107
        %p326 = pneg %p131
        %p327 = pneg %p128
        %p328 = pneg %p152
        %p329 = pneg %p149
        %p330 = pneg %p178
        %p331 = pneg %p175
        %s332 = sand.u32 %s165, 1
        %s333 = scalar_lea.sflag [#allocation4], %s332
        %s334 = sand.u32 %s165, 1
        %s335 = smul.addr %s334, 192
        %s336 = scalar_lea.vmem [#allocation13], %s335
        %v338 = vld [vmem:[%s288] sm:$0xf]
        %v339 = vld [vmem:[%s288 + $0x4] sm:$0xf]
        %v340 = vld [vmem:[%s288 + $0x8] sm:$0xf]
        %v341 = vld [vmem:[%s288 + $0xc] sm:$0xf]
        %v342 = vld [vmem:[%s288 + $0x10] sm:$0xf]
        %v343 = vld [vmem:[%s288 + $0x14] sm:$0xf]
        %v344 = vld [vmem:[%s288 + $0x18] sm:$0xf]
        %v345 = vld [vmem:[%s288 + $0x1c] sm:$0xf]
        %v346 = vld [vmem:[%s288 + $0x20] sm:$0xf]
        %v347 = vld [vmem:[%s288 + $0x24] sm:$0xf]
        %v348 = vld [vmem:[%s288 + $0x28] sm:$0xf]
        %v349 = vld [vmem:[%s288 + $0x2c] sm:$0xf]
        %v350 = vld [vmem:[%s288 + $0x30] sm:$0x1]
        %v351 = vld [vmem:[%s288] sm:$0xe]
        %v352 = vld [vmem:[%s288 + $0x30] sm:$0xf]
        %v353 = vld [vmem:[%s288 + $0x34] sm:$0xf]
        %v354 = vld [vmem:[%s288 + $0x38] sm:$0xf]
        %v355 = vld [vmem:[%s288 + $0x3c] sm:$0x1]
        %v356 = vld [vmem:[%s288 + $0xc] sm:$0xe]
        %v357 = vld [vmem:[%s288 + $0x3c] sm:$0xf]
        %v358 = vld [vmem:[%s288 + $0x40] sm:$0xf]
        %v359 = vld [vmem:[%s288 + $0x44] sm:$0xf]
        %v360 = vld [vmem:[%s288 + $0x48] sm:$0x1]
        %v361 = vld [vmem:[%s288 + $0x18] sm:$0xe]
        %v362 = vld [vmem:[#allocation8] sm:$0x3]
        %v363 = vld [vmem:[#allocation10] sm:$0x1]
        %v364 = vld [vmem:[#allocation11] sm:$0x1]
        %v365 = vld [vmem:[#allocation5] sm:$0x7]
        %s366 = scalar_lea.vmem [#allocation5], 4
        %v367 = vld [vmem:[%s366] sm:$0x7]
        %v381 = vunpack.c.l.b16 %v338
        %v382 = vunpack.c.l.b16 %v339
        %v383 = vunpack.c.l.b16 %v340
        %v384 = vunpack.c.l.b16 %v341
        %v385 = vunpack.c.l.b16 %v342
        %v386 = vunpack.c.l.b16 %v343
        %v387 = vunpack.c.l.b16 %v344
        %v388 = vunpack.c.l.b16 %v345
        %v389 = vunpack.c.l.b16 %v346
        %v390 = vunpack.c.l.b16 %v347
        %v391 = vunpack.c.l.b16 %v348
        %v392 = vunpack.c.l.b16 %v349
        %v393 = vunpack.c.l.b16 %v350
        %v394 = vpack.c.b16 %v382, %v381
        %v395 = vpack.c.b16 %v384, %v383
        %v396 = vpack.c.b16 %v386, %v385
        %v397 = vpack.c.b16 %v388, %v387
        %v398 = vpack.c.b16 %v390, %v389
        %v399 = vpack.c.b16 %v392, %v391
        %v400 = vpack.c.b16 %v393, %v393
        %vm401 = vsmask.f32 7424
        %v403 = vshrl.u32 %v394, 16
        %v405 = vshll.u32 %v394, 16
        %v407 = vrot.slane %v405, 1
        %v408 = vor.u32 %v403, %v407
        %v410 = vshll.u32 %v395, 16
        %v412 = vrot.slane %v410, 1
        %v413 = vsel %vm401, %v408, %v412
        %v414 = vshrl.u32 %v395, 16
        %v416 = vor.u32 %v414, %v412
        %v418 = vshll.u32 %v396, 16
        %v420 = vrot.slane %v418, 1
        %v421 = vsel %vm401, %v416, %v420
        %v422 = vshrl.u32 %v396, 16
        %v424 = vor.u32 %v422, %v420
        %v426 = vshll.u32 %v397, 16
        %v428 = vrot.slane %v426, 1
        %v429 = vsel %vm401, %v424, %v428
        %v430 = vshrl.u32 %v397, 16
        %v432 = vor.u32 %v430, %v428
        %v434 = vshll.u32 %v398, 16
        %v436 = vrot.slane %v434, 1
        %v437 = vsel %vm401, %v432, %v436
        %v438 = vshrl.u32 %v398, 16
        %v440 = vor.u32 %v438, %v436
        %v442 = vshll.u32 %v399, 16
        %v444 = vrot.slane %v442, 1
        %v445 = vsel %vm401, %v440, %v444
        %v446 = vshrl.u32 %v399, 16
        %v448 = vor.u32 %v446, %v444
        %v450 = vshll.u32 %v400, 16
        %v452 = vrot.slane %v450, 1
        %v453 = vsel %vm401, %v448, %v452
        %vm454 = vcmask 39936
        %v456 = vsel %vm454, %v413, 0
        %v459 = vsel %vm454, %v421, 0
        %v462 = vsel %vm454, %v429, 0
        %v465 = vsel %vm454, %v437, 0
        %v468 = vsel %vm454, %v445, 0
        %v471 = vsel %vm454, %v453, 0
        %vm473 = vcmask 1041408
        %vm474 = vcmask 1042432
        %v475 = vsel %vm473, 4294967295, 65535
        %v476 = vsel %vm474, %v475, 0
        %v478 = vand.u32 %v367, %v476
        %480 = vmatprep.subr.bf16.mxu0 0
        %481 = vmatpush1.bf16.msra.mxu0 %v478
        %482 = vmatprep.subr.bf16.mxu0 0
        %483 = vmatpush1.bf16.msra.mxu0 0
        %484 = vmatprep.subr.bf16.mxu0 0
        %485 = vmatpush1.bf16.msra.mxu0 0
        %486 = vmatprep.subr.bf16.mxu0 0
        %487 = vmatpush1.bf16.msra.mxu0 0
        %488 = vmatprep.subr.bf16.mxu0 0
        %489 = vmatpush1.bf16.msra.mxu0 0
        %490 = vmatprep.subr.bf16.mxu0 0
        %491 = vmatpush1.bf16.msra.mxu0 0
        %492 = vmatprep.subr.bf16.mxu0 0
        %493 = vmatpush1.bf16.msra.mxu0 0
        %494 = vmatprep.subr.bf16.mxu0 0
        %495 = vmatpush1.bf16.msra.mxu0 0
        %496 = vmatprep.subr.bf16.mxu0 0
        %497 = vmatpush1.bf16.msra.mxu0 0
        %498 = vmatprep.subr.bf16.mxu0 0
        %499 = vmatpush1.bf16.msra.mxu0 0
        %500 = vmatprep.subr.bf16.mxu0 0
        %501 = vmatpush1.bf16.msra.mxu0 0
        %502 = vmatprep.subr.bf16.mxu0 0
        %503 = vmatpush1.bf16.msra.mxu0 0
        %504 = vmatprep.subr.bf16.mxu0 0
        %505 = vmatpush1.bf16.msra.mxu0 0
        %506 = vmatprep.subr.bf16.mxu0 0
        %507 = vmatpush1.bf16.msra.mxu0 0
        %508 = vmatprep.subr.bf16.mxu0 0
        %509 = vmatpush1.bf16.msra.mxu0 0
        %510 = vmatprep.subr.bf16.mxu0 0
        %511 = vmatpush1.bf16.msra.mxu0 0
        %512 = vmatprep.mubr.bf16.mxu0 0
        %513 = vmatmul.mubr.bf16.gmra.mrb[0].mxu0 %v456
        %v514 = vpop.f32.mrb[0].mxu0
        %v515 = vadd.f32 0.0, %v514
        %v516 = vpop.f32.mrb[0].mxu0
        %v517 = vpop.f32.mrb[0].mxu0
        %v518 = vadd.f32 0.0, %v517
        %v519 = vpop.f32.mrb[0].mxu0
        %520 = vmatprep.mubr.bf16.mxu0 0
        %521 = vmatmul.mubr.bf16.gmra.mrb[0].mxu0 %v459
        %v522 = vpop.f32.mrb[0].mxu0
        %v523 = vadd.f32 0.0, %v522
        %v524 = vpop.f32.mrb[0].mxu0
        %v525 = vpop.f32.mrb[0].mxu0
        %v526 = vadd.f32 0.0, %v525
        %v527 = vpop.f32.mrb[0].mxu0
        %528 = vmatprep.mubr.bf16.mxu0 0
        %529 = vmatmul.mubr.bf16.gmra.mrb[0].mxu0 %v462
        %v530 = vpop.f32.mrb[0].mxu0
        %v531 = vadd.f32 0.0, %v530
        %v532 = vpop.f32.mrb[0].mxu0
        %v533 = vpop.f32.mrb[0].mxu0
        %v534 = vadd.f32 0.0, %v533
        %v535 = vpop.f32.mrb[0].mxu0
        %536 = vmatprep.mubr.bf16.mxu0 0
        %537 = vmatmul.mubr.bf16.gmra.mrb[0].mxu0 %v465
        %v538 = vpop.f32.mrb[0].mxu0
        %v539 = vadd.f32 0.0, %v538
        %v540 = vpop.f32.mrb[0].mxu0
        %v541 = vpop.f32.mrb[0].mxu0
        %v542 = vadd.f32 0.0, %v541
        %v543 = vpop.f32.mrb[0].mxu0
        %544 = vmatprep.mubr.bf16.mxu0 0
        %545 = vmatmul.mubr.bf16.gmra.mrb[0].mxu0 %v468
        %v546 = vpop.f32.mrb[0].mxu0
        %v547 = vadd.f32 0.0, %v546
        %v548 = vpop.f32.mrb[0].mxu0
        %v549 = vpop.f32.mrb[0].mxu0
        %v550 = vadd.f32 0.0, %v549
        %v551 = vpop.f32.mrb[0].mxu0
        %552 = vmatprep.mubr.bf16.mxu0 0
        %553 = vmatmul.mubr.bf16.gmra.mrb[0].mxu0 %v471
        %v554 = vpop.f32.mrb[0].mxu0
        %v555 = vadd.f32 0.0, %v554
        %v556 = vpop.f32.mrb[0].mxu0
        %v557 = vpop.f32.mrb[0].mxu0
        %v558 = vadd.f32 0.0, %v557
        %v559 = vpop.f32.mrb[0].mxu0
        %560 = vdwg.mxu0
        %v561 = vsel %vm454, %v394, 0
        %v563 = vsel %vm454, %v395, 0
        %v565 = vsel %vm454, %v396, 0
        %v567 = vsel %vm454, %v397, 0
        %v569 = vsel %vm454, %v398, 0
        %v571 = vsel %vm454, %v399, 0
        %v574 = vand.u32 %v365, %v476
        %576 = vmatprep.subr.bf16.mxu0 0
        %577 = vmatpush1.bf16.msra.mxu0 %v574
        %578 = vmatprep.subr.bf16.mxu0 0
        %579 = vmatpush1.bf16.msra.mxu0 0
        %580 = vmatprep.subr.bf16.mxu0 0
        %581 = vmatpush1.bf16.msra.mxu0 0
        %582 = vmatprep.subr.bf16.mxu0 0
        %583 = vmatpush1.bf16.msra.mxu0 0
        %584 = vmatprep.subr.bf16.mxu0 0
        %585 = vmatpush1.bf16.msra.mxu0 0
        %586 = vmatprep.subr.bf16.mxu0 0
        %587 = vmatpush1.bf16.msra.mxu0 0
        %588 = vmatprep.subr.bf16.mxu0 0
        %589 = vmatpush1.bf16.msra.mxu0 0
        %590 = vmatprep.subr.bf16.mxu0 0
        %591 = vmatpush1.bf16.msra.mxu0 0
        %592 = vmatprep.subr.bf16.mxu0 0
        %593 = vmatpush1.bf16.msra.mxu0 0
        %594 = vmatprep.subr.bf16.mxu0 0
        %595 = vmatpush1.bf16.msra.mxu0 0
        %596 = vmatprep.subr.bf16.mxu0 0
        %597 = vmatpush1.bf16.msra.mxu0 0
        %598 = vmatprep.subr.bf16.mxu0 0
        %599 = vmatpush1.bf16.msra.mxu0 0
        %600 = vmatprep.subr.bf16.mxu0 0
        %601 = vmatpush1.bf16.msra.mxu0 0
        %602 = vmatprep.subr.bf16.mxu0 0
        %603 = vmatpush1.bf16.msra.mxu0 0
        %604 = vmatprep.subr.bf16.mxu0 0
        %605 = vmatpush1.bf16.msra.mxu0 0
        %606 = vmatprep.subr.bf16.mxu0 0
        %607 = vmatpush1.bf16.msra.mxu0 0
        %608 = vmatprep.mubr.bf16.mxu0 0
        %609 = vmatmul.mubr.bf16.gmra.mrb[0].mxu0 %v561
        %v610 = vpop.f32.mrb[0].mxu0
        %v611 = vadd.f32 %v515, %v610
        %v612 = vpop.f32.mrb[0].mxu0
        %v613 = vpop.f32.mrb[0].mxu0
        %v614 = vadd.f32 %v518, %v613
        %v615 = vpop.f32.mrb[0].mxu0
        %616 = vmatprep.mubr.bf16.mxu0 0
        %617 = vmatmul.mubr.bf16.gmra.mrb[0].mxu0 %v563
        %v618 = vpop.f32.mrb[0].mxu0
        %v619 = vadd.f32 %v523, %v618
        %v620 = vpop.f32.mrb[0].mxu0
        %v621 = vpop.f32.mrb[0].mxu0
        %v622 = vadd.f32 %v526, %v621
        %v623 = vpop.f32.mrb[0].mxu0
        %624 = vmatprep.mubr.bf16.mxu0 0
        %625 = vmatmul.mubr.bf16.gmra.mrb[0].mxu0 %v565
        %v626 = vpop.f32.mrb[0].mxu0
        %v627 = vadd.f32 %v531, %v626
        %v628 = vpop.f32.mrb[0].mxu0
        %v629 = vpop.f32.mrb[0].mxu0
        %v630 = vadd.f32 %v534, %v629
        %v631 = vpop.f32.mrb[0].mxu0
        %632 = vmatprep.mubr.bf16.mxu0 0
        %633 = vmatmul.mubr.bf16.gmra.mrb[0].mxu0 %v567
        %v634 = vpop.f32.mrb[0].mxu0
        %v635 = vadd.f32 %v539, %v634
        %v636 = vpop.f32.mrb[0].mxu0
        %v637 = vpop.f32.mrb[0].mxu0
        %v638 = vadd.f32 %v542, %v637
        %v639 = vpop.f32.mrb[0].mxu0
        %640 = vmatprep.mubr.bf16.mxu0 0
        %641 = vmatmul.mubr.bf16.gmra.mrb[0].mxu0 %v569
        %v642 = vpop.f32.mrb[0].mxu0
        %v643 = vadd.f32 %v547, %v642
        %v644 = vpop.f32.mrb[0].mxu0
        %v645 = vpop.f32.mrb[0].mxu0
        %v646 = vadd.f32 %v550, %v645
        %v647 = vpop.f32.mrb[0].mxu0
        %648 = vmatprep.mubr.bf16.mxu0 0
        %649 = vmatmul.mubr.bf16.gmra.mrb[0].mxu0 %v571
        %v650 = vpop.f32.mrb[0].mxu0
        %v651 = vadd.f32 %v555, %v650
        %v652 = vpop.f32.mrb[0].mxu0
        %v653 = vpop.f32.mrb[0].mxu0
        %v654 = vadd.f32 %v558, %v653
        %v655 = vpop.f32.mrb[0].mxu0
        %656 = vdwg.mxu0
        %s657 = scalar_lea.vmem [#allocation5], 8
        %v658 = vld [vmem:[%s657] sm:$0x7]
        %v662 = vunpack.c.l.b16 %v352
        %v663 = vunpack.c.l.b16 %v353
        %v664 = vunpack.c.l.b16 %v354
        %v665 = vpack.c.b16 %v385, %v384
        %v666 = vpack.c.b16 %v387, %v386
        %v667 = vpack.c.b16 %v389, %v388
        %v668 = vpack.c.b16 %v391, %v390
        %v669 = vpack.c.b16 %v662, %v392
        %v670 = vpack.c.b16 %v664, %v663
        %v672 = vsel %vm454, %v665, 0
        %v675 = vsel %vm454, %v666, 0
        %v678 = vsel %vm454, %v667, 0
        %v681 = vsel %vm454, %v668, 0
        %v684 = vsel %vm454, %v669, 0
        %v687 = vsel %vm454, %v670, 0
        %v690 = vand.u32 %v658, %v476
        %692 = vmatprep.subr.bf16.mxu0 0
        %693 = vmatpush1.bf16.msra.mxu0 %v690
        %694 = vmatprep.subr.bf16.mxu0 0
        %695 = vmatpush1.bf16.msra.mxu0 0
        %696 = vmatprep.subr.bf16.mxu0 0
        %697 = vmatpush1.bf16.msra.mxu0 0
        %698 = vmatprep.subr.bf16.mxu0 0
        %699 = vmatpush1.bf16.msra.mxu0 0
        %700 = vmatprep.subr.bf16.mxu0 0
        %701 = vmatpush1.bf16.msra.mxu0 0
        %702 = vmatprep.subr.bf16.mxu0 0
        %703 = vmatpush1.bf16.msra.mxu0 0
        %704 = vmatprep.subr.bf16.mxu0 0
        %705 = vmatpush1.bf16.msra.mxu0 0
        %706 = vmatprep.subr.bf16.mxu0 0
        %707 = vmatpush1.bf16.msra.mxu0 0
        %708 = vmatprep.subr.bf16.mxu0 0
        %709 = vmatpush1.bf16.msra.mxu0 0
        %710 = vmatprep.subr.bf16.mxu0 0
        %711 = vmatpush1.bf16.msra.mxu0 0
        %712 = vmatprep.subr.bf16.mxu0 0
        %713 = vmatpush1.bf16.msra.mxu0 0
        %714 = vmatprep.subr.bf16.mxu0 0
        %715 = vmatpush1.bf16.msra.mxu0 0
        %716 = vmatprep.subr.bf16.mxu0 0
        %717 = vmatpush1.bf16.msra.mxu0 0
        %718 = vmatprep.subr.bf16.mxu0 0
        %719 = vmatpush1.bf16.msra.mxu0 0
        %720 = vmatprep.subr.bf16.mxu0 0
        %721 = vmatpush1.bf16.msra.mxu0 0
        %722 = vmatprep.subr.bf16.mxu0 0
        %723 = vmatpush1.bf16.msra.mxu0 0
        %724 = vmatprep.mubr.bf16.mxu0 0
        %725 = vmatmul.mubr.bf16.gmra.mrb[0].mxu0 %v672
        %v726 = vpop.f32.mrb[0].mxu0
        %v727 = vadd.f32 0.0, %v726
        %v728 = vpop.f32.mrb[0].mxu0
        %v729 = vpop.f32.mrb[0].mxu0
        %v730 = vadd.f32 0.0, %v729
        %v731 = vpop.f32.mrb[0].mxu0
        %732 = vmatprep.mubr.bf16.mxu0 0
        %733 = vmatmul.mubr.bf16.gmra.mrb[0].mxu0 %v675
        %v734 = vpop.f32.mrb[0].mxu0
        %v735 = vadd.f32 0.0, %v734
        %v736 = vpop.f32.mrb[0].mxu0
        %v737 = vpop.f32.mrb[0].mxu0
        %v738 = vadd.f32 0.0, %v737
        %v739 = vpop.f32.mrb[0].mxu0
        %740 = vmatprep.mubr.bf16.mxu0 0
        %741 = vmatmul.mubr.bf16.gmra.mrb[0].mxu0 %v678
        %v742 = vpop.f32.mrb[0].mxu0
        %v743 = vadd.f32 0.0, %v742
        %v744 = vpop.f32.mrb[0].mxu0
        %v745 = vpop.f32.mrb[0].mxu0
        %v746 = vadd.f32 0.0, %v745
        %v747 = vpop.f32.mrb[0].mxu0
        %748 = vmatprep.mubr.bf16.mxu0 0
        %749 = vmatmul.mubr.bf16.gmra.mrb[0].mxu0 %v681
        %v750 = vpop.f32.mrb[0].mxu0
        %v751 = vadd.f32 0.0, %v750
        %v752 = vpop.f32.mrb[0].mxu0
        %v753 = vpop.f32.mrb[0].mxu0
        %v754 = vadd.f32 0.0, %v753
        %v755 = vpop.f32.mrb[0].mxu0
        %756 = vmatprep.mubr.bf16.mxu0 0
        %757 = vmatmul.mubr.bf16.gmra.mrb[0].mxu0 %v684
        %v758 = vpop.f32.mrb[0].mxu0
        %v759 = vadd.f32 0.0, %v758
        %v760 = vpop.f32.mrb[0].mxu0
        %v761 = vpop.f32.mrb[0].mxu0
        %v762 = vadd.f32 0.0, %v761
        %v763 = vpop.f32.mrb[0].mxu0
        %764 = vmatprep.mubr.bf16.mxu0 0
        %765 = vmatmul.mubr.bf16.gmra.mrb[0].mxu0 %v687
        %v766 = vpop.f32.mrb[0].mxu0
        %v767 = vadd.f32 0.0, %v766
        %v768 = vpop.f32.mrb[0].mxu0
        %v769 = vpop.f32.mrb[0].mxu0
        %v770 = vadd.f32 0.0, %v769
        %v771 = vpop.f32.mrb[0].mxu0
        %772 = vdwg.mxu0
        %v773 = vadd.f32 %v611, %v727
        %v774 = vadd.f32 %v614, %v730
        %v775 = vadd.f32 %v619, %v735
        %v776 = vadd.f32 %v622, %v738
        %v777 = vadd.f32 %v627, %v743
        %v778 = vadd.f32 %v630, %v746
        %v779 = vadd.f32 %v635, %v751
        %v780 = vadd.f32 %v638, %v754
        %v781 = vadd.f32 %v643, %v759
        %v782 = vadd.f32 %v646, %v762
        %v783 = vadd.f32 %v651, %v767
        %v784 = vadd.f32 %v654, %v770
        %s785 = scalar_lea.vmem [#allocation5], 12
        %v786 = vld [vmem:[%s785] sm:$0x7]
        %v788 = vunpack.c.l.b16 %v355
        %v789 = vpack.c.b16 %v788, %v788
        %v790 = vshrl.u32 %v665, 16
        %v792 = vshll.u32 %v665, 16
        %v794 = vrot.slane %v792, 1
        %v795 = vor.u32 %v790, %v794
        %v796 = vshll.u32 %v666, 16
        %v798 = vrot.slane %v796, 1
        %v799 = vsel %vm401, %v795, %v798
        %v800 = vshrl.u32 %v666, 16
        %v802 = vor.u32 %v800, %v798
        %v803 = vshll.u32 %v667, 16
        %v805 = vrot.slane %v803, 1
        %v806 = vsel %vm401, %v802, %v805
        %v807 = vshrl.u32 %v667, 16
        %v809 = vor.u32 %v807, %v805
        %v810 = vshll.u32 %v668, 16
        %v812 = vrot.slane %v810, 1
        %v813 = vsel %vm401, %v809, %v812
        %v814 = vshrl.u32 %v668, 16
        %v816 = vor.u32 %v814, %v812
        %v817 = vshll.u32 %v669, 16
        %v819 = vrot.slane %v817, 1
        %v820 = vsel %vm401, %v816, %v819
        %v821 = vshrl.u32 %v669, 16
        %v823 = vor.u32 %v821, %v819
        %v824 = vshll.u32 %v670, 16
        %v826 = vrot.slane %v824, 1
        %v827 = vsel %vm401, %v823, %v826
        %v828 = vshrl.u32 %v670, 16
        %v830 = vor.u32 %v828, %v826
        %v832 = vshll.u32 %v789, 16
        %v834 = vrot.slane %v832, 1
        %v835 = vsel %vm401, %v830, %v834
        %v837 = vsel %vm454, %v799, 0
        %v840 = vsel %vm454, %v806, 0
        %v843 = vsel %vm454, %v813, 0
        %v846 = vsel %vm454, %v820, 0
        %v849 = vsel %vm454, %v827, 0
        %v852 = vsel %vm454, %v835, 0
        %v855 = vand.u32 %v786, %v476
        %857 = vmatprep.subr.bf16.mxu0 0
        %858 = vmatpush1.bf16.msra.mxu0 %v855
        %859 = vmatprep.subr.bf16.mxu0 0
        %860 = vmatpush1.bf16.msra.mxu0 0
        %861 = vmatprep.subr.bf16.mxu0 0
        %862 = vmatpush1.bf16.msra.mxu0 0
        %863 = vmatprep.subr.bf16.mxu0 0
        %864 = vmatpush1.bf16.msra.mxu0 0
        %865 = vmatprep.subr.bf16.mxu0 0
        %866 = vmatpush1.bf16.msra.mxu0 0
        %867 = vmatprep.subr.bf16.mxu0 0
        %868 = vmatpush1.bf16.msra.mxu0 0
        %869 = vmatprep.subr.bf16.mxu0 0
        %870 = vmatpush1.bf16.msra.mxu0 0
        %871 = vmatprep.subr.bf16.mxu0 0
        %872 = vmatpush1.bf16.msra.mxu0 0
        %873 = vmatprep.subr.bf16.mxu0 0
        %874 = vmatpush1.bf16.msra.mxu0 0
        %875 = vmatprep.subr.bf16.mxu0 0
        %876 = vmatpush1.bf16.msra.mxu0 0
        %877 = vmatprep.subr.bf16.mxu0 0
        %878 = vmatpush1.bf16.msra.mxu0 0
        %879 = vmatprep.subr.bf16.mxu0 0
        %880 = vmatpush1.bf16.msra.mxu0 0
        %881 = vmatprep.subr.bf16.mxu0 0
        %882 = vmatpush1.bf16.msra.mxu0 0
        %883 = vmatprep.subr.bf16.mxu0 0
        %884 = vmatpush1.bf16.msra.mxu0 0
        %885 = vmatprep.subr.bf16.mxu0 0
        %886 = vmatpush1.bf16.msra.mxu0 0
        %887 = vmatprep.subr.bf16.mxu0 0
        %888 = vmatpush1.bf16.msra.mxu0 0
        %889 = vmatprep.mubr.bf16.mxu0 0
        %890 = vmatmul.mubr.bf16.gmra.mrb[0].mxu0 %v837
        %v891 = vpop.f32.mrb[0].mxu0
        %v892 = vadd.f32 0.0, %v891
        %v893 = vpop.f32.mrb[0].mxu0
        %v894 = vpop.f32.mrb[0].mxu0
        %v895 = vadd.f32 0.0, %v894
        %v896 = vpop.f32.mrb[0].mxu0
        %897 = vmatprep.mubr.bf16.mxu0 0
        %898 = vmatmul.mubr.bf16.gmra.mrb[0].mxu0 %v840
        %v899 = vpop.f32.mrb[0].mxu0
        %v900 = vadd.f32 0.0, %v899
        %v901 = vpop.f32.mrb[0].mxu0
        %v902 = vpop.f32.mrb[0].mxu0
        %v903 = vadd.f32 0.0, %v902
        %v904 = vpop.f32.mrb[0].mxu0
        %905 = vmatprep.mubr.bf16.mxu0 0
        %906 = vmatmul.mubr.bf16.gmra.mrb[0].mxu0 %v843
        %v907 = vpop.f32.mrb[0].mxu0
        %v908 = vadd.f32 0.0, %v907
        %v909 = vpop.f32.mrb[0].mxu0
        %v910 = vpop.f32.mrb[0].mxu0
        %v911 = vadd.f32 0.0, %v910
        %v912 = vpop.f32.mrb[0].mxu0
        %913 = vmatprep.mubr.bf16.mxu0 0
        %914 = vmatmul.mubr.bf16.gmra.mrb[0].mxu0 %v846
        %v915 = vpop.f32.mrb[0].mxu0
        %v916 = vadd.f32 0.0, %v915
        %v917 = vpop.f32.mrb[0].mxu0
        %v918 = vpop.f32.mrb[0].mxu0
        %v919 = vadd.f32 0.0, %v918
        %v920 = vpop.f32.mrb[0].mxu0
        %921 = vmatprep.mubr.bf16.mxu0 0
        %922 = vmatmul.mubr.bf16.gmra.mrb[0].mxu0 %v849
        %v923 = vpop.f32.mrb[0].mxu0
        %v924 = vadd.f32 0.0, %v923
        %v925 = vpop.f32.mrb[0].mxu0
        %v926 = vpop.f32.mrb[0].mxu0
        %v927 = vadd.f32 0.0, %v926
        %v928 = vpop.f32.mrb[0].mxu0
        %929 = vmatprep.mubr.bf16.mxu0 0
        %930 = vmatmul.mubr.bf16.gmra.mrb[0].mxu0 %v852
        %v931 = vpop.f32.mrb[0].mxu0
        %v932 = vadd.f32 0.0, %v931
        %v933 = vpop.f32.mrb[0].mxu0
        %v934 = vpop.f32.mrb[0].mxu0
        %v935 = vadd.f32 0.0, %v934
        %v936 = vpop.f32.mrb[0].mxu0
        %937 = vdwg.mxu0
        %v938 = vadd.f32 %v773, %v892
        %v939 = vadd.f32 %v774, %v895
        %v940 = vadd.f32 %v775, %v900
        %v941 = vadd.f32 %v776, %v903
        %v942 = vadd.f32 %v777, %v908
        %v943 = vadd.f32 %v778, %v911
        %v944 = vadd.f32 %v779, %v916
        %v945 = vadd.f32 %v780, %v919
        %v946 = vadd.f32 %v781, %v924
        %v947 = vadd.f32 %v782, %v927
        %v948 = vadd.f32 %v783, %v932
        %v949 = vadd.f32 %v784, %v935
        %v951 = vlaneseq
        %v952 = vshrl.u32 %v951, 7
        %v953 = vsub.s32 0, %v952
        %v954 = vrot.slane %v363, %v953
        %v956 = vadd.f32 %v938, %v954
        %v957 = vadd.f32 %v939, %v954
        %v958 = vadd.f32 %v940, %v954
        %v959 = vadd.f32 %v941, %v954
        %v960 = vadd.f32 %v942, %v954
        %v961 = vadd.f32 %v943, %v954
        %v962 = vadd.f32 %v944, %v954
        %v963 = vadd.f32 %v945, %v954
        %v964 = vadd.f32 %v946, %v954
        %v965 = vadd.f32 %v947, %v954
        %v966 = vadd.f32 %v948, %v954
        %v967 = vadd.f32 %v949, %v954
        %v968 = vmax.f32 %v956, 0.0
        %v969 = vmax.f32 %v957, 0.0
        %v970 = vmax.f32 %v958, 0.0
        %v971 = vmax.f32 %v959, 0.0
        %v972 = vmax.f32 %v960, 0.0
        %v973 = vmax.f32 %v961, 0.0
        %v974 = vmax.f32 %v962, 0.0
        %v975 = vmax.f32 %v963, 0.0
        %v976 = vmax.f32 %v964, 0.0
        %v977 = vmax.f32 %v965, 0.0
        %v978 = vmax.f32 %v966, 0.0
        %v979 = vmax.f32 %v967, 0.0
        %v980 = vpack.c.bf16 %v969, %v968
        %v981 = vpack.c.bf16 %v971, %v970
        %v982 = vpack.c.bf16 %v973, %v972
        %v983 = vpack.c.bf16 %v975, %v974
        %v984 = vpack.c.bf16 %v977, %v976
        %v985 = vpack.c.bf16 %v979, %v978
        %v986 = vld [vmem:[#allocation7] sm:$0x7]
        %v988 = vand.u32 %v986, %v476
        %990 = vmatprep.subr.bf16.mxu0 0
        %991 = vmatpush1.bf16.msra.mxu0 %v988
        %992 = vmatprep.subr.bf16.mxu0 0
        %993 = vmatpush1.bf16.msra.mxu0 0
        %994 = vmatprep.subr.bf16.mxu0 0
        %995 = vmatpush1.bf16.msra.mxu0 0
        %996 = vmatprep.subr.bf16.mxu0 0
        %997 = vmatpush1.bf16.msra.mxu0 0
        %998 = vmatprep.subr.bf16.mxu0 0
        %999 = vmatpush1.bf16.msra.mxu0 0
        %1000 = vmatprep.subr.bf16.mxu0 0
        %1001 = vmatpush1.bf16.msra.mxu0 0
        %1002 = vmatprep.subr.bf16.mxu0 0
        %1003 = vmatpush1.bf16.msra.mxu0 0
        %1004 = vmatprep.subr.bf16.mxu0 0
        %1005 = vmatpush1.bf16.msra.mxu0 0
        %1006 = vmatprep.subr.bf16.mxu0 0
        %1007 = vmatpush1.bf16.msra.mxu0 0
        %1008 = vmatprep.subr.bf16.mxu0 0
        %1009 = vmatpush1.bf16.msra.mxu0 0
        %1010 = vmatprep.subr.bf16.mxu0 0
        %1011 = vmatpush1.bf16.msra.mxu0 0
        %1012 = vmatprep.subr.bf16.mxu0 0
        %1013 = vmatpush1.bf16.msra.mxu0 0
        %1014 = vmatprep.subr.bf16.mxu0 0
        %1015 = vmatpush1.bf16.msra.mxu0 0
        %1016 = vmatprep.subr.bf16.mxu0 0
        %1017 = vmatpush1.bf16.msra.mxu0 0
        %1018 = vmatprep.subr.bf16.mxu0 0
        %1019 = vmatpush1.bf16.msra.mxu0 0
        %1020 = vmatprep.subr.bf16.mxu0 0
        %1021 = vmatpush1.bf16.msra.mxu0 0
        %1022 = vmatprep.mubr.bf16.mxu0 0
        %1023 = vmatmul.mubr.bf16.gmra.mrb[0].mxu0 %v837
        %v1024 = vpop.f32.mrb[0].mxu0
        %v1025 = vadd.f32 0.0, %v1024
        %v1026 = vpop.f32.mrb[0].mxu0
        %v1027 = vpop.f32.mrb[0].mxu0
        %v1028 = vadd.f32 0.0, %v1027
        %v1029 = vpop.f32.mrb[0].mxu0
        %1030 = vmatprep.mubr.bf16.mxu0 0
        %1031 = vmatmul.mubr.bf16.gmra.mrb[0].mxu0 %v840
        %v1032 = vpop.f32.mrb[0].mxu0
        %v1033 = vadd.f32 0.0, %v1032
        %v1034 = vpop.f32.mrb[0].mxu0
        %v1035 = vpop.f32.mrb[0].mxu0
        %v1036 = vadd.f32 0.0, %v1035
        %v1037 = vpop.f32.mrb[0].mxu0
        %1038 = vmatprep.mubr.bf16.mxu0 0
        %1039 = vmatmul.mubr.bf16.gmra.mrb[0].mxu0 %v843
        %v1040 = vpop.f32.mrb[0].mxu0
        %v1041 = vadd.f32 0.0, %v1040
        %v1042 = vpop.f32.mrb[0].mxu0
        %v1043 = vpop.f32.mrb[0].mxu0
        %v1044 = vadd.f32 0.0, %v1043
        %v1045 = vpop.f32.mrb[0].mxu0
        %1046 = vmatprep.mubr.bf16.mxu0 0
        %1047 = vmatmul.mubr.bf16.gmra.mrb[0].mxu0 %v846
        %v1048 = vpop.f32.mrb[0].mxu0
        %v1049 = vadd.f32 0.0, %v1048
        %v1050 = vpop.f32.mrb[0].mxu0
        %v1051 = vpop.f32.mrb[0].mxu0
        %v1052 = vadd.f32 0.0, %v1051
        %v1053 = vpop.f32.mrb[0].mxu0
        %1054 = vmatprep.mubr.bf16.mxu0 0
        %1055 = vmatmul.mubr.bf16.gmra.mrb[0].mxu0 %v849
        %v1056 = vpop.f32.mrb[0].mxu0
        %v1057 = vadd.f32 0.0, %v1056
        %v1058 = vpop.f32.mrb[0].mxu0
        %v1059 = vpop.f32.mrb[0].mxu0
        %v1060 = vadd.f32 0.0, %v1059
        %v1061 = vpop.f32.mrb[0].mxu0
        %1062 = vmatprep.mubr.bf16.mxu0 0
        %1063 = vmatmul.mubr.bf16.gmra.mrb[0].mxu0 %v852
        %v1064 = vpop.f32.mrb[0].mxu0
        %v1065 = vadd.f32 0.0, %v1064
        %v1066 = vpop.f32.mrb[0].mxu0
        %v1067 = vpop.f32.mrb[0].mxu0
        %v1068 = vadd.f32 0.0, %v1067
        %v1069 = vpop.f32.mrb[0].mxu0
        %1070 = vdwg.mxu0
        %v1072 = vlaneseq
        %v1073 = vshrl.u32 %v1072, 7
        %v1074 = vsub.s32 0, %v1073
        %v1075 = vrot.slane %v364, %v1074
        %vm1077 = vcmask 31744
        %v1079 = vsel %vm1077, %v980, 0
        %v1082 = vsel %vm1077, %v981, 0
        %v1085 = vsel %vm1077, %v982, 0
        %v1088 = vsel %vm1077, %v983, 0
        %v1091 = vsel %vm1077, %v984, 0
        %v1094 = vsel %vm1077, %v985, 0
        %v1097 = vsel %vm473, %v362, 0
        %1099 = vmatprep.subr.bf16.mxu0 0
        %1100 = vmatpush1.bf16.msra.mxu0 %v1097
        %1101 = vmatprep.subr.bf16.mxu0 0
        %1102 = vmatpush1.bf16.msra.mxu0 0
        %1103 = vmatprep.subr.bf16.mxu0 0
        %1104 = vmatpush1.bf16.msra.mxu0 0
        %1105 = vmatprep.subr.bf16.mxu0 0
        %1106 = vmatpush1.bf16.msra.mxu0 0
        %1107 = vmatprep.subr.bf16.mxu0 0
        %1108 = vmatpush1.bf16.msra.mxu0 0
        %1109 = vmatprep.subr.bf16.mxu0 0
        %1110 = vmatpush1.bf16.msra.mxu0 0
        %1111 = vmatprep.subr.bf16.mxu0 0
        %1112 = vmatpush1.bf16.msra.mxu0 0
        %1113 = vmatprep.subr.bf16.mxu0 0
        %1114 = vmatpush1.bf16.msra.mxu0 0
        %1115 = vmatprep.subr.bf16.mxu0 0
        %1116 = vmatpush1.bf16.msra.mxu0 0
        %1117 = vmatprep.subr.bf16.mxu0 0
        %1118 = vmatpush1.bf16.msra.mxu0 0
        %1119 = vmatprep.subr.bf16.mxu0 0
        %1120 = vmatpush1.bf16.msra.mxu0 0
        %1121 = vmatprep.subr.bf16.mxu0 0
        %1122 = vmatpush1.bf16.msra.mxu0 0
        %1123 = vmatprep.subr.bf16.mxu0 0
        %1124 = vmatpush1.bf16.msra.mxu0 0
        %1125 = vmatprep.subr.bf16.mxu0 0
        %1126 = vmatpush1.bf16.msra.mxu0 0
        %1127 = vmatprep.subr.bf16.mxu0 0
        %1128 = vmatpush1.bf16.msra.mxu0 0
        %1129 = vmatprep.subr.bf16.mxu0 0
        %1130 = vmatpush1.bf16.msra.mxu0 0
        %1131 = vmatprep.mubr.bf16.mxu0 0
        %1132 = vmatmul.mubr.bf16.gmra.mrb[0].mxu0 %v1079
        %v1133 = vpop.f32.mrb[0].mxu0
        %v1134 = vadd.f32 %v1075, %v1133
        %v1135 = vpop.f32.mrb[0].mxu0
        %v1136 = vpop.f32.mrb[0].mxu0
        %v1137 = vadd.f32 %v1075, %v1136
        %v1138 = vpop.f32.mrb[0].mxu0
        %1139 = vmatprep.mubr.bf16.mxu0 0
        %1140 = vmatmul.mubr.bf16.gmra.mrb[0].mxu0 %v1082
        %v1141 = vpop.f32.mrb[0].mxu0
        %v1142 = vadd.f32 %v1075, %v1141
        %v1143 = vpop.f32.mrb[0].mxu0
        %v1144 = vpop.f32.mrb[0].mxu0
        %v1145 = vadd.f32 %v1075, %v1144
        %v1146 = vpop.f32.mrb[0].mxu0
        %1147 = vmatprep.mubr.bf16.mxu0 0
        %1148 = vmatmul.mubr.bf16.gmra.mrb[0].mxu0 %v1085
        %v1149 = vpop.f32.mrb[0].mxu0
        %v1150 = vadd.f32 %v1075, %v1149
        %v1151 = vpop.f32.mrb[0].mxu0
        %v1152 = vpop.f32.mrb[0].mxu0
        %v1153 = vadd.f32 %v1075, %v1152
        %v1154 = vpop.f32.mrb[0].mxu0
        %1155 = vmatprep.mubr.bf16.mxu0 0
        %1156 = vmatmul.mubr.bf16.gmra.mrb[0].mxu0 %v1088
        %v1157 = vpop.f32.mrb[0].mxu0
        %v1158 = vadd.f32 %v1075, %v1157
        %v1159 = vpop.f32.mrb[0].mxu0
        %v1160 = vpop.f32.mrb[0].mxu0
        %v1161 = vadd.f32 %v1075, %v1160
        %v1162 = vpop.f32.mrb[0].mxu0
        %1163 = vmatprep.mubr.bf16.mxu0 0
        %1164 = vmatmul.mubr.bf16.gmra.mrb[0].mxu0 %v1091
        %v1165 = vpop.f32.mrb[0].mxu0
        %v1166 = vadd.f32 %v1075, %v1165
        %v1167 = vpop.f32.mrb[0].mxu0
        %v1168 = vpop.f32.mrb[0].mxu0
        %v1169 = vadd.f32 %v1075, %v1168
        %v1170 = vpop.f32.mrb[0].mxu0
        %1171 = vmatprep.mubr.bf16.mxu0 0
        %1172 = vmatmul.mubr.bf16.gmra.mrb[0].mxu0 %v1094
        %v1173 = vpop.f32.mrb[0].mxu0
        %v1174 = vadd.f32 %v1075, %v1173
        %v1175 = vpop.f32.mrb[0].mxu0
        %v1176 = vpop.f32.mrb[0].mxu0
        %v1177 = vadd.f32 %v1075, %v1176
        %v1178 = vpop.f32.mrb[0].mxu0
        %1179 = vdwg.mxu0
        %v1180 = vadd.f32 %v1134, %v1025
        %v1181 = vadd.f32 %v1137, %v1028
        %v1182 = vadd.f32 %v1142, %v1033
        %v1183 = vadd.f32 %v1145, %v1036
        %v1184 = vadd.f32 %v1150, %v1041
        %v1185 = vadd.f32 %v1153, %v1044
        %v1186 = vadd.f32 %v1158, %v1049
        %v1187 = vadd.f32 %v1161, %v1052
        %v1188 = vadd.f32 %v1166, %v1057
        %v1189 = vadd.f32 %v1169, %v1060
        %v1190 = vadd.f32 %v1174, %v1065
        %v1191 = vadd.f32 %v1177, %v1068
        %v1192 = vmax.f32 %v1180, 0.0
        %v1193 = vmax.f32 %v1181, 0.0
        %v1194 = vmax.f32 %v1182, 0.0
        %v1195 = vmax.f32 %v1183, 0.0
        %v1196 = vmax.f32 %v1184, 0.0
        %v1197 = vmax.f32 %v1185, 0.0
        %v1198 = vmax.f32 %v1186, 0.0
        %v1199 = vmax.f32 %v1187, 0.0
        %v1200 = vmax.f32 %v1188, 0.0
        %v1201 = vmax.f32 %v1189, 0.0
        %v1202 = vmax.f32 %v1190, 0.0
        %v1203 = vmax.f32 %v1191, 0.0
        %v1204 = vpack.c.bf16 %v1193, %v1192
        %v1205 = vpack.c.bf16 %v1195, %v1194
        %v1206 = vpack.c.bf16 %v1197, %v1196
        %v1207 = vpack.c.bf16 %v1199, %v1198
        %v1208 = vpack.c.bf16 %v1201, %v1200
        %v1209 = vpack.c.bf16 %v1203, %v1202
        %v1216 = vunpack.c.l.b16 %v1204
        %v1217 = vunpack.c.h.b16 %v1204
        %v1218 = vunpack.c.l.b16 %v1205
        %v1219 = vunpack.c.h.b16 %v1205
        %v1220 = vunpack.c.l.b16 %v1206
        %v1221 = vunpack.c.h.b16 %v1206
        %v1222 = vunpack.c.l.b16 %v1207
        %v1223 = vunpack.c.h.b16 %v1207
        %v1224 = vunpack.c.l.b16 %v1208
        %v1225 = vunpack.c.h.b16 %v1208
        %v1226 = vunpack.c.l.b16 %v1209
        %v1227 = vunpack.c.h.b16 %v1209
        %v1228 = vpack.c.b16 %v1216, %v1216
        %v1229 = vpack.c.b16 %v1217, %v1217
        %v1230 = vpack.c.b16 %v1218, %v1218
        %v1231 = vpack.c.b16 %v1219, %v1219
        %v1232 = vpack.c.b16 %v1220, %v1220
        %v1233 = vpack.c.b16 %v1221, %v1221
        %v1234 = vpack.c.b16 %v1222, %v1222
        %v1235 = vpack.c.b16 %v1223, %v1223
        %v1236 = vpack.c.b16 %v1224, %v1224
        %v1237 = vpack.c.b16 %v1225, %v1225
        %v1238 = vpack.c.b16 %v1226, %v1226
        %v1239 = vpack.c.b16 %v1227, %v1227
        %vm1252 = vcmask 60416
        %1253 = vst.msk [vmem:[%s336] sm:$0xf] %vm1252, %v1228
        %1254 = vst.msk [vmem:[%s336 + $0x4] sm:$0xf] %vm1252, %v1229
        %1255 = vst.msk [vmem:[%s336 + $0x8] sm:$0xf] %vm1252, %v1230
        %1256 = vst.msk [vmem:[%s336 + $0xc] sm:$0xf] %vm1252, %v1231
        %1257 = vst.msk [vmem:[%s336 + $0x10] sm:$0xf] %vm1252, %v1232
        %1258 = vst.msk [vmem:[%s336 + $0x14] sm:$0xf] %vm1252, %v1233
        %1259 = vst.msk [vmem:[%s336 + $0x18] sm:$0xf] %vm1252, %v1234
        %1260 = vst.msk [vmem:[%s336 + $0x1c] sm:$0xf] %vm1252, %v1235
        %1261 = vst.msk [vmem:[%s336 + $0x20] sm:$0xf] %vm1252, %v1236
        %1262 = vst.msk [vmem:[%s336 + $0x24] sm:$0xf] %vm1252, %v1237
        %1263 = vst.msk [vmem:[%s336 + $0x28] sm:$0xf] %vm1252, %v1238
        %1264 = vst.msk [vmem:[%s336 + $0x2c] sm:$0xf] %vm1252, %v1239
        %s1265 = scalar_lea.vmem [#allocation5], 16
        %v1266 = vld [vmem:[%s1265] sm:$0x7]
        %s1267 = scalar_lea.vmem [#allocation5], 20
        %v1268 = vld [vmem:[%s1267] sm:$0x7]
        %v1270 = vunpack.c.l.b16 %v351
        %v1271 = vpack.c.b16 %v382, %v1270
        %vm1272 = vcmask 1046528
        %v1273 = vrot.slane %v1271, 1
        %v1274 = vrot.slane %v395, 1
        %v1275 = vsel %vm1272, %v1273, %v1274
        %v1276 = vrot.slane %v396, 1
        %v1277 = vsel %vm1272, %v1274, %v1276
        %v1278 = vrot.slane %v397, 1
        %v1279 = vsel %vm1272, %v1276, %v1278
        %v1280 = vrot.slane %v398, 1
        %v1281 = vsel %vm1272, %v1278, %v1280
        %v1282 = vrot.slane %v399, 1
        %v1283 = vsel %vm1272, %v1280, %v1282
        %v1284 = vrot.slane %v400, 1
        %v1285 = vsel %vm1272, %v1282, %v1284
        %v1287 = vsel %vm454, %v1275, 0
        %v1290 = vsel %vm454, %v1277, 0
        %v1293 = vsel %vm454, %v1279, 0
        %v1296 = vsel %vm454, %v1281, 0
        %v1299 = vsel %vm454, %v1283, 0
        %v1302 = vsel %vm454, %v1285, 0
        %v1305 = vand.u32 %v1268, %v476
        %1307 = vmatprep.subr.bf16.mxu0 0
        %1308 = vmatpush1.bf16.msra.mxu0 %v1305
        %1309 = vmatprep.subr.bf16.mxu0 0
        %1310 = vmatpush1.bf16.msra.mxu0 0
        %1311 = vmatprep.subr.bf16.mxu0 0
        %1312 = vmatpush1.bf16.msra.mxu0 0
        %1313 = vmatprep.subr.bf16.mxu0 0
        %1314 = vmatpush1.bf16.msra.mxu0 0
        %1315 = vmatprep.subr.bf16.mxu0 0
        %1316 = vmatpush1.bf16.msra.mxu0 0
        %1317 = vmatprep.subr.bf16.mxu0 0
        %1318 = vmatpush1.bf16.msra.mxu0 0
        %1319 = vmatprep.subr.bf16.mxu0 0
        %1320 = vmatpush1.bf16.msra.mxu0 0
        %1321 = vmatprep.subr.bf16.mxu0 0
        %1322 = vmatpush1.bf16.msra.mxu0 0
        %1323 = vmatprep.subr.bf16.mxu0 0
        %1324 = vmatpush1.bf16.msra.mxu0 0
        %1325 = vmatprep.subr.bf16.mxu0 0
        %1326 = vmatpush1.bf16.msra.mxu0 0
        %1327 = vmatprep.subr.bf16.mxu0 0
        %1328 = vmatpush1.bf16.msra.mxu0 0
        %1329 = vmatprep.subr.bf16.mxu0 0
        %1330 = vmatpush1.bf16.msra.mxu0 0
        %1331 = vmatprep.subr.bf16.mxu0 0
        %1332 = vmatpush1.bf16.msra.mxu0 0
        %1333 = vmatprep.subr.bf16.mxu0 0
        %1334 = vmatpush1.bf16.msra.mxu0 0
        %1335 = vmatprep.subr.bf16.mxu0 0
        %1336 = vmatpush1.bf16.msra.mxu0 0
        %1337 = vmatprep.subr.bf16.mxu0 0
        %1338 = vmatpush1.bf16.msra.mxu0 0
        %1339 = vmatprep.mubr.bf16.mxu0 0
        %1340 = vmatmul.mubr.bf16.gmra.mrb[0].mxu0 %v1287
        %v1341 = vpop.f32.mrb[0].mxu0
        %v1342 = vadd.f32 0.0, %v1341
        %v1343 = vpop.f32.mrb[0].mxu0
        %v1344 = vpop.f32.mrb[0].mxu0
        %v1345 = vadd.f32 0.0, %v1344
        %v1346 = vpop.f32.mrb[0].mxu0
        %1347 = vmatprep.mubr.bf16.mxu0 0
        %1348 = vmatmul.mubr.bf16.gmra.mrb[0].mxu0 %v1290
        %v1349 = vpop.f32.mrb[0].mxu0
        %v1350 = vadd.f32 0.0, %v1349
        %v1351 = vpop.f32.mrb[0].mxu0
        %v1352 = vpop.f32.mrb[0].mxu0
        %v1353 = vadd.f32 0.0, %v1352
        %v1354 = vpop.f32.mrb[0].mxu0
        %1355 = vmatprep.mubr.bf16.mxu0 0
        %1356 = vmatmul.mubr.bf16.gmra.mrb[0].mxu0 %v1293
        %v1357 = vpop.f32.mrb[0].mxu0
        %v1358 = vadd.f32 0.0, %v1357
        %v1359 = vpop.f32.mrb[0].mxu0
        %v1360 = vpop.f32.mrb[0].mxu0
        %v1361 = vadd.f32 0.0, %v1360
        %v1362 = vpop.f32.mrb[0].mxu0
        %1363 = vmatprep.mubr.bf16.mxu0 0
        %1364 = vmatmul.mubr.bf16.gmra.mrb[0].mxu0 %v1296
        %v1365 = vpop.f32.mrb[0].mxu0
        %v1366 = vadd.f32 0.0, %v1365
        %v1367 = vpop.f32.mrb[0].mxu0
        %v1368 = vpop.f32.mrb[0].mxu0
        %v1369 = vadd.f32 0.0, %v1368
        %v1370 = vpop.f32.mrb[0].mxu0
        %1371 = vmatprep.mubr.bf16.mxu0 0
        %1372 = vmatmul.mubr.bf16.gmra.mrb[0].mxu0 %v1299
        %v1373 = vpop.f32.mrb[0].mxu0
        %v1374 = vadd.f32 0.0, %v1373
        %v1375 = vpop.f32.mrb[0].mxu0
        %v1376 = vpop.f32.mrb[0].mxu0
        %v1377 = vadd.f32 0.0, %v1376
        %v1378 = vpop.f32.mrb[0].mxu0
        %1379 = vmatprep.mubr.bf16.mxu0 0
        %1380 = vmatmul.mubr.bf16.gmra.mrb[0].mxu0 %v1302
        %v1381 = vpop.f32.mrb[0].mxu0
        %v1382 = vadd.f32 0.0, %v1381
        %v1383 = vpop.f32.mrb[0].mxu0
        %v1384 = vpop.f32.mrb[0].mxu0
        %v1385 = vadd.f32 0.0, %v1384
        %v1386 = vpop.f32.mrb[0].mxu0
        %1387 = vdwg.mxu0
        %v1389 = vand.u32 %v1266, %v476
        %1391 = vmatprep.subr.bf16.mxu0 0
        %1392 = vmatpush1.bf16.msra.mxu0 %v1389
        %1393 = vmatprep.subr.bf16.mxu0 0
        %1394 = vmatpush1.bf16.msra.mxu0 0
        %1395 = vmatprep.subr.bf16.mxu0 0
        %1396 = vmatpush1.bf16.msra.mxu0 0
        %1397 = vmatprep.subr.bf16.mxu0 0
        %1398 = vmatpush1.bf16.msra.mxu0 0
        %1399 = vmatprep.subr.bf16.mxu0 0
        %1400 = vmatpush1.bf16.msra.mxu0 0
        %1401 = vmatprep.subr.bf16.mxu0 0
        %1402 = vmatpush1.bf16.msra.mxu0 0
        %1403 = vmatprep.subr.bf16.mxu0 0
        %1404 = vmatpush1.bf16.msra.mxu0 0
        %1405 = vmatprep.subr.bf16.mxu0 0
        %1406 = vmatpush1.bf16.msra.mxu0 0
        %1407 = vmatprep.subr.bf16.mxu0 0
        %1408 = vmatpush1.bf16.msra.mxu0 0
        %1409 = vmatprep.subr.bf16.mxu0 0
        %1410 = vmatpush1.bf16.msra.mxu0 0
        %1411 = vmatprep.subr.bf16.mxu0 0
        %1412 = vmatpush1.bf16.msra.mxu0 0
        %1413 = vmatprep.subr.bf16.mxu0 0
        %1414 = vmatpush1.bf16.msra.mxu0 0
        %1415 = vmatprep.subr.bf16.mxu0 0
        %1416 = vmatpush1.bf16.msra.mxu0 0
        %1417 = vmatprep.subr.bf16.mxu0 0
        %1418 = vmatpush1.bf16.msra.mxu0 0
        %1419 = vmatprep.subr.bf16.mxu0 0
        %1420 = vmatpush1.bf16.msra.mxu0 0
        %1421 = vmatprep.subr.bf16.mxu0 0
        %1422 = vmatpush1.bf16.msra.mxu0 0
        %1423 = vmatprep.mubr.bf16.mxu0 0
        %1424 = vmatmul.mubr.bf16.gmra.mrb[0].mxu0 %v456
        %v1425 = vpop.f32.mrb[0].mxu0
        %v1426 = vadd.f32 %v1342, %v1425
        %v1427 = vpop.f32.mrb[0].mxu0
        %v1428 = vpop.f32.mrb[0].mxu0
        %v1429 = vadd.f32 %v1345, %v1428
        %v1430 = vpop.f32.mrb[0].mxu0
        %1431 = vmatprep.mubr.bf16.mxu0 0
        %1432 = vmatmul.mubr.bf16.gmra.mrb[0].mxu0 %v459
        %v1433 = vpop.f32.mrb[0].mxu0
        %v1434 = vadd.f32 %v1350, %v1433
        %v1435 = vpop.f32.mrb[0].mxu0
        %v1436 = vpop.f32.mrb[0].mxu0
        %v1437 = vadd.f32 %v1353, %v1436
        %v1438 = vpop.f32.mrb[0].mxu0
        %1439 = vmatprep.mubr.bf16.mxu0 0
        %1440 = vmatmul.mubr.bf16.gmra.mrb[0].mxu0 %v462
        %v1441 = vpop.f32.mrb[0].mxu0
        %v1442 = vadd.f32 %v1358, %v1441
        %v1443 = vpop.f32.mrb[0].mxu0
        %v1444 = vpop.f32.mrb[0].mxu0
        %v1445 = vadd.f32 %v1361, %v1444
        %v1446 = vpop.f32.mrb[0].mxu0
        %1447 = vmatprep.mubr.bf16.mxu0 0
        %1448 = vmatmul.mubr.bf16.gmra.mrb[0].mxu0 %v465
        %v1449 = vpop.f32.mrb[0].mxu0
        %v1450 = vadd.f32 %v1366, %v1449
        %v1451 = vpop.f32.mrb[0].mxu0
        %v1452 = vpop.f32.mrb[0].mxu0
        %v1453 = vadd.f32 %v1369, %v1452
        %v1454 = vpop.f32.mrb[0].mxu0
        %1455 = vmatprep.mubr.bf16.mxu0 0
        %1456 = vmatmul.mubr.bf16.gmra.mrb[0].mxu0 %v468
        %v1457 = vpop.f32.mrb[0].mxu0
        %v1458 = vadd.f32 %v1374, %v1457
        %v1459 = vpop.f32.mrb[0].mxu0
        %v1460 = vpop.f32.mrb[0].mxu0
        %v1461 = vadd.f32 %v1377, %v1460
        %v1462 = vpop.f32.mrb[0].mxu0
        %1463 = vmatprep.mubr.bf16.mxu0 0
        %1464 = vmatmul.mubr.bf16.gmra.mrb[0].mxu0 %v471
        %v1465 = vpop.f32.mrb[0].mxu0
        %v1466 = vadd.f32 %v1382, %v1465
        %v1467 = vpop.f32.mrb[0].mxu0
        %v1468 = vpop.f32.mrb[0].mxu0
        %v1469 = vadd.f32 %v1385, %v1468
        %v1470 = vpop.f32.mrb[0].mxu0
        %1471 = vdwg.mxu0
        %s1472 = scalar_lea.vmem [#allocation5], 24
        %v1473 = vld [vmem:[%s1472] sm:$0x7]
        %v1475 = vand.u32 %v1473, %v476
        %1477 = vmatprep.subr.bf16.mxu0 0
        %1478 = vmatpush1.bf16.msra.mxu0 %v1475
        %1479 = vmatprep.subr.bf16.mxu0 0
        %1480 = vmatpush1.bf16.msra.mxu0 0
        %1481 = vmatprep.subr.bf16.mxu0 0
        %1482 = vmatpush1.bf16.msra.mxu0 0
        %1483 = vmatprep.subr.bf16.mxu0 0
        %1484 = vmatpush1.bf16.msra.mxu0 0
        %1485 = vmatprep.subr.bf16.mxu0 0
        %1486 = vmatpush1.bf16.msra.mxu0 0
        %1487 = vmatprep.subr.bf16.mxu0 0
        %1488 = vmatpush1.bf16.msra.mxu0 0
        %1489 = vmatprep.subr.bf16.mxu0 0
        %1490 = vmatpush1.bf16.msra.mxu0 0
        %1491 = vmatprep.subr.bf16.mxu0 0
        %1492 = vmatpush1.bf16.msra.mxu0 0
        %1493 = vmatprep.subr.bf16.mxu0 0
        %1494 = vmatpush1.bf16.msra.mxu0 0
        %1495 = vmatprep.subr.bf16.mxu0 0
        %1496 = vmatpush1.bf16.msra.mxu0 0
        %1497 = vmatprep.subr.bf16.mxu0 0
        %1498 = vmatpush1.bf16.msra.mxu0 0
        %1499 = vmatprep.subr.bf16.mxu0 0
        %1500 = vmatpush1.bf16.msra.mxu0 0
        %1501 = vmatprep.subr.bf16.mxu0 0
        %1502 = vmatpush1.bf16.msra.mxu0 0
        %1503 = vmatprep.subr.bf16.mxu0 0
        %1504 = vmatpush1.bf16.msra.mxu0 0
        %1505 = vmatprep.subr.bf16.mxu0 0
        %1506 = vmatpush1.bf16.msra.mxu0 0
        %1507 = vmatprep.subr.bf16.mxu0 0
        %1508 = vmatpush1.bf16.msra.mxu0 0
        %1509 = vmatprep.mubr.bf16.mxu0 0
        %1510 = vmatmul.mubr.bf16.gmra.mrb[0].mxu0 %v837
        %v1511 = vpop.f32.mrb[0].mxu0
        %v1512 = vadd.f32 0.0, %v1511
        %v1513 = vpop.f32.mrb[0].mxu0
        %v1514 = vpop.f32.mrb[0].mxu0
        %v1515 = vadd.f32 0.0, %v1514
        %v1516 = vpop.f32.mrb[0].mxu0
        %1517 = vmatprep.mubr.bf16.mxu0 0
        %1518 = vmatmul.mubr.bf16.gmra.mrb[0].mxu0 %v840
        %v1519 = vpop.f32.mrb[0].mxu0
        %v1520 = vadd.f32 0.0, %v1519
        %v1521 = vpop.f32.mrb[0].mxu0
        %v1522 = vpop.f32.mrb[0].mxu0
        %v1523 = vadd.f32 0.0, %v1522
        %v1524 = vpop.f32.mrb[0].mxu0
        %1525 = vmatprep.mubr.bf16.mxu0 0
        %1526 = vmatmul.mubr.bf16.gmra.mrb[0].mxu0 %v843
        %v1527 = vpop.f32.mrb[0].mxu0
        %v1528 = vadd.f32 0.0, %v1527
        %v1529 = vpop.f32.mrb[0].mxu0
        %v1530 = vpop.f32.mrb[0].mxu0
        %v1531 = vadd.f32 0.0, %v1530
        %v1532 = vpop.f32.mrb[0].mxu0
        %1533 = vmatprep.mubr.bf16.mxu0 0
        %1534 = vmatmul.mubr.bf16.gmra.mrb[0].mxu0 %v846
        %v1535 = vpop.f32.mrb[0].mxu0
        %v1536 = vadd.f32 0.0, %v1535
        %v1537 = vpop.f32.mrb[0].mxu0
        %v1538 = vpop.f32.mrb[0].mxu0
        %v1539 = vadd.f32 0.0, %v1538
        %v1540 = vpop.f32.mrb[0].mxu0
        %1541 = vmatprep.mubr.bf16.mxu0 0
        %1542 = vmatmul.mubr.bf16.gmra.mrb[0].mxu0 %v849
        %v1543 = vpop.f32.mrb[0].mxu0
        %v1544 = vadd.f32 0.0, %v1543
        %v1545 = vpop.f32.mrb[0].mxu0
        %v1546 = vpop.f32.mrb[0].mxu0
        %v1547 = vadd.f32 0.0, %v1546
        %v1548 = vpop.f32.mrb[0].mxu0
        %1549 = vmatprep.mubr.bf16.mxu0 0
        %1550 = vmatmul.mubr.bf16.gmra.mrb[0].mxu0 %v852
        %v1551 = vpop.f32.mrb[0].mxu0
        %v1552 = vadd.f32 0.0, %v1551
        %v1553 = vpop.f32.mrb[0].mxu0
        %v1554 = vpop.f32.mrb[0].mxu0
        %v1555 = vadd.f32 0.0, %v1554
        %v1556 = vpop.f32.mrb[0].mxu0
        %1557 = vdwg.mxu0
        %v1558 = vadd.f32 %v1426, %v1512
        %v1559 = vadd.f32 %v1429, %v1515
        %v1560 = vadd.f32 %v1434, %v1520
        %v1561 = vadd.f32 %v1437, %v1523
        %v1562 = vadd.f32 %v1442, %v1528
        %v1563 = vadd.f32 %v1445, %v1531
        %v1564 = vadd.f32 %v1450, %v1536
        %v1565 = vadd.f32 %v1453, %v1539
        %v1566 = vadd.f32 %v1458, %v1544
        %v1567 = vadd.f32 %v1461, %v1547
        %v1568 = vadd.f32 %v1466, %v1552
        %v1569 = vadd.f32 %v1469, %v1555
        %s1570 = scalar_lea.vmem [#allocation5], 28
        %v1571 = vld [vmem:[%s1570] sm:$0x7]
        %v1573 = vunpack.c.l.b16 %v356
        %v1574 = vpack.c.b16 %v385, %v1573
        %v1575 = vrot.slane %v1574, 1
        %v1576 = vrot.slane %v666, 1
        %v1577 = vsel %vm1272, %v1575, %v1576
        %v1578 = vrot.slane %v667, 1
        %v1579 = vsel %vm1272, %v1576, %v1578
        %v1580 = vrot.slane %v668, 1
        %v1581 = vsel %vm1272, %v1578, %v1580
        %v1582 = vrot.slane %v669, 1
        %v1583 = vsel %vm1272, %v1580, %v1582
        %v1584 = vrot.slane %v670, 1
        %v1585 = vsel %vm1272, %v1582, %v1584
        %v1586 = vrot.slane %v789, 1
        %v1587 = vsel %vm1272, %v1584, %v1586
        %v1589 = vsel %vm454, %v1577, 0
        %v1592 = vsel %vm454, %v1579, 0
        %v1595 = vsel %vm454, %v1581, 0
        %v1598 = vsel %vm454, %v1583, 0
        %v1601 = vsel %vm454, %v1585, 0
        %v1604 = vsel %vm454, %v1587, 0
        %v1607 = vand.u32 %v1571, %v476
        %1609 = vmatprep.subr.bf16.mxu0 0
        %1610 = vmatpush1.bf16.msra.mxu0 %v1607
        %1611 = vmatprep.subr.bf16.mxu0 0
        %1612 = vmatpush1.bf16.msra.mxu0 0
        %1613 = vmatprep.subr.bf16.mxu0 0
        %1614 = vmatpush1.bf16.msra.mxu0 0
        %1615 = vmatprep.subr.bf16.mxu0 0
        %1616 = vmatpush1.bf16.msra.mxu0 0
        %1617 = vmatprep.subr.bf16.mxu0 0
        %1618 = vmatpush1.bf16.msra.mxu0 0
        %1619 = vmatprep.subr.bf16.mxu0 0
        %1620 = vmatpush1.bf16.msra.mxu0 0
        %1621 = vmatprep.subr.bf16.mxu0 0
        %1622 = vmatpush1.bf16.msra.mxu0 0
        %1623 = vmatprep.subr.bf16.mxu0 0
        %1624 = vmatpush1.bf16.msra.mxu0 0
        %1625 = vmatprep.subr.bf16.mxu0 0
        %1626 = vmatpush1.bf16.msra.mxu0 0
        %1627 = vmatprep.subr.bf16.mxu0 0
        %1628 = vmatpush1.bf16.msra.mxu0 0
        %1629 = vmatprep.subr.bf16.mxu0 0
        %1630 = vmatpush1.bf16.msra.mxu0 0
        %1631 = vmatprep.subr.bf16.mxu0 0
        %1632 = vmatpush1.bf16.msra.mxu0 0
        %1633 = vmatprep.subr.bf16.mxu0 0
        %1634 = vmatpush1.bf16.msra.mxu0 0
        %1635 = vmatprep.subr.bf16.mxu0 0
        %1636 = vmatpush1.bf16.msra.mxu0 0
        %1637 = vmatprep.subr.bf16.mxu0 0
        %1638 = vmatpush1.bf16.msra.mxu0 0
        %1639 = vmatprep.subr.bf16.mxu0 0
        %1640 = vmatpush1.bf16.msra.mxu0 0
        %1641 = vmatprep.mubr.bf16.mxu0 0
        %1642 = vmatmul.mubr.bf16.gmra.mrb[0].mxu0 %v1589
        %v1643 = vpop.f32.mrb[0].mxu0
        %v1644 = vadd.f32 0.0, %v1643
        %v1645 = vpop.f32.mrb[0].mxu0
        %v1646 = vpop.f32.mrb[0].mxu0
        %v1647 = vadd.f32 0.0, %v1646
        %v1648 = vpop.f32.mrb[0].mxu0
        %1649 = vmatprep.mubr.bf16.mxu0 0
        %1650 = vmatmul.mubr.bf16.gmra.mrb[0].mxu0 %v1592
        %v1651 = vpop.f32.mrb[0].mxu0
        %v1652 = vadd.f32 0.0, %v1651
        %v1653 = vpop.f32.mrb[0].mxu0
        %v1654 = vpop.f32.mrb[0].mxu0
        %v1655 = vadd.f32 0.0, %v1654
        %v1656 = vpop.f32.mrb[0].mxu0
        %1657 = vmatprep.mubr.bf16.mxu0 0
        %1658 = vmatmul.mubr.bf16.gmra.mrb[0].mxu0 %v1595
        %v1659 = vpop.f32.mrb[0].mxu0
        %v1660 = vadd.f32 0.0, %v1659
        %v1661 = vpop.f32.mrb[0].mxu0
        %v1662 = vpop.f32.mrb[0].mxu0
        %v1663 = vadd.f32 0.0, %v1662
        %v1664 = vpop.f32.mrb[0].mxu0
        %1665 = vmatprep.mubr.bf16.mxu0 0
        %1666 = vmatmul.mubr.bf16.gmra.mrb[0].mxu0 %v1598
        %v1667 = vpop.f32.mrb[0].mxu0
        %v1668 = vadd.f32 0.0, %v1667
        %v1669 = vpop.f32.mrb[0].mxu0
        %v1670 = vpop.f32.mrb[0].mxu0
        %v1671 = vadd.f32 0.0, %v1670
        %v1672 = vpop.f32.mrb[0].mxu0
        %1673 = vmatprep.mubr.bf16.mxu0 0
        %1674 = vmatmul.mubr.bf16.gmra.mrb[0].mxu0 %v1601
        %v1675 = vpop.f32.mrb[0].mxu0
        %v1676 = vadd.f32 0.0, %v1675
        %v1677 = vpop.f32.mrb[0].mxu0
        %v1678 = vpop.f32.mrb[0].mxu0
        %v1679 = vadd.f32 0.0, %v1678
        %v1680 = vpop.f32.mrb[0].mxu0
        %1681 = vmatprep.mubr.bf16.mxu0 0
        %1682 = vmatmul.mubr.bf16.gmra.mrb[0].mxu0 %v1604
        %v1683 = vpop.f32.mrb[0].mxu0
        %v1684 = vadd.f32 0.0, %v1683
        %v1685 = vpop.f32.mrb[0].mxu0
        %v1686 = vpop.f32.mrb[0].mxu0
        %v1687 = vadd.f32 0.0, %v1686
        %v1688 = vpop.f32.mrb[0].mxu0
        %1689 = vdwg.mxu0
        %v1690 = vadd.f32 %v1558, %v1644
        %v1691 = vadd.f32 %v1559, %v1647
        %v1692 = vadd.f32 %v1560, %v1652
        %v1693 = vadd.f32 %v1561, %v1655
        %v1694 = vadd.f32 %v1562, %v1660
        %v1695 = vadd.f32 %v1563, %v1663
        %v1696 = vadd.f32 %v1564, %v1668
        %v1697 = vadd.f32 %v1565, %v1671
        %v1698 = vadd.f32 %v1566, %v1676
        %v1699 = vadd.f32 %v1567, %v1679
        %v1700 = vadd.f32 %v1568, %v1684
        %v1701 = vadd.f32 %v1569, %v1687
        %v1702 = vadd.f32 %v1690, %v954
        %v1703 = vadd.f32 %v1691, %v954
        %v1704 = vadd.f32 %v1692, %v954
        %v1705 = vadd.f32 %v1693, %v954
        %v1706 = vadd.f32 %v1694, %v954
        %v1707 = vadd.f32 %v1695, %v954
        %v1708 = vadd.f32 %v1696, %v954
        %v1709 = vadd.f32 %v1697, %v954
        %v1710 = vadd.f32 %v1698, %v954
        %v1711 = vadd.f32 %v1699, %v954
        %v1712 = vadd.f32 %v1700, %v954
        %v1713 = vadd.f32 %v1701, %v954
        %v1714 = vmax.f32 %v1702, 0.0
        %v1715 = vmax.f32 %v1703, 0.0
        %v1716 = vmax.f32 %v1704, 0.0
        %v1717 = vmax.f32 %v1705, 0.0
        %v1718 = vmax.f32 %v1706, 0.0
        %v1719 = vmax.f32 %v1707, 0.0
        %v1720 = vmax.f32 %v1708, 0.0
        %v1721 = vmax.f32 %v1709, 0.0
        %v1722 = vmax.f32 %v1710, 0.0
        %v1723 = vmax.f32 %v1711, 0.0
        %v1724 = vmax.f32 %v1712, 0.0
        %v1725 = vmax.f32 %v1713, 0.0
        %v1726 = vpack.c.bf16 %v1715, %v1714
        %v1727 = vpack.c.bf16 %v1717, %v1716
        %v1728 = vpack.c.bf16 %v1719, %v1718
        %v1729 = vpack.c.bf16 %v1721, %v1720
        %v1730 = vpack.c.bf16 %v1723, %v1722
        %v1731 = vpack.c.bf16 %v1725, %v1724
        %s1732 = scalar_lea.vmem [#allocation7], 4
        %v1733 = vld [vmem:[%s1732] sm:$0x7]
        %v1735 = vand.u32 %v1733, %v476
        %1737 = vmatprep.subr.bf16.mxu0 0
        %1738 = vmatpush1.bf16.msra.mxu0 %v1735
        %1739 = vmatprep.subr.bf16.mxu0 0
        %1740 = vmatpush1.bf16.msra.mxu0 0
        %1741 = vmatprep.subr.bf16.mxu0 0
        %1742 = vmatpush1.bf16.msra.mxu0 0
        %1743 = vmatprep.subr.bf16.mxu0 0
        %1744 = vmatpush1.bf16.msra.mxu0 0
        %1745 = vmatprep.subr.bf16.mxu0 0
        %1746 = vmatpush1.bf16.msra.mxu0 0
        %1747 = vmatprep.subr.bf16.mxu0 0
        %1748 = vmatpush1.bf16.msra.mxu0 0
        %1749 = vmatprep.subr.bf16.mxu0 0
        %1750 = vmatpush1.bf16.msra.mxu0 0
        %1751 = vmatprep.subr.bf16.mxu0 0
        %1752 = vmatpush1.bf16.msra.mxu0 0
        %1753 = vmatprep.subr.bf16.mxu0 0
        %1754 = vmatpush1.bf16.msra.mxu0 0
        %1755 = vmatprep.subr.bf16.mxu0 0
        %1756 = vmatpush1.bf16.msra.mxu0 0
        %1757 = vmatprep.subr.bf16.mxu0 0
        %1758 = vmatpush1.bf16.msra.mxu0 0
        %1759 = vmatprep.subr.bf16.mxu0 0
        %1760 = vmatpush1.bf16.msra.mxu0 0
        %1761 = vmatprep.subr.bf16.mxu0 0
        %1762 = vmatpush1.bf16.msra.mxu0 0
        %1763 = vmatprep.subr.bf16.mxu0 0
        %1764 = vmatpush1.bf16.msra.mxu0 0
        %1765 = vmatprep.subr.bf16.mxu0 0
        %1766 = vmatpush1.bf16.msra.mxu0 0
        %1767 = vmatprep.subr.bf16.mxu0 0
        %1768 = vmatpush1.bf16.msra.mxu0 0
        %1769 = vmatprep.mubr.bf16.mxu0 0
        %1770 = vmatmul.mubr.bf16.gmra.mrb[0].mxu0 %v837
        %v1771 = vpop.f32.mrb[0].mxu0
        %v1772 = vadd.f32 0.0, %v1771
        %v1773 = vpop.f32.mrb[0].mxu0
        %v1774 = vpop.f32.mrb[0].mxu0
        %v1775 = vadd.f32 0.0, %v1774
        %v1776 = vpop.f32.mrb[0].mxu0
        %1777 = vmatprep.mubr.bf16.mxu0 0
        %1778 = vmatmul.mubr.bf16.gmra.mrb[0].mxu0 %v840
        %v1779 = vpop.f32.mrb[0].mxu0
        %v1780 = vadd.f32 0.0, %v1779
        %v1781 = vpop.f32.mrb[0].mxu0
        %v1782 = vpop.f32.mrb[0].mxu0
        %v1783 = vadd.f32 0.0, %v1782
        %v1784 = vpop.f32.mrb[0].mxu0
        %1785 = vmatprep.mubr.bf16.mxu0 0
        %1786 = vmatmul.mubr.bf16.gmra.mrb[0].mxu0 %v843
        %v1787 = vpop.f32.mrb[0].mxu0
        %v1788 = vadd.f32 0.0, %v1787
        %v1789 = vpop.f32.mrb[0].mxu0
        %v1790 = vpop.f32.mrb[0].mxu0
        %v1791 = vadd.f32 0.0, %v1790
        %v1792 = vpop.f32.mrb[0].mxu0
        %1793 = vmatprep.mubr.bf16.mxu0 0
        %1794 = vmatmul.mubr.bf16.gmra.mrb[0].mxu0 %v846
        %v1795 = vpop.f32.mrb[0].mxu0
        %v1796 = vadd.f32 0.0, %v1795
        %v1797 = vpop.f32.mrb[0].mxu0
        %v1798 = vpop.f32.mrb[0].mxu0
        %v1799 = vadd.f32 0.0, %v1798
        %v1800 = vpop.f32.mrb[0].mxu0
        %1801 = vmatprep.mubr.bf16.mxu0 0
        %1802 = vmatmul.mubr.bf16.gmra.mrb[0].mxu0 %v849
        %v1803 = vpop.f32.mrb[0].mxu0
        %v1804 = vadd.f32 0.0, %v1803
        %v1805 = vpop.f32.mrb[0].mxu0
        %v1806 = vpop.f32.mrb[0].mxu0
        %v1807 = vadd.f32 0.0, %v1806
        %v1808 = vpop.f32.mrb[0].mxu0
        %1809 = vmatprep.mubr.bf16.mxu0 0
        %1810 = vmatmul.mubr.bf16.gmra.mrb[0].mxu0 %v852
        %v1811 = vpop.f32.mrb[0].mxu0
        %v1812 = vadd.f32 0.0, %v1811
        %v1813 = vpop.f32.mrb[0].mxu0
        %v1814 = vpop.f32.mrb[0].mxu0
        %v1815 = vadd.f32 0.0, %v1814
        %v1816 = vpop.f32.mrb[0].mxu0
        %1817 = vdwg.mxu0
        %v1819 = vsel %vm1077, %v1726, 0
        %v1822 = vsel %vm1077, %v1727, 0
        %v1825 = vsel %vm1077, %v1728, 0
        %v1828 = vsel %vm1077, %v1729, 0
        %v1831 = vsel %vm1077, %v1730, 0
        %v1834 = vsel %vm1077, %v1731, 0
        %1836 = vmatprep.subr.bf16.mxu0 0
        %1837 = vmatpush1.bf16.msra.mxu0 %v1097
        %1838 = vmatprep.subr.bf16.mxu0 0
        %1839 = vmatpush1.bf16.msra.mxu0 0
        %1840 = vmatprep.subr.bf16.mxu0 0
        %1841 = vmatpush1.bf16.msra.mxu0 0
        %1842 = vmatprep.subr.bf16.mxu0 0
        %1843 = vmatpush1.bf16.msra.mxu0 0
        %1844 = vmatprep.subr.bf16.mxu0 0
        %1845 = vmatpush1.bf16.msra.mxu0 0
        %1846 = vmatprep.subr.bf16.mxu0 0
        %1847 = vmatpush1.bf16.msra.mxu0 0
        %1848 = vmatprep.subr.bf16.mxu0 0
        %1849 = vmatpush1.bf16.msra.mxu0 0
        %1850 = vmatprep.subr.bf16.mxu0 0
        %1851 = vmatpush1.bf16.msra.mxu0 0
        %1852 = vmatprep.subr.bf16.mxu0 0
        %1853 = vmatpush1.bf16.msra.mxu0 0
        %1854 = vmatprep.subr.bf16.mxu0 0
        %1855 = vmatpush1.bf16.msra.mxu0 0
        %1856 = vmatprep.subr.bf16.mxu0 0
        %1857 = vmatpush1.bf16.msra.mxu0 0
        %1858 = vmatprep.subr.bf16.mxu0 0
        %1859 = vmatpush1.bf16.msra.mxu0 0
        %1860 = vmatprep.subr.bf16.mxu0 0
        %1861 = vmatpush1.bf16.msra.mxu0 0
        %1862 = vmatprep.subr.bf16.mxu0 0
        %1863 = vmatpush1.bf16.msra.mxu0 0
        %1864 = vmatprep.subr.bf16.mxu0 0
        %1865 = vmatpush1.bf16.msra.mxu0 0
        %1866 = vmatprep.subr.bf16.mxu0 0
        %1867 = vmatpush1.bf16.msra.mxu0 0
        %1868 = vmatprep.mubr.bf16.mxu0 0
        %1869 = vmatmul.mubr.bf16.gmra.mrb[0].mxu0 %v1819
        %v1870 = vpop.f32.mrb[0].mxu0
        %v1871 = vadd.f32 %v1075, %v1870
        %v1872 = vpop.f32.mrb[0].mxu0
        %v1873 = vpop.f32.mrb[0].mxu0
        %v1874 = vadd.f32 %v1075, %v1873
        %v1875 = vpop.f32.mrb[0].mxu0
        %1876 = vmatprep.mubr.bf16.mxu0 0
        %1877 = vmatmul.mubr.bf16.gmra.mrb[0].mxu0 %v1822
        %v1878 = vpop.f32.mrb[0].mxu0
        %v1879 = vadd.f32 %v1075, %v1878
        %v1880 = vpop.f32.mrb[0].mxu0
        %v1881 = vpop.f32.mrb[0].mxu0
        %v1882 = vadd.f32 %v1075, %v1881
        %v1883 = vpop.f32.mrb[0].mxu0
        %1884 = vmatprep.mubr.bf16.mxu0 0
        %1885 = vmatmul.mubr.bf16.gmra.mrb[0].mxu0 %v1825
        %v1886 = vpop.f32.mrb[0].mxu0
        %v1887 = vadd.f32 %v1075, %v1886
        %v1888 = vpop.f32.mrb[0].mxu0
        %v1889 = vpop.f32.mrb[0].mxu0
        %v1890 = vadd.f32 %v1075, %v1889
        %v1891 = vpop.f32.mrb[0].mxu0
        %1892 = vmatprep.mubr.bf16.mxu0 0
        %1893 = vmatmul.mubr.bf16.gmra.mrb[0].mxu0 %v1828
        %v1894 = vpop.f32.mrb[0].mxu0
        %v1895 = vadd.f32 %v1075, %v1894
        %v1896 = vpop.f32.mrb[0].mxu0
        %v1897 = vpop.f32.mrb[0].mxu0
        %v1898 = vadd.f32 %v1075, %v1897
        %v1899 = vpop.f32.mrb[0].mxu0
        %1900 = vmatprep.mubr.bf16.mxu0 0
        %1901 = vmatmul.mubr.bf16.gmra.mrb[0].mxu0 %v1831
        %v1902 = vpop.f32.mrb[0].mxu0
        %v1903 = vadd.f32 %v1075, %v1902
        %v1904 = vpop.f32.mrb[0].mxu0
        %v1905 = vpop.f32.mrb[0].mxu0
        %v1906 = vadd.f32 %v1075, %v1905
        %v1907 = vpop.f32.mrb[0].mxu0
        %1908 = vmatprep.mubr.bf16.mxu0 0
        %1909 = vmatmul.mubr.bf16.gmra.mrb[0].mxu0 %v1834
        %v1910 = vpop.f32.mrb[0].mxu0
        %v1911 = vadd.f32 %v1075, %v1910
        %v1912 = vpop.f32.mrb[0].mxu0
        %v1913 = vpop.f32.mrb[0].mxu0
        %v1914 = vadd.f32 %v1075, %v1913
        %v1915 = vpop.f32.mrb[0].mxu0
        %1916 = vdwg.mxu0
        %v1917 = vadd.f32 %v1871, %v1772
        %v1918 = vadd.f32 %v1874, %v1775
        %v1919 = vadd.f32 %v1879, %v1780
        %v1920 = vadd.f32 %v1882, %v1783
        %v1921 = vadd.f32 %v1887, %v1788
        %v1922 = vadd.f32 %v1890, %v1791
        %v1923 = vadd.f32 %v1895, %v1796
        %v1924 = vadd.f32 %v1898, %v1799
        %v1925 = vadd.f32 %v1903, %v1804
        %v1926 = vadd.f32 %v1906, %v1807
        %v1927 = vadd.f32 %v1911, %v1812
        %v1928 = vadd.f32 %v1914, %v1815
        %v1929 = vmax.f32 %v1917, 0.0
        %v1930 = vmax.f32 %v1918, 0.0
        %v1931 = vmax.f32 %v1919, 0.0
        %v1932 = vmax.f32 %v1920, 0.0
        %v1933 = vmax.f32 %v1921, 0.0
        %v1934 = vmax.f32 %v1922, 0.0
        %v1935 = vmax.f32 %v1923, 0.0
        %v1936 = vmax.f32 %v1924, 0.0
        %v1937 = vmax.f32 %v1925, 0.0
        %v1938 = vmax.f32 %v1926, 0.0
        %v1939 = vmax.f32 %v1927, 0.0
        %v1940 = vmax.f32 %v1928, 0.0
        %v1941 = vpack.c.bf16 %v1930, %v1929
        %v1942 = vpack.c.bf16 %v1932, %v1931
        %v1943 = vpack.c.bf16 %v1934, %v1933
        %v1944 = vpack.c.bf16 %v1936, %v1935
        %v1945 = vpack.c.bf16 %v1938, %v1937
        %v1946 = vpack.c.bf16 %v1940, %v1939
        %v1953 = vunpack.c.l.b16 %v1941
        %v1954 = vunpack.c.h.b16 %v1941
        %v1955 = vunpack.c.l.b16 %v1942
        %v1956 = vunpack.c.h.b16 %v1942
        %v1957 = vunpack.c.l.b16 %v1943
        %v1958 = vunpack.c.h.b16 %v1943
        %v1959 = vunpack.c.l.b16 %v1944
        %v1960 = vunpack.c.h.b16 %v1944
        %v1961 = vunpack.c.l.b16 %v1945
        %v1962 = vunpack.c.h.b16 %v1945
        %v1963 = vunpack.c.l.b16 %v1946
        %v1964 = vunpack.c.h.b16 %v1946
        %v1965 = vpack.c.b16 %v1953, %v1953
        %v1966 = vpack.c.b16 %v1954, %v1954
        %v1967 = vpack.c.b16 %v1955, %v1955
        %v1968 = vpack.c.b16 %v1956, %v1956
        %v1969 = vpack.c.b16 %v1957, %v1957
        %v1970 = vpack.c.b16 %v1958, %v1958
        %v1971 = vpack.c.b16 %v1959, %v1959
        %v1972 = vpack.c.b16 %v1960, %v1960
        %v1973 = vpack.c.b16 %v1961, %v1961
        %v1974 = vpack.c.b16 %v1962, %v1962
        %v1975 = vpack.c.b16 %v1963, %v1963
        %v1976 = vpack.c.b16 %v1964, %v1964
        %s1989 = scalar_lea.vmem %s336, 48 [#allocation13]
        %1990 = vst.msk [vmem:[%s1989] sm:$0xf] %vm1252, %v1965
        %1991 = vst.msk [vmem:[%s1989 + $0x4] sm:$0xf] %vm1252, %v1966
        %1992 = vst.msk [vmem:[%s1989 + $0x8] sm:$0xf] %vm1252, %v1967
        %1993 = vst.msk [vmem:[%s1989 + $0xc] sm:$0xf] %vm1252, %v1968
        %1994 = vst.msk [vmem:[%s1989 + $0x10] sm:$0xf] %vm1252, %v1969
        %1995 = vst.msk [vmem:[%s1989 + $0x14] sm:$0xf] %vm1252, %v1970
        %1996 = vst.msk [vmem:[%s1989 + $0x18] sm:$0xf] %vm1252, %v1971
        %1997 = vst.msk [vmem:[%s1989 + $0x1c] sm:$0xf] %vm1252, %v1972
        %1998 = vst.msk [vmem:[%s1989 + $0x20] sm:$0xf] %vm1252, %v1973
        %1999 = vst.msk [vmem:[%s1989 + $0x24] sm:$0xf] %vm1252, %v1974
        %2000 = vst.msk [vmem:[%s1989 + $0x28] sm:$0xf] %vm1252, %v1975
        %2001 = vst.msk [vmem:[%s1989 + $0x2c] sm:$0xf] %vm1252, %v1976
        %s2002 = scalar_lea.vmem [#allocation5], 32
        %v2003 = vld [vmem:[%s2002] sm:$0x7]
        %s2004 = scalar_lea.vmem [#allocation5], 36
        %v2005 = vld [vmem:[%s2004] sm:$0x7]
        %v2007 = vand.u32 %v2005, %v476
        %2009 = vmatprep.subr.bf16.mxu0 0
        %2010 = vmatpush1.bf16.msra.mxu0 %v2007
        %2011 = vmatprep.subr.bf16.mxu0 0
        %2012 = vmatpush1.bf16.msra.mxu0 0
        %2013 = vmatprep.subr.bf16.mxu0 0
        %2014 = vmatpush1.bf16.msra.mxu0 0
        %2015 = vmatprep.subr.bf16.mxu0 0
        %2016 = vmatpush1.bf16.msra.mxu0 0
        %2017 = vmatprep.subr.bf16.mxu0 0
        %2018 = vmatpush1.bf16.msra.mxu0 0
        %2019 = vmatprep.subr.bf16.mxu0 0
        %2020 = vmatpush1.bf16.msra.mxu0 0
        %2021 = vmatprep.subr.bf16.mxu0 0
        %2022 = vmatpush1.bf16.msra.mxu0 0
        %2023 = vmatprep.subr.bf16.mxu0 0
        %2024 = vmatpush1.bf16.msra.mxu0 0
        %2025 = vmatprep.subr.bf16.mxu0 0
        %2026 = vmatpush1.bf16.msra.mxu0 0
        %2027 = vmatprep.subr.bf16.mxu0 0
        %2028 = vmatpush1.bf16.msra.mxu0 0
        %2029 = vmatprep.subr.bf16.mxu0 0
        %2030 = vmatpush1.bf16.msra.mxu0 0
        %2031 = vmatprep.subr.bf16.mxu0 0
        %2032 = vmatpush1.bf16.msra.mxu0 0
        %2033 = vmatprep.subr.bf16.mxu0 0
        %2034 = vmatpush1.bf16.msra.mxu0 0
        %2035 = vmatprep.subr.bf16.mxu0 0
        %2036 = vmatpush1.bf16.msra.mxu0 0
        %2037 = vmatprep.subr.bf16.mxu0 0
        %2038 = vmatpush1.bf16.msra.mxu0 0
        %2039 = vmatprep.subr.bf16.mxu0 0
        %2040 = vmatpush1.bf16.msra.mxu0 0
        %2041 = vmatprep.mubr.bf16.mxu0 0
        %2042 = vmatmul.mubr.bf16.gmra.mrb[0].mxu0 %v837
        %v2043 = vpop.f32.mrb[0].mxu0
        %v2044 = vadd.f32 0.0, %v2043
        %v2045 = vpop.f32.mrb[0].mxu0
        %v2046 = vpop.f32.mrb[0].mxu0
        %v2047 = vadd.f32 0.0, %v2046
        %v2048 = vpop.f32.mrb[0].mxu0
        %2049 = vmatprep.mubr.bf16.mxu0 0
        %2050 = vmatmul.mubr.bf16.gmra.mrb[0].mxu0 %v840
        %v2051 = vpop.f32.mrb[0].mxu0
        %v2052 = vadd.f32 0.0, %v2051
        %v2053 = vpop.f32.mrb[0].mxu0
        %v2054 = vpop.f32.mrb[0].mxu0
        %v2055 = vadd.f32 0.0, %v2054
        %v2056 = vpop.f32.mrb[0].mxu0
        %2057 = vmatprep.mubr.bf16.mxu0 0
        %2058 = vmatmul.mubr.bf16.gmra.mrb[0].mxu0 %v843
        %v2059 = vpop.f32.mrb[0].mxu0
        %v2060 = vadd.f32 0.0, %v2059
        %v2061 = vpop.f32.mrb[0].mxu0
        %v2062 = vpop.f32.mrb[0].mxu0
        %v2063 = vadd.f32 0.0, %v2062
        %v2064 = vpop.f32.mrb[0].mxu0
        %2065 = vmatprep.mubr.bf16.mxu0 0
        %2066 = vmatmul.mubr.bf16.gmra.mrb[0].mxu0 %v846
        %v2067 = vpop.f32.mrb[0].mxu0
        %v2068 = vadd.f32 0.0, %v2067
        %v2069 = vpop.f32.mrb[0].mxu0
        %v2070 = vpop.f32.mrb[0].mxu0
        %v2071 = vadd.f32 0.0, %v2070
        %v2072 = vpop.f32.mrb[0].mxu0
        %2073 = vmatprep.mubr.bf16.mxu0 0
        %2074 = vmatmul.mubr.bf16.gmra.mrb[0].mxu0 %v849
        %v2075 = vpop.f32.mrb[0].mxu0
        %v2076 = vadd.f32 0.0, %v2075
        %v2077 = vpop.f32.mrb[0].mxu0
        %v2078 = vpop.f32.mrb[0].mxu0
        %v2079 = vadd.f32 0.0, %v2078
        %v2080 = vpop.f32.mrb[0].mxu0
        %2081 = vmatprep.mubr.bf16.mxu0 0
        %2082 = vmatmul.mubr.bf16.gmra.mrb[0].mxu0 %v852
        %v2083 = vpop.f32.mrb[0].mxu0
        %v2084 = vadd.f32 0.0, %v2083
        %v2085 = vpop.f32.mrb[0].mxu0
        %v2086 = vpop.f32.mrb[0].mxu0
        %v2087 = vadd.f32 0.0, %v2086
        %v2088 = vpop.f32.mrb[0].mxu0
        %2089 = vdwg.mxu0
        %v2091 = vand.u32 %v2003, %v476
        %2093 = vmatprep.subr.bf16.mxu0 0
        %2094 = vmatpush1.bf16.msra.mxu0 %v2091
        %2095 = vmatprep.subr.bf16.mxu0 0
        %2096 = vmatpush1.bf16.msra.mxu0 0
        %2097 = vmatprep.subr.bf16.mxu0 0
        %2098 = vmatpush1.bf16.msra.mxu0 0
        %2099 = vmatprep.subr.bf16.mxu0 0
        %2100 = vmatpush1.bf16.msra.mxu0 0
        %2101 = vmatprep.subr.bf16.mxu0 0
        %2102 = vmatpush1.bf16.msra.mxu0 0
        %2103 = vmatprep.subr.bf16.mxu0 0
        %2104 = vmatpush1.bf16.msra.mxu0 0
        %2105 = vmatprep.subr.bf16.mxu0 0
        %2106 = vmatpush1.bf16.msra.mxu0 0
        %2107 = vmatprep.subr.bf16.mxu0 0
        %2108 = vmatpush1.bf16.msra.mxu0 0
        %2109 = vmatprep.subr.bf16.mxu0 0
        %2110 = vmatpush1.bf16.msra.mxu0 0
        %2111 = vmatprep.subr.bf16.mxu0 0
        %2112 = vmatpush1.bf16.msra.mxu0 0
        %2113 = vmatprep.subr.bf16.mxu0 0
        %2114 = vmatpush1.bf16.msra.mxu0 0
        %2115 = vmatprep.subr.bf16.mxu0 0
        %2116 = vmatpush1.bf16.msra.mxu0 0
        %2117 = vmatprep.subr.bf16.mxu0 0
        %2118 = vmatpush1.bf16.msra.mxu0 0
        %2119 = vmatprep.subr.bf16.mxu0 0
        %2120 = vmatpush1.bf16.msra.mxu0 0
        %2121 = vmatprep.subr.bf16.mxu0 0
        %2122 = vmatpush1.bf16.msra.mxu0 0
        %2123 = vmatprep.subr.bf16.mxu0 0
        %2124 = vmatpush1.bf16.msra.mxu0 0
        %2125 = vmatprep.mubr.bf16.mxu0 0
        %2126 = vmatmul.mubr.bf16.gmra.mrb[0].mxu0 %v672
        %v2127 = vpop.f32.mrb[0].mxu0
        %v2128 = vadd.f32 %v2044, %v2127
        %v2129 = vpop.f32.mrb[0].mxu0
        %v2130 = vpop.f32.mrb[0].mxu0
        %v2131 = vadd.f32 %v2047, %v2130
        %v2132 = vpop.f32.mrb[0].mxu0
        %2133 = vmatprep.mubr.bf16.mxu0 0
        %2134 = vmatmul.mubr.bf16.gmra.mrb[0].mxu0 %v675
        %v2135 = vpop.f32.mrb[0].mxu0
        %v2136 = vadd.f32 %v2052, %v2135
        %v2137 = vpop.f32.mrb[0].mxu0
        %v2138 = vpop.f32.mrb[0].mxu0
        %v2139 = vadd.f32 %v2055, %v2138
        %v2140 = vpop.f32.mrb[0].mxu0
        %2141 = vmatprep.mubr.bf16.mxu0 0
        %2142 = vmatmul.mubr.bf16.gmra.mrb[0].mxu0 %v678
        %v2143 = vpop.f32.mrb[0].mxu0
        %v2144 = vadd.f32 %v2060, %v2143
        %v2145 = vpop.f32.mrb[0].mxu0
        %v2146 = vpop.f32.mrb[0].mxu0
        %v2147 = vadd.f32 %v2063, %v2146
        %v2148 = vpop.f32.mrb[0].mxu0
        %2149 = vmatprep.mubr.bf16.mxu0 0
        %2150 = vmatmul.mubr.bf16.gmra.mrb[0].mxu0 %v681
        %v2151 = vpop.f32.mrb[0].mxu0
        %v2152 = vadd.f32 %v2068, %v2151
        %v2153 = vpop.f32.mrb[0].mxu0
        %v2154 = vpop.f32.mrb[0].mxu0
        %v2155 = vadd.f32 %v2071, %v2154
        %v2156 = vpop.f32.mrb[0].mxu0
        %2157 = vmatprep.mubr.bf16.mxu0 0
        %2158 = vmatmul.mubr.bf16.gmra.mrb[0].mxu0 %v684
        %v2159 = vpop.f32.mrb[0].mxu0
        %v2160 = vadd.f32 %v2076, %v2159
        %v2161 = vpop.f32.mrb[0].mxu0
        %v2162 = vpop.f32.mrb[0].mxu0
        %v2163 = vadd.f32 %v2079, %v2162
        %v2164 = vpop.f32.mrb[0].mxu0
        %2165 = vmatprep.mubr.bf16.mxu0 0
        %2166 = vmatmul.mubr.bf16.gmra.mrb[0].mxu0 %v687
        %v2167 = vpop.f32.mrb[0].mxu0
        %v2168 = vadd.f32 %v2084, %v2167
        %v2169 = vpop.f32.mrb[0].mxu0
        %v2170 = vpop.f32.mrb[0].mxu0
        %v2171 = vadd.f32 %v2087, %v2170
        %v2172 = vpop.f32.mrb[0].mxu0
        %2173 = vdwg.mxu0
        %s2174 = scalar_lea.vmem [#allocation5], 40
        %v2175 = vld [vmem:[%s2174] sm:$0x7]
        %v2179 = vunpack.c.l.b16 %v357
        %v2180 = vunpack.c.l.b16 %v358
        %v2181 = vunpack.c.l.b16 %v359
        %v2182 = vpack.c.b16 %v663, %v662
        %v2183 = vpack.c.b16 %v2179, %v664
        %v2184 = vpack.c.b16 %v2181, %v2180
        %v2186 = vsel %vm454, %v2182, 0
        %v2189 = vsel %vm454, %v2183, 0
        %v2192 = vsel %vm454, %v2184, 0
        %v2195 = vand.u32 %v2175, %v476
        %2197 = vmatprep.subr.bf16.mxu0 0
        %2198 = vmatpush1.bf16.msra.mxu0 %v2195
        %2199 = vmatprep.subr.bf16.mxu0 0
        %2200 = vmatpush1.bf16.msra.mxu0 0
        %2201 = vmatprep.subr.bf16.mxu0 0
        %2202 = vmatpush1.bf16.msra.mxu0 0
        %2203 = vmatprep.subr.bf16.mxu0 0
        %2204 = vmatpush1.bf16.msra.mxu0 0
        %2205 = vmatprep.subr.bf16.mxu0 0
        %2206 = vmatpush1.bf16.msra.mxu0 0
        %2207 = vmatprep.subr.bf16.mxu0 0
        %2208 = vmatpush1.bf16.msra.mxu0 0
        %2209 = vmatprep.subr.bf16.mxu0 0
        %2210 = vmatpush1.bf16.msra.mxu0 0
        %2211 = vmatprep.subr.bf16.mxu0 0
        %2212 = vmatpush1.bf16.msra.mxu0 0
        %2213 = vmatprep.subr.bf16.mxu0 0
        %2214 = vmatpush1.bf16.msra.mxu0 0
        %2215 = vmatprep.subr.bf16.mxu0 0
        %2216 = vmatpush1.bf16.msra.mxu0 0
        %2217 = vmatprep.subr.bf16.mxu0 0
        %2218 = vmatpush1.bf16.msra.mxu0 0
        %2219 = vmatprep.subr.bf16.mxu0 0
        %2220 = vmatpush1.bf16.msra.mxu0 0
        %2221 = vmatprep.subr.bf16.mxu0 0
        %2222 = vmatpush1.bf16.msra.mxu0 0
        %2223 = vmatprep.subr.bf16.mxu0 0
        %2224 = vmatpush1.bf16.msra.mxu0 0
        %2225 = vmatprep.subr.bf16.mxu0 0
        %2226 = vmatpush1.bf16.msra.mxu0 0
        %2227 = vmatprep.subr.bf16.mxu0 0
        %2228 = vmatpush1.bf16.msra.mxu0 0
        %2229 = vmatprep.mubr.bf16.mxu0 0
        %2230 = vmatmul.mubr.bf16.gmra.mrb[0].mxu0 %v567
        %v2231 = vpop.f32.mrb[0].mxu0
        %v2232 = vadd.f32 0.0, %v2231
        %v2233 = vpop.f32.mrb[0].mxu0
        %v2234 = vpop.f32.mrb[0].mxu0
        %v2235 = vadd.f32 0.0, %v2234
        %v2236 = vpop.f32.mrb[0].mxu0
        %2237 = vmatprep.mubr.bf16.mxu0 0
        %2238 = vmatmul.mubr.bf16.gmra.mrb[0].mxu0 %v569
        %v2239 = vpop.f32.mrb[0].mxu0
        %v2240 = vadd.f32 0.0, %v2239
        %v2241 = vpop.f32.mrb[0].mxu0
        %v2242 = vpop.f32.mrb[0].mxu0
        %v2243 = vadd.f32 0.0, %v2242
        %v2244 = vpop.f32.mrb[0].mxu0
        %2245 = vmatprep.mubr.bf16.mxu0 0
        %2246 = vmatmul.mubr.bf16.gmra.mrb[0].mxu0 %v571
        %v2247 = vpop.f32.mrb[0].mxu0
        %v2248 = vadd.f32 0.0, %v2247
        %v2249 = vpop.f32.mrb[0].mxu0
        %v2250 = vpop.f32.mrb[0].mxu0
        %v2251 = vadd.f32 0.0, %v2250
        %v2252 = vpop.f32.mrb[0].mxu0
        %2253 = vmatprep.mubr.bf16.mxu0 0
        %2254 = vmatmul.mubr.bf16.gmra.mrb[0].mxu0 %v2186
        %v2255 = vpop.f32.mrb[0].mxu0
        %v2256 = vadd.f32 0.0, %v2255
        %v2257 = vpop.f32.mrb[0].mxu0
        %v2258 = vpop.f32.mrb[0].mxu0
        %v2259 = vadd.f32 0.0, %v2258
        %v2260 = vpop.f32.mrb[0].mxu0
        %2261 = vmatprep.mubr.bf16.mxu0 0
        %2262 = vmatmul.mubr.bf16.gmra.mrb[0].mxu0 %v2189
        %v2263 = vpop.f32.mrb[0].mxu0
        %v2264 = vadd.f32 0.0, %v2263
        %v2265 = vpop.f32.mrb[0].mxu0
        %v2266 = vpop.f32.mrb[0].mxu0
        %v2267 = vadd.f32 0.0, %v2266
        %v2268 = vpop.f32.mrb[0].mxu0
        %2269 = vmatprep.mubr.bf16.mxu0 0
        %2270 = vmatmul.mubr.bf16.gmra.mrb[0].mxu0 %v2192
        %v2271 = vpop.f32.mrb[0].mxu0
        %v2272 = vadd.f32 0.0, %v2271
        %v2273 = vpop.f32.mrb[0].mxu0
        %v2274 = vpop.f32.mrb[0].mxu0
        %v2275 = vadd.f32 0.0, %v2274
        %v2276 = vpop.f32.mrb[0].mxu0
        %2277 = vdwg.mxu0
        %v2278 = vadd.f32 %v2128, %v2232
        %v2279 = vadd.f32 %v2131, %v2235
        %v2280 = vadd.f32 %v2136, %v2240
        %v2281 = vadd.f32 %v2139, %v2243
        %v2282 = vadd.f32 %v2144, %v2248
        %v2283 = vadd.f32 %v2147, %v2251
        %v2284 = vadd.f32 %v2152, %v2256
        %v2285 = vadd.f32 %v2155, %v2259
        %v2286 = vadd.f32 %v2160, %v2264
        %v2287 = vadd.f32 %v2163, %v2267
        %v2288 = vadd.f32 %v2168, %v2272
        %v2289 = vadd.f32 %v2171, %v2275
        %s2290 = scalar_lea.vmem [#allocation5], 44
        %v2291 = vld [vmem:[%s2290] sm:$0x7]
        %v2293 = vunpack.c.l.b16 %v360
        %v2294 = vpack.c.b16 %v2293, %v2293
        %v2295 = vshll.u32 %v2182, 16
        %v2297 = vrot.slane %v2295, 1
        %v2298 = vsel %vm401, %v448, %v2297
        %v2299 = vshrl.u32 %v2182, 16
        %v2301 = vor.u32 %v2299, %v2297
        %v2302 = vshll.u32 %v2183, 16
        %v2304 = vrot.slane %v2302, 1
        %v2305 = vsel %vm401, %v2301, %v2304
        %v2306 = vshrl.u32 %v2183, 16
        %v2308 = vor.u32 %v2306, %v2304
        %v2309 = vshll.u32 %v2184, 16
        %v2311 = vrot.slane %v2309, 1
        %v2312 = vsel %vm401, %v2308, %v2311
        %v2313 = vshrl.u32 %v2184, 16
        %v2315 = vor.u32 %v2313, %v2311
        %v2317 = vshll.u32 %v2294, 16
        %v2319 = vrot.slane %v2317, 1
        %v2320 = vsel %vm401, %v2315, %v2319
        %v2322 = vsel %vm454, %v2298, 0
        %v2325 = vsel %vm454, %v2305, 0
        %v2328 = vsel %vm454, %v2312, 0
        %v2331 = vsel %vm454, %v2320, 0
        %v2334 = vand.u32 %v2291, %v476
        %2336 = vmatprep.subr.bf16.mxu0 0
        %2337 = vmatpush1.bf16.msra.mxu0 %v2334
        %2338 = vmatprep.subr.bf16.mxu0 0
        %2339 = vmatpush1.bf16.msra.mxu0 0
        %2340 = vmatprep.subr.bf16.mxu0 0
        %2341 = vmatpush1.bf16.msra.mxu0 0
        %2342 = vmatprep.subr.bf16.mxu0 0
        %2343 = vmatpush1.bf16.msra.mxu0 0
        %2344 = vmatprep.subr.bf16.mxu0 0
        %2345 = vmatpush1.bf16.msra.mxu0 0
        %2346 = vmatprep.subr.bf16.mxu0 0
        %2347 = vmatpush1.bf16.msra.mxu0 0
        %2348 = vmatprep.subr.bf16.mxu0 0
        %2349 = vmatpush1.bf16.msra.mxu0 0
        %2350 = vmatprep.subr.bf16.mxu0 0
        %2351 = vmatpush1.bf16.msra.mxu0 0
        %2352 = vmatprep.subr.bf16.mxu0 0
        %2353 = vmatpush1.bf16.msra.mxu0 0
        %2354 = vmatprep.subr.bf16.mxu0 0
        %2355 = vmatpush1.bf16.msra.mxu0 0
        %2356 = vmatprep.subr.bf16.mxu0 0
        %2357 = vmatpush1.bf16.msra.mxu0 0
        %2358 = vmatprep.subr.bf16.mxu0 0
        %2359 = vmatpush1.bf16.msra.mxu0 0
        %2360 = vmatprep.subr.bf16.mxu0 0
        %2361 = vmatpush1.bf16.msra.mxu0 0
        %2362 = vmatprep.subr.bf16.mxu0 0
        %2363 = vmatpush1.bf16.msra.mxu0 0
        %2364 = vmatprep.subr.bf16.mxu0 0
        %2365 = vmatpush1.bf16.msra.mxu0 0
        %2366 = vmatprep.subr.bf16.mxu0 0
        %2367 = vmatpush1.bf16.msra.mxu0 0
        %2368 = vmatprep.mubr.bf16.mxu0 0
        %2369 = vmatmul.mubr.bf16.gmra.mrb[0].mxu0 %v465
        %v2370 = vpop.f32.mrb[0].mxu0
        %v2371 = vadd.f32 0.0, %v2370
        %v2372 = vpop.f32.mrb[0].mxu0
        %v2373 = vpop.f32.mrb[0].mxu0
        %v2374 = vadd.f32 0.0, %v2373
        %v2375 = vpop.f32.mrb[0].mxu0
        %2376 = vmatprep.mubr.bf16.mxu0 0
        %2377 = vmatmul.mubr.bf16.gmra.mrb[0].mxu0 %v468
        %v2378 = vpop.f32.mrb[0].mxu0
        %v2379 = vadd.f32 0.0, %v2378
        %v2380 = vpop.f32.mrb[0].mxu0
        %v2381 = vpop.f32.mrb[0].mxu0
        %v2382 = vadd.f32 0.0, %v2381
        %v2383 = vpop.f32.mrb[0].mxu0
        %2384 = vmatprep.mubr.bf16.mxu0 0
        %2385 = vmatmul.mubr.bf16.gmra.mrb[0].mxu0 %v2322
        %v2386 = vpop.f32.mrb[0].mxu0
        %v2387 = vadd.f32 0.0, %v2386
        %v2388 = vpop.f32.mrb[0].mxu0
        %v2389 = vpop.f32.mrb[0].mxu0
        %v2390 = vadd.f32 0.0, %v2389
        %v2391 = vpop.f32.mrb[0].mxu0
        %2392 = vmatprep.mubr.bf16.mxu0 0
        %2393 = vmatmul.mubr.bf16.gmra.mrb[0].mxu0 %v2325
        %v2394 = vpop.f32.mrb[0].mxu0
        %v2395 = vadd.f32 0.0, %v2394
        %v2396 = vpop.f32.mrb[0].mxu0
        %v2397 = vpop.f32.mrb[0].mxu0
        %v2398 = vadd.f32 0.0, %v2397
        %v2399 = vpop.f32.mrb[0].mxu0
        %2400 = vmatprep.mubr.bf16.mxu0 0
        %2401 = vmatmul.mubr.bf16.gmra.mrb[0].mxu0 %v2328
        %v2402 = vpop.f32.mrb[0].mxu0
        %v2403 = vadd.f32 0.0, %v2402
        %v2404 = vpop.f32.mrb[0].mxu0
        %v2405 = vpop.f32.mrb[0].mxu0
        %v2406 = vadd.f32 0.0, %v2405
        %v2407 = vpop.f32.mrb[0].mxu0
        %2408 = vmatprep.mubr.bf16.mxu0 0
        %2409 = vmatmul.mubr.bf16.gmra.mrb[0].mxu0 %v2331
        %v2410 = vpop.f32.mrb[0].mxu0
        %v2411 = vadd.f32 0.0, %v2410
        %v2412 = vpop.f32.mrb[0].mxu0
        %v2413 = vpop.f32.mrb[0].mxu0
        %v2414 = vadd.f32 0.0, %v2413
        %v2415 = vpop.f32.mrb[0].mxu0
        %2416 = vdwg.mxu0
        %v2417 = vadd.f32 %v2278, %v2371
        %v2418 = vadd.f32 %v2279, %v2374
        %v2419 = vadd.f32 %v2280, %v2379
        %v2420 = vadd.f32 %v2281, %v2382
        %v2421 = vadd.f32 %v2282, %v2387
        %v2422 = vadd.f32 %v2283, %v2390
        %v2423 = vadd.f32 %v2284, %v2395
        %v2424 = vadd.f32 %v2285, %v2398
        %v2425 = vadd.f32 %v2286, %v2403
        %v2426 = vadd.f32 %v2287, %v2406
        %v2427 = vadd.f32 %v2288, %v2411
        %v2428 = vadd.f32 %v2289, %v2414
        %v2429 = vadd.f32 %v2417, %v954
        %v2430 = vadd.f32 %v2418, %v954
        %v2431 = vadd.f32 %v2419, %v954
        %v2432 = vadd.f32 %v2420, %v954
        %v2433 = vadd.f32 %v2421, %v954
        %v2434 = vadd.f32 %v2422, %v954
        %v2435 = vadd.f32 %v2423, %v954
        %v2436 = vadd.f32 %v2424, %v954
        %v2437 = vadd.f32 %v2425, %v954
        %v2438 = vadd.f32 %v2426, %v954
        %v2439 = vadd.f32 %v2427, %v954
        %v2440 = vadd.f32 %v2428, %v954
        %v2441 = vmax.f32 %v2429, 0.0
        %v2442 = vmax.f32 %v2430, 0.0
        %v2443 = vmax.f32 %v2431, 0.0
        %v2444 = vmax.f32 %v2432, 0.0
        %v2445 = vmax.f32 %v2433, 0.0
        %v2446 = vmax.f32 %v2434, 0.0
        %v2447 = vmax.f32 %v2435, 0.0
        %v2448 = vmax.f32 %v2436, 0.0
        %v2449 = vmax.f32 %v2437, 0.0
        %v2450 = vmax.f32 %v2438, 0.0
        %v2451 = vmax.f32 %v2439, 0.0
        %v2452 = vmax.f32 %v2440, 0.0
        %v2453 = vpack.c.bf16 %v2442, %v2441
        %v2454 = vpack.c.bf16 %v2444, %v2443
        %v2455 = vpack.c.bf16 %v2446, %v2445
        %v2456 = vpack.c.bf16 %v2448, %v2447
        %v2457 = vpack.c.bf16 %v2450, %v2449
        %v2458 = vpack.c.bf16 %v2452, %v2451
        %s2459 = scalar_lea.vmem [#allocation7], 8
        %v2460 = vld [vmem:[%s2459] sm:$0x7]
        %v2462 = vand.u32 %v2460, %v476
        %2464 = vmatprep.subr.bf16.mxu0 0
        %2465 = vmatpush1.bf16.msra.mxu0 %v2462
        %2466 = vmatprep.subr.bf16.mxu0 0
        %2467 = vmatpush1.bf16.msra.mxu0 0
        %2468 = vmatprep.subr.bf16.mxu0 0
        %2469 = vmatpush1.bf16.msra.mxu0 0
        %2470 = vmatprep.subr.bf16.mxu0 0
        %2471 = vmatpush1.bf16.msra.mxu0 0
        %2472 = vmatprep.subr.bf16.mxu0 0
        %2473 = vmatpush1.bf16.msra.mxu0 0
        %2474 = vmatprep.subr.bf16.mxu0 0
        %2475 = vmatpush1.bf16.msra.mxu0 0
        %2476 = vmatprep.subr.bf16.mxu0 0
        %2477 = vmatpush1.bf16.msra.mxu0 0
        %2478 = vmatprep.subr.bf16.mxu0 0
        %2479 = vmatpush1.bf16.msra.mxu0 0
        %2480 = vmatprep.subr.bf16.mxu0 0
        %2481 = vmatpush1.bf16.msra.mxu0 0
        %2482 = vmatprep.subr.bf16.mxu0 0
        %2483 = vmatpush1.bf16.msra.mxu0 0
        %2484 = vmatprep.subr.bf16.mxu0 0
        %2485 = vmatpush1.bf16.msra.mxu0 0
        %2486 = vmatprep.subr.bf16.mxu0 0
        %2487 = vmatpush1.bf16.msra.mxu0 0
        %2488 = vmatprep.subr.bf16.mxu0 0
        %2489 = vmatpush1.bf16.msra.mxu0 0
        %2490 = vmatprep.subr.bf16.mxu0 0
        %2491 = vmatpush1.bf16.msra.mxu0 0
        %2492 = vmatprep.subr.bf16.mxu0 0
        %2493 = vmatpush1.bf16.msra.mxu0 0
        %2494 = vmatprep.subr.bf16.mxu0 0
        %2495 = vmatpush1.bf16.msra.mxu0 0
        %2496 = vmatprep.mubr.bf16.mxu0 0
        %2497 = vmatmul.mubr.bf16.gmra.mrb[0].mxu0 %v837
        %v2498 = vpop.f32.mrb[0].mxu0
        %v2499 = vadd.f32 0.0, %v2498
        %v2500 = vpop.f32.mrb[0].mxu0
        %v2501 = vpop.f32.mrb[0].mxu0
        %v2502 = vadd.f32 0.0, %v2501
        %v2503 = vpop.f32.mrb[0].mxu0
        %2504 = vmatprep.mubr.bf16.mxu0 0
        %2505 = vmatmul.mubr.bf16.gmra.mrb[0].mxu0 %v840
        %v2506 = vpop.f32.mrb[0].mxu0
        %v2507 = vadd.f32 0.0, %v2506
        %v2508 = vpop.f32.mrb[0].mxu0
        %v2509 = vpop.f32.mrb[0].mxu0
        %v2510 = vadd.f32 0.0, %v2509
        %v2511 = vpop.f32.mrb[0].mxu0
        %2512 = vmatprep.mubr.bf16.mxu0 0
        %2513 = vmatmul.mubr.bf16.gmra.mrb[0].mxu0 %v843
        %v2514 = vpop.f32.mrb[0].mxu0
        %v2515 = vadd.f32 0.0, %v2514
        %v2516 = vpop.f32.mrb[0].mxu0
        %v2517 = vpop.f32.mrb[0].mxu0
        %v2518 = vadd.f32 0.0, %v2517
        %v2519 = vpop.f32.mrb[0].mxu0
        %2520 = vmatprep.mubr.bf16.mxu0 0
        %2521 = vmatmul.mubr.bf16.gmra.mrb[0].mxu0 %v846
        %v2522 = vpop.f32.mrb[0].mxu0
        %v2523 = vadd.f32 0.0, %v2522
        %v2524 = vpop.f32.mrb[0].mxu0
        %v2525 = vpop.f32.mrb[0].mxu0
        %v2526 = vadd.f32 0.0, %v2525
        %v2527 = vpop.f32.mrb[0].mxu0
        %2528 = vmatprep.mubr.bf16.mxu0 0
        %2529 = vmatmul.mubr.bf16.gmra.mrb[0].mxu0 %v849
        %v2530 = vpop.f32.mrb[0].mxu0
        %v2531 = vadd.f32 0.0, %v2530
        %v2532 = vpop.f32.mrb[0].mxu0
        %v2533 = vpop.f32.mrb[0].mxu0
        %v2534 = vadd.f32 0.0, %v2533
        %v2535 = vpop.f32.mrb[0].mxu0
        %2536 = vmatprep.mubr.bf16.mxu0 0
        %2537 = vmatmul.mubr.bf16.gmra.mrb[0].mxu0 %v852
        %v2538 = vpop.f32.mrb[0].mxu0
        %v2539 = vadd.f32 0.0, %v2538
        %v2540 = vpop.f32.mrb[0].mxu0
        %v2541 = vpop.f32.mrb[0].mxu0
        %v2542 = vadd.f32 0.0, %v2541
        %v2543 = vpop.f32.mrb[0].mxu0
        %2544 = vdwg.mxu0
        %v2546 = vsel %vm1077, %v2453, 0
        %v2549 = vsel %vm1077, %v2454, 0
        %v2552 = vsel %vm1077, %v2455, 0
        %v2555 = vsel %vm1077, %v2456, 0
        %v2558 = vsel %vm1077, %v2457, 0
        %v2561 = vsel %vm1077, %v2458, 0
        %2563 = vmatprep.subr.bf16.mxu0 0
        %2564 = vmatpush1.bf16.msra.mxu0 %v1097
        %2565 = vmatprep.subr.bf16.mxu0 0
        %2566 = vmatpush1.bf16.msra.mxu0 0
        %2567 = vmatprep.subr.bf16.mxu0 0
        %2568 = vmatpush1.bf16.msra.mxu0 0
        %2569 = vmatprep.subr.bf16.mxu0 0
        %2570 = vmatpush1.bf16.msra.mxu0 0
        %2571 = vmatprep.subr.bf16.mxu0 0
        %2572 = vmatpush1.bf16.msra.mxu0 0
        %2573 = vmatprep.subr.bf16.mxu0 0
        %2574 = vmatpush1.bf16.msra.mxu0 0
        %2575 = vmatprep.subr.bf16.mxu0 0
        %2576 = vmatpush1.bf16.msra.mxu0 0
        %2577 = vmatprep.subr.bf16.mxu0 0
        %2578 = vmatpush1.bf16.msra.mxu0 0
        %2579 = vmatprep.subr.bf16.mxu0 0
        %2580 = vmatpush1.bf16.msra.mxu0 0
        %2581 = vmatprep.subr.bf16.mxu0 0
        %2582 = vmatpush1.bf16.msra.mxu0 0
        %2583 = vmatprep.subr.bf16.mxu0 0
        %2584 = vmatpush1.bf16.msra.mxu0 0
        %2585 = vmatprep.subr.bf16.mxu0 0
        %2586 = vmatpush1.bf16.msra.mxu0 0
        %2587 = vmatprep.subr.bf16.mxu0 0
        %2588 = vmatpush1.bf16.msra.mxu0 0
        %2589 = vmatprep.subr.bf16.mxu0 0
        %2590 = vmatpush1.bf16.msra.mxu0 0
        %2591 = vmatprep.subr.bf16.mxu0 0
        %2592 = vmatpush1.bf16.msra.mxu0 0
        %2593 = vmatprep.subr.bf16.mxu0 0
        %2594 = vmatpush1.bf16.msra.mxu0 0
        %2595 = vmatprep.mubr.bf16.mxu0 0
        %2596 = vmatmul.mubr.bf16.gmra.mrb[0].mxu0 %v2546
        %v2597 = vpop.f32.mrb[0].mxu0
        %v2598 = vadd.f32 %v1075, %v2597
        %v2599 = vpop.f32.mrb[0].mxu0
        %v2600 = vpop.f32.mrb[0].mxu0
        %v2601 = vadd.f32 %v1075, %v2600
        %v2602 = vpop.f32.mrb[0].mxu0
        %2603 = vmatprep.mubr.bf16.mxu0 0
        %2604 = vmatmul.mubr.bf16.gmra.mrb[0].mxu0 %v2549
        %v2605 = vpop.f32.mrb[0].mxu0
        %v2606 = vadd.f32 %v1075, %v2605
        %v2607 = vpop.f32.mrb[0].mxu0
        %v2608 = vpop.f32.mrb[0].mxu0
        %v2609 = vadd.f32 %v1075, %v2608
        %v2610 = vpop.f32.mrb[0].mxu0
        %2611 = vmatprep.mubr.bf16.mxu0 0
        %2612 = vmatmul.mubr.bf16.gmra.mrb[0].mxu0 %v2552
        %v2613 = vpop.f32.mrb[0].mxu0
        %v2614 = vadd.f32 %v1075, %v2613
        %v2615 = vpop.f32.mrb[0].mxu0
        %v2616 = vpop.f32.mrb[0].mxu0
        %v2617 = vadd.f32 %v1075, %v2616
        %v2618 = vpop.f32.mrb[0].mxu0
        %2619 = vmatprep.mubr.bf16.mxu0 0
        %2620 = vmatmul.mubr.bf16.gmra.mrb[0].mxu0 %v2555
        %v2621 = vpop.f32.mrb[0].mxu0
        %v2622 = vadd.f32 %v1075, %v2621
        %v2623 = vpop.f32.mrb[0].mxu0
        %v2624 = vpop.f32.mrb[0].mxu0
        %v2625 = vadd.f32 %v1075, %v2624
        %v2626 = vpop.f32.mrb[0].mxu0
        %2627 = vmatprep.mubr.bf16.mxu0 0
        %2628 = vmatmul.mubr.bf16.gmra.mrb[0].mxu0 %v2558
        %v2629 = vpop.f32.mrb[0].mxu0
        %v2630 = vadd.f32 %v1075, %v2629
        %v2631 = vpop.f32.mrb[0].mxu0
        %v2632 = vpop.f32.mrb[0].mxu0
        %v2633 = vadd.f32 %v1075, %v2632
        %v2634 = vpop.f32.mrb[0].mxu0
        %2635 = vmatprep.mubr.bf16.mxu0 0
        %2636 = vmatmul.mubr.bf16.gmra.mrb[0].mxu0 %v2561
        %v2637 = vpop.f32.mrb[0].mxu0
        %v2638 = vadd.f32 %v1075, %v2637
        %v2639 = vpop.f32.mrb[0].mxu0
        %v2640 = vpop.f32.mrb[0].mxu0
        %v2641 = vadd.f32 %v1075, %v2640
        %v2642 = vpop.f32.mrb[0].mxu0
        %2643 = vdwg.mxu0
        %v2644 = vadd.f32 %v2598, %v2499
        %v2645 = vadd.f32 %v2601, %v2502
        %v2646 = vadd.f32 %v2606, %v2507
        %v2647 = vadd.f32 %v2609, %v2510
        %v2648 = vadd.f32 %v2614, %v2515
        %v2649 = vadd.f32 %v2617, %v2518
        %v2650 = vadd.f32 %v2622, %v2523
        %v2651 = vadd.f32 %v2625, %v2526
        %v2652 = vadd.f32 %v2630, %v2531
        %v2653 = vadd.f32 %v2633, %v2534
        %v2654 = vadd.f32 %v2638, %v2539
        %v2655 = vadd.f32 %v2641, %v2542
        %v2656 = vmax.f32 %v2644, 0.0
        %v2657 = vmax.f32 %v2645, 0.0
        %v2658 = vmax.f32 %v2646, 0.0
        %v2659 = vmax.f32 %v2647, 0.0
        %v2660 = vmax.f32 %v2648, 0.0
        %v2661 = vmax.f32 %v2649, 0.0
        %v2662 = vmax.f32 %v2650, 0.0
        %v2663 = vmax.f32 %v2651, 0.0
        %v2664 = vmax.f32 %v2652, 0.0
        %v2665 = vmax.f32 %v2653, 0.0
        %v2666 = vmax.f32 %v2654, 0.0
        %v2667 = vmax.f32 %v2655, 0.0
        %v2668 = vpack.c.bf16 %v2657, %v2656
        %v2669 = vpack.c.bf16 %v2659, %v2658
        %v2670 = vpack.c.bf16 %v2661, %v2660
        %v2671 = vpack.c.bf16 %v2663, %v2662
        %v2672 = vpack.c.bf16 %v2665, %v2664
        %v2673 = vpack.c.bf16 %v2667, %v2666
        %v2680 = vunpack.c.l.b16 %v2668
        %v2681 = vunpack.c.h.b16 %v2668
        %v2682 = vunpack.c.l.b16 %v2669
        %v2683 = vunpack.c.h.b16 %v2669
        %v2684 = vunpack.c.l.b16 %v2670
        %v2685 = vunpack.c.h.b16 %v2670
        %v2686 = vunpack.c.l.b16 %v2671
        %v2687 = vunpack.c.h.b16 %v2671
        %v2688 = vunpack.c.l.b16 %v2672
        %v2689 = vunpack.c.h.b16 %v2672
        %v2690 = vunpack.c.l.b16 %v2673
        %v2691 = vunpack.c.h.b16 %v2673
        %v2692 = vpack.c.b16 %v2680, %v2680
        %v2693 = vpack.c.b16 %v2681, %v2681
        %v2694 = vpack.c.b16 %v2682, %v2682
        %v2695 = vpack.c.b16 %v2683, %v2683
        %v2696 = vpack.c.b16 %v2684, %v2684
        %v2697 = vpack.c.b16 %v2685, %v2685
        %v2698 = vpack.c.b16 %v2686, %v2686
        %v2699 = vpack.c.b16 %v2687, %v2687
        %v2700 = vpack.c.b16 %v2688, %v2688
        %v2701 = vpack.c.b16 %v2689, %v2689
        %v2702 = vpack.c.b16 %v2690, %v2690
        %v2703 = vpack.c.b16 %v2691, %v2691
        %s2716 = scalar_lea.vmem %s336, 96 [#allocation13]
        %2717 = vst.msk [vmem:[%s2716] sm:$0xf] %vm1252, %v2692
        %2718 = vst.msk [vmem:[%s2716 + $0x4] sm:$0xf] %vm1252, %v2693
        %2719 = vst.msk [vmem:[%s2716 + $0x8] sm:$0xf] %vm1252, %v2694
        %2720 = vst.msk [vmem:[%s2716 + $0xc] sm:$0xf] %vm1252, %v2695
        %2721 = vst.msk [vmem:[%s2716 + $0x10] sm:$0xf] %vm1252, %v2696
        %2722 = vst.msk [vmem:[%s2716 + $0x14] sm:$0xf] %vm1252, %v2697
        %2723 = vst.msk [vmem:[%s2716 + $0x18] sm:$0xf] %vm1252, %v2698
        %2724 = vst.msk [vmem:[%s2716 + $0x1c] sm:$0xf] %vm1252, %v2699
        %2725 = vst.msk [vmem:[%s2716 + $0x20] sm:$0xf] %vm1252, %v2700
        %2726 = vst.msk [vmem:[%s2716 + $0x24] sm:$0xf] %vm1252, %v2701
        %2727 = vst.msk [vmem:[%s2716 + $0x28] sm:$0xf] %vm1252, %v2702
        %2728 = vst.msk [vmem:[%s2716 + $0x2c] sm:$0xf] %vm1252, %v2703
        %s2729 = scalar_lea.vmem [#allocation5], 48
        %v2730 = vld [vmem:[%s2729] sm:$0x7]
        %s2731 = scalar_lea.vmem [#allocation5], 52
        %v2732 = vld [vmem:[%s2731] sm:$0x7]
        %v2734 = vand.u32 %v2732, %v476
        %2736 = vmatprep.subr.bf16.mxu0 0
        %2737 = vmatpush1.bf16.msra.mxu0 %v2734
        %2738 = vmatprep.subr.bf16.mxu0 0
        %2739 = vmatpush1.bf16.msra.mxu0 0
        %2740 = vmatprep.subr.bf16.mxu0 0
        %2741 = vmatpush1.bf16.msra.mxu0 0
        %2742 = vmatprep.subr.bf16.mxu0 0
        %2743 = vmatpush1.bf16.msra.mxu0 0
        %2744 = vmatprep.subr.bf16.mxu0 0
        %2745 = vmatpush1.bf16.msra.mxu0 0
        %2746 = vmatprep.subr.bf16.mxu0 0
        %2747 = vmatpush1.bf16.msra.mxu0 0
        %2748 = vmatprep.subr.bf16.mxu0 0
        %2749 = vmatpush1.bf16.msra.mxu0 0
        %2750 = vmatprep.subr.bf16.mxu0 0
        %2751 = vmatpush1.bf16.msra.mxu0 0
        %2752 = vmatprep.subr.bf16.mxu0 0
        %2753 = vmatpush1.bf16.msra.mxu0 0
        %2754 = vmatprep.subr.bf16.mxu0 0
        %2755 = vmatpush1.bf16.msra.mxu0 0
        %2756 = vmatprep.subr.bf16.mxu0 0
        %2757 = vmatpush1.bf16.msra.mxu0 0
        %2758 = vmatprep.subr.bf16.mxu0 0
        %2759 = vmatpush1.bf16.msra.mxu0 0
        %2760 = vmatprep.subr.bf16.mxu0 0
        %2761 = vmatpush1.bf16.msra.mxu0 0
        %2762 = vmatprep.subr.bf16.mxu0 0
        %2763 = vmatpush1.bf16.msra.mxu0 0
        %2764 = vmatprep.subr.bf16.mxu0 0
        %2765 = vmatpush1.bf16.msra.mxu0 0
        %2766 = vmatprep.subr.bf16.mxu0 0
        %2767 = vmatpush1.bf16.msra.mxu0 0
        %2768 = vmatprep.mubr.bf16.mxu0 0
        %2769 = vmatmul.mubr.bf16.gmra.mrb[0].mxu0 %v1589
        %v2770 = vpop.f32.mrb[0].mxu0
        %v2771 = vadd.f32 0.0, %v2770
        %v2772 = vpop.f32.mrb[0].mxu0
        %v2773 = vpop.f32.mrb[0].mxu0
        %v2774 = vadd.f32 0.0, %v2773
        %v2775 = vpop.f32.mrb[0].mxu0
        %2776 = vmatprep.mubr.bf16.mxu0 0
        %2777 = vmatmul.mubr.bf16.gmra.mrb[0].mxu0 %v1592
        %v2778 = vpop.f32.mrb[0].mxu0
        %v2779 = vadd.f32 0.0, %v2778
        %v2780 = vpop.f32.mrb[0].mxu0
        %v2781 = vpop.f32.mrb[0].mxu0
        %v2782 = vadd.f32 0.0, %v2781
        %v2783 = vpop.f32.mrb[0].mxu0
        %2784 = vmatprep.mubr.bf16.mxu0 0
        %2785 = vmatmul.mubr.bf16.gmra.mrb[0].mxu0 %v1595
        %v2786 = vpop.f32.mrb[0].mxu0
        %v2787 = vadd.f32 0.0, %v2786
        %v2788 = vpop.f32.mrb[0].mxu0
        %v2789 = vpop.f32.mrb[0].mxu0
        %v2790 = vadd.f32 0.0, %v2789
        %v2791 = vpop.f32.mrb[0].mxu0
        %2792 = vmatprep.mubr.bf16.mxu0 0
        %2793 = vmatmul.mubr.bf16.gmra.mrb[0].mxu0 %v1598
        %v2794 = vpop.f32.mrb[0].mxu0
        %v2795 = vadd.f32 0.0, %v2794
        %v2796 = vpop.f32.mrb[0].mxu0
        %v2797 = vpop.f32.mrb[0].mxu0
        %v2798 = vadd.f32 0.0, %v2797
        %v2799 = vpop.f32.mrb[0].mxu0
        %2800 = vmatprep.mubr.bf16.mxu0 0
        %2801 = vmatmul.mubr.bf16.gmra.mrb[0].mxu0 %v1601
        %v2802 = vpop.f32.mrb[0].mxu0
        %v2803 = vadd.f32 0.0, %v2802
        %v2804 = vpop.f32.mrb[0].mxu0
        %v2805 = vpop.f32.mrb[0].mxu0
        %v2806 = vadd.f32 0.0, %v2805
        %v2807 = vpop.f32.mrb[0].mxu0
        %2808 = vmatprep.mubr.bf16.mxu0 0
        %2809 = vmatmul.mubr.bf16.gmra.mrb[0].mxu0 %v1604
        %v2810 = vpop.f32.mrb[0].mxu0
        %v2811 = vadd.f32 0.0, %v2810
        %v2812 = vpop.f32.mrb[0].mxu0
        %v2813 = vpop.f32.mrb[0].mxu0
        %v2814 = vadd.f32 0.0, %v2813
        %v2815 = vpop.f32.mrb[0].mxu0
        %2816 = vdwg.mxu0
        %v2818 = vand.u32 %v2730, %v476
        %2820 = vmatprep.subr.bf16.mxu0 0
        %2821 = vmatpush1.bf16.msra.mxu0 %v2818
        %2822 = vmatprep.subr.bf16.mxu0 0
        %2823 = vmatpush1.bf16.msra.mxu0 0
        %2824 = vmatprep.subr.bf16.mxu0 0
        %2825 = vmatpush1.bf16.msra.mxu0 0
        %2826 = vmatprep.subr.bf16.mxu0 0
        %2827 = vmatpush1.bf16.msra.mxu0 0
        %2828 = vmatprep.subr.bf16.mxu0 0
        %2829 = vmatpush1.bf16.msra.mxu0 0
        %2830 = vmatprep.subr.bf16.mxu0 0
        %2831 = vmatpush1.bf16.msra.mxu0 0
        %2832 = vmatprep.subr.bf16.mxu0 0
        %2833 = vmatpush1.bf16.msra.mxu0 0
        %2834 = vmatprep.subr.bf16.mxu0 0
        %2835 = vmatpush1.bf16.msra.mxu0 0
        %2836 = vmatprep.subr.bf16.mxu0 0
        %2837 = vmatpush1.bf16.msra.mxu0 0
        %2838 = vmatprep.subr.bf16.mxu0 0
        %2839 = vmatpush1.bf16.msra.mxu0 0
        %2840 = vmatprep.subr.bf16.mxu0 0
        %2841 = vmatpush1.bf16.msra.mxu0 0
        %2842 = vmatprep.subr.bf16.mxu0 0
        %2843 = vmatpush1.bf16.msra.mxu0 0
        %2844 = vmatprep.subr.bf16.mxu0 0
        %2845 = vmatpush1.bf16.msra.mxu0 0
        %2846 = vmatprep.subr.bf16.mxu0 0
        %2847 = vmatpush1.bf16.msra.mxu0 0
        %2848 = vmatprep.subr.bf16.mxu0 0
        %2849 = vmatpush1.bf16.msra.mxu0 0
        %2850 = vmatprep.subr.bf16.mxu0 0
        %2851 = vmatpush1.bf16.msra.mxu0 0
        %2852 = vmatprep.mubr.bf16.mxu0 0
        %2853 = vmatmul.mubr.bf16.gmra.mrb[0].mxu0 %v837
        %v2854 = vpop.f32.mrb[0].mxu0
        %v2855 = vadd.f32 %v2771, %v2854
        %v2856 = vpop.f32.mrb[0].mxu0
        %v2857 = vpop.f32.mrb[0].mxu0
        %v2858 = vadd.f32 %v2774, %v2857
        %v2859 = vpop.f32.mrb[0].mxu0
        %2860 = vmatprep.mubr.bf16.mxu0 0
        %2861 = vmatmul.mubr.bf16.gmra.mrb[0].mxu0 %v840
        %v2862 = vpop.f32.mrb[0].mxu0
        %v2863 = vadd.f32 %v2779, %v2862
        %v2864 = vpop.f32.mrb[0].mxu0
        %v2865 = vpop.f32.mrb[0].mxu0
        %v2866 = vadd.f32 %v2782, %v2865
        %v2867 = vpop.f32.mrb[0].mxu0
        %2868 = vmatprep.mubr.bf16.mxu0 0
        %2869 = vmatmul.mubr.bf16.gmra.mrb[0].mxu0 %v843
        %v2870 = vpop.f32.mrb[0].mxu0
        %v2871 = vadd.f32 %v2787, %v2870
        %v2872 = vpop.f32.mrb[0].mxu0
        %v2873 = vpop.f32.mrb[0].mxu0
        %v2874 = vadd.f32 %v2790, %v2873
        %v2875 = vpop.f32.mrb[0].mxu0
        %2876 = vmatprep.mubr.bf16.mxu0 0
        %2877 = vmatmul.mubr.bf16.gmra.mrb[0].mxu0 %v846
        %v2878 = vpop.f32.mrb[0].mxu0
        %v2879 = vadd.f32 %v2795, %v2878
        %v2880 = vpop.f32.mrb[0].mxu0
        %v2881 = vpop.f32.mrb[0].mxu0
        %v2882 = vadd.f32 %v2798, %v2881
        %v2883 = vpop.f32.mrb[0].mxu0
        %2884 = vmatprep.mubr.bf16.mxu0 0
        %2885 = vmatmul.mubr.bf16.gmra.mrb[0].mxu0 %v849
        %v2886 = vpop.f32.mrb[0].mxu0
        %v2887 = vadd.f32 %v2803, %v2886
        %v2888 = vpop.f32.mrb[0].mxu0
        %v2889 = vpop.f32.mrb[0].mxu0
        %v2890 = vadd.f32 %v2806, %v2889
        %v2891 = vpop.f32.mrb[0].mxu0
        %2892 = vmatprep.mubr.bf16.mxu0 0
        %2893 = vmatmul.mubr.bf16.gmra.mrb[0].mxu0 %v852
        %v2894 = vpop.f32.mrb[0].mxu0
        %v2895 = vadd.f32 %v2811, %v2894
        %v2896 = vpop.f32.mrb[0].mxu0
        %v2897 = vpop.f32.mrb[0].mxu0
        %v2898 = vadd.f32 %v2814, %v2897
        %v2899 = vpop.f32.mrb[0].mxu0
        %2900 = vdwg.mxu0
        %s2901 = scalar_lea.vmem [#allocation5], 56
        %v2902 = vld [vmem:[%s2901] sm:$0x7]
        %v2904 = vand.u32 %v2902, %v476
        %2906 = vmatprep.subr.bf16.mxu0 0
        %2907 = vmatpush1.bf16.msra.mxu0 %v2904
        %2908 = vmatprep.subr.bf16.mxu0 0
        %2909 = vmatpush1.bf16.msra.mxu0 0
        %2910 = vmatprep.subr.bf16.mxu0 0
        %2911 = vmatpush1.bf16.msra.mxu0 0
        %2912 = vmatprep.subr.bf16.mxu0 0
        %2913 = vmatpush1.bf16.msra.mxu0 0
        %2914 = vmatprep.subr.bf16.mxu0 0
        %2915 = vmatpush1.bf16.msra.mxu0 0
        %2916 = vmatprep.subr.bf16.mxu0 0
        %2917 = vmatpush1.bf16.msra.mxu0 0
        %2918 = vmatprep.subr.bf16.mxu0 0
        %2919 = vmatpush1.bf16.msra.mxu0 0
        %2920 = vmatprep.subr.bf16.mxu0 0
        %2921 = vmatpush1.bf16.msra.mxu0 0
        %2922 = vmatprep.subr.bf16.mxu0 0
        %2923 = vmatpush1.bf16.msra.mxu0 0
        %2924 = vmatprep.subr.bf16.mxu0 0
        %2925 = vmatpush1.bf16.msra.mxu0 0
        %2926 = vmatprep.subr.bf16.mxu0 0
        %2927 = vmatpush1.bf16.msra.mxu0 0
        %2928 = vmatprep.subr.bf16.mxu0 0
        %2929 = vmatpush1.bf16.msra.mxu0 0
        %2930 = vmatprep.subr.bf16.mxu0 0
        %2931 = vmatpush1.bf16.msra.mxu0 0
        %2932 = vmatprep.subr.bf16.mxu0 0
        %2933 = vmatpush1.bf16.msra.mxu0 0
        %2934 = vmatprep.subr.bf16.mxu0 0
        %2935 = vmatpush1.bf16.msra.mxu0 0
        %2936 = vmatprep.subr.bf16.mxu0 0
        %2937 = vmatpush1.bf16.msra.mxu0 0
        %2938 = vmatprep.mubr.bf16.mxu0 0
        %2939 = vmatmul.mubr.bf16.gmra.mrb[0].mxu0 %v465
        %v2940 = vpop.f32.mrb[0].mxu0
        %v2941 = vadd.f32 0.0, %v2940
        %v2942 = vpop.f32.mrb[0].mxu0
        %v2943 = vpop.f32.mrb[0].mxu0
        %v2944 = vadd.f32 0.0, %v2943
        %v2945 = vpop.f32.mrb[0].mxu0
        %2946 = vmatprep.mubr.bf16.mxu0 0
        %2947 = vmatmul.mubr.bf16.gmra.mrb[0].mxu0 %v468
        %v2948 = vpop.f32.mrb[0].mxu0
        %v2949 = vadd.f32 0.0, %v2948
        %v2950 = vpop.f32.mrb[0].mxu0
        %v2951 = vpop.f32.mrb[0].mxu0
        %v2952 = vadd.f32 0.0, %v2951
        %v2953 = vpop.f32.mrb[0].mxu0
        %2954 = vmatprep.mubr.bf16.mxu0 0
        %2955 = vmatmul.mubr.bf16.gmra.mrb[0].mxu0 %v2322
        %v2956 = vpop.f32.mrb[0].mxu0
        %v2957 = vadd.f32 0.0, %v2956
        %v2958 = vpop.f32.mrb[0].mxu0
        %v2959 = vpop.f32.mrb[0].mxu0
        %v2960 = vadd.f32 0.0, %v2959
        %v2961 = vpop.f32.mrb[0].mxu0
        %2962 = vmatprep.mubr.bf16.mxu0 0
        %2963 = vmatmul.mubr.bf16.gmra.mrb[0].mxu0 %v2325
        %v2964 = vpop.f32.mrb[0].mxu0
        %v2965 = vadd.f32 0.0, %v2964
        %v2966 = vpop.f32.mrb[0].mxu0
        %v2967 = vpop.f32.mrb[0].mxu0
        %v2968 = vadd.f32 0.0, %v2967
        %v2969 = vpop.f32.mrb[0].mxu0
        %2970 = vmatprep.mubr.bf16.mxu0 0
        %2971 = vmatmul.mubr.bf16.gmra.mrb[0].mxu0 %v2328
        %v2972 = vpop.f32.mrb[0].mxu0
        %v2973 = vadd.f32 0.0, %v2972
        %v2974 = vpop.f32.mrb[0].mxu0
        %v2975 = vpop.f32.mrb[0].mxu0
        %v2976 = vadd.f32 0.0, %v2975
        %v2977 = vpop.f32.mrb[0].mxu0
        %2978 = vmatprep.mubr.bf16.mxu0 0
        %2979 = vmatmul.mubr.bf16.gmra.mrb[0].mxu0 %v2331
        %v2980 = vpop.f32.mrb[0].mxu0
        %v2981 = vadd.f32 0.0, %v2980
        %v2982 = vpop.f32.mrb[0].mxu0
        %v2983 = vpop.f32.mrb[0].mxu0
        %v2984 = vadd.f32 0.0, %v2983
        %v2985 = vpop.f32.mrb[0].mxu0
        %2986 = vdwg.mxu0
        %v2987 = vadd.f32 %v2855, %v2941
        %v2988 = vadd.f32 %v2858, %v2944
        %v2989 = vadd.f32 %v2863, %v2949
        %v2990 = vadd.f32 %v2866, %v2952
        %v2991 = vadd.f32 %v2871, %v2957
        %v2992 = vadd.f32 %v2874, %v2960
        %v2993 = vadd.f32 %v2879, %v2965
        %v2994 = vadd.f32 %v2882, %v2968
        %v2995 = vadd.f32 %v2887, %v2973
        %v2996 = vadd.f32 %v2890, %v2976
        %v2997 = vadd.f32 %v2895, %v2981
        %v2998 = vadd.f32 %v2898, %v2984
        %s2999 = scalar_lea.vmem [#allocation5], 60
        %v3000 = vld [vmem:[%s2999] sm:$0x7]
        %v3002 = vunpack.c.l.b16 %v361
        %v3003 = vpack.c.b16 %v388, %v3002
        %v3004 = vrot.slane %v3003, 1
        %v3005 = vsel %vm1272, %v3004, %v1280
        %v3006 = vrot.slane %v2182, 1
        %v3007 = vsel %vm1272, %v1282, %v3006
        %v3008 = vrot.slane %v2183, 1
        %v3009 = vsel %vm1272, %v3006, %v3008
        %v3010 = vrot.slane %v2184, 1
        %v3011 = vsel %vm1272, %v3008, %v3010
        %v3012 = vrot.slane %v2294, 1
        %v3013 = vsel %vm1272, %v3010, %v3012
        %v3015 = vsel %vm454, %v3005, 0
        %v3018 = vsel %vm454, %v3007, 0
        %v3021 = vsel %vm454, %v3009, 0
        %v3024 = vsel %vm454, %v3011, 0
        %v3027 = vsel %vm454, %v3013, 0
        %v3030 = vand.u32 %v3000, %v476
        %3032 = vmatprep.subr.bf16.mxu0 0
        %3033 = vmatpush1.bf16.msra.mxu0 %v3030
        %3034 = vmatprep.subr.bf16.mxu0 0
        %3035 = vmatpush1.bf16.msra.mxu0 0
        %3036 = vmatprep.subr.bf16.mxu0 0
        %3037 = vmatpush1.bf16.msra.mxu0 0
        %3038 = vmatprep.subr.bf16.mxu0 0
        %3039 = vmatpush1.bf16.msra.mxu0 0
        %3040 = vmatprep.subr.bf16.mxu0 0
        %3041 = vmatpush1.bf16.msra.mxu0 0
        %3042 = vmatprep.subr.bf16.mxu0 0
        %3043 = vmatpush1.bf16.msra.mxu0 0
        %3044 = vmatprep.subr.bf16.mxu0 0
        %3045 = vmatpush1.bf16.msra.mxu0 0
        %3046 = vmatprep.subr.bf16.mxu0 0
        %3047 = vmatpush1.bf16.msra.mxu0 0
        %3048 = vmatprep.subr.bf16.mxu0 0
        %3049 = vmatpush1.bf16.msra.mxu0 0
        %3050 = vmatprep.subr.bf16.mxu0 0
        %3051 = vmatpush1.bf16.msra.mxu0 0
        %3052 = vmatprep.subr.bf16.mxu0 0
        %3053 = vmatpush1.bf16.msra.mxu0 0
        %3054 = vmatprep.subr.bf16.mxu0 0
        %3055 = vmatpush1.bf16.msra.mxu0 0
        %3056 = vmatprep.subr.bf16.mxu0 0
        %3057 = vmatpush1.bf16.msra.mxu0 0
        %3058 = vmatprep.subr.bf16.mxu0 0
        %3059 = vmatpush1.bf16.msra.mxu0 0
        %3060 = vmatprep.subr.bf16.mxu0 0
        %3061 = vmatpush1.bf16.msra.mxu0 0
        %3062 = vmatprep.subr.bf16.mxu0 0
        %3063 = vmatpush1.bf16.msra.mxu0 0
        %3064 = vmatprep.mubr.bf16.mxu0 0
        %3065 = vmatmul.mubr.bf16.gmra.mrb[0].mxu0 %v3015
        %v3066 = vpop.f32.mrb[0].mxu0
        %v3067 = vadd.f32 0.0, %v3066
        %v3068 = vpop.f32.mrb[0].mxu0
        %v3069 = vpop.f32.mrb[0].mxu0
        %v3070 = vadd.f32 0.0, %v3069
        %v3071 = vpop.f32.mrb[0].mxu0
        %3072 = vmatprep.mubr.bf16.mxu0 0
        %3073 = vmatmul.mubr.bf16.gmra.mrb[0].mxu0 %v1299
        %v3074 = vpop.f32.mrb[0].mxu0
        %v3075 = vadd.f32 0.0, %v3074
        %v3076 = vpop.f32.mrb[0].mxu0
        %v3077 = vpop.f32.mrb[0].mxu0
        %v3078 = vadd.f32 0.0, %v3077
        %v3079 = vpop.f32.mrb[0].mxu0
        %3080 = vmatprep.mubr.bf16.mxu0 0
        %3081 = vmatmul.mubr.bf16.gmra.mrb[0].mxu0 %v3018
        %v3082 = vpop.f32.mrb[0].mxu0
        %v3083 = vadd.f32 0.0, %v3082
        %v3084 = vpop.f32.mrb[0].mxu0
        %v3085 = vpop.f32.mrb[0].mxu0
        %v3086 = vadd.f32 0.0, %v3085
        %v3087 = vpop.f32.mrb[0].mxu0
        %3088 = vmatprep.mubr.bf16.mxu0 0
        %3089 = vmatmul.mubr.bf16.gmra.mrb[0].mxu0 %v3021
        %v3090 = vpop.f32.mrb[0].mxu0
        %v3091 = vadd.f32 0.0, %v3090
        %v3092 = vpop.f32.mrb[0].mxu0
        %v3093 = vpop.f32.mrb[0].mxu0
        %v3094 = vadd.f32 0.0, %v3093
        %v3095 = vpop.f32.mrb[0].mxu0
        %3096 = vmatprep.mubr.bf16.mxu0 0
        %3097 = vmatmul.mubr.bf16.gmra.mrb[0].mxu0 %v3024
        %v3098 = vpop.f32.mrb[0].mxu0
        %v3099 = vadd.f32 0.0, %v3098
        %v3100 = vpop.f32.mrb[0].mxu0
        %v3101 = vpop.f32.mrb[0].mxu0
        %v3102 = vadd.f32 0.0, %v3101
        %v3103 = vpop.f32.mrb[0].mxu0
        %3104 = vmatprep.mubr.bf16.mxu0 0
        %3105 = vmatmul.mubr.bf16.gmra.mrb[0].mxu0 %v3027
        %v3106 = vpop.f32.mrb[0].mxu0
        %v3107 = vadd.f32 0.0, %v3106
        %v3108 = vpop.f32.mrb[0].mxu0
        %v3109 = vpop.f32.mrb[0].mxu0
        %v3110 = vadd.f32 0.0, %v3109
        %v3111 = vpop.f32.mrb[0].mxu0
        %3112 = vdwg.mxu0
        %v3113 = vadd.f32 %v2987, %v3067
        %v3114 = vadd.f32 %v2988, %v3070
        %v3115 = vadd.f32 %v2989, %v3075
        %v3116 = vadd.f32 %v2990, %v3078
        %v3117 = vadd.f32 %v2991, %v3083
        %v3118 = vadd.f32 %v2992, %v3086
        %v3119 = vadd.f32 %v2993, %v3091
        %v3120 = vadd.f32 %v2994, %v3094
        %v3121 = vadd.f32 %v2995, %v3099
        %v3122 = vadd.f32 %v2996, %v3102
        %v3123 = vadd.f32 %v2997, %v3107
        %v3124 = vadd.f32 %v2998, %v3110
        %v3125 = vadd.f32 %v3113, %v954
        %v3126 = vadd.f32 %v3114, %v954
        %v3127 = vadd.f32 %v3115, %v954
        %v3128 = vadd.f32 %v3116, %v954
        %v3129 = vadd.f32 %v3117, %v954
        %v3130 = vadd.f32 %v3118, %v954
        %v3131 = vadd.f32 %v3119, %v954
        %v3132 = vadd.f32 %v3120, %v954
        %v3133 = vadd.f32 %v3121, %v954
        %v3134 = vadd.f32 %v3122, %v954
        %v3135 = vadd.f32 %v3123, %v954
        %v3136 = vadd.f32 %v3124, %v954
        %v3137 = vmax.f32 %v3125, 0.0
        %v3138 = vmax.f32 %v3126, 0.0
        %v3139 = vmax.f32 %v3127, 0.0
        %v3140 = vmax.f32 %v3128, 0.0
        %v3141 = vmax.f32 %v3129, 0.0
        %v3142 = vmax.f32 %v3130, 0.0
        %v3143 = vmax.f32 %v3131, 0.0
        %v3144 = vmax.f32 %v3132, 0.0
        %v3145 = vmax.f32 %v3133, 0.0
        %v3146 = vmax.f32 %v3134, 0.0
        %v3147 = vmax.f32 %v3135, 0.0
        %v3148 = vmax.f32 %v3136, 0.0
        %v3149 = vpack.c.bf16 %v3138, %v3137
        %v3150 = vpack.c.bf16 %v3140, %v3139
        %v3151 = vpack.c.bf16 %v3142, %v3141
        %v3152 = vpack.c.bf16 %v3144, %v3143
        %v3153 = vpack.c.bf16 %v3146, %v3145
        %v3154 = vpack.c.bf16 %v3148, %v3147
        %s3155 = scalar_lea.vmem [#allocation7], 12
        %v3156 = vld [vmem:[%s3155] sm:$0x7]
        %v3158 = vand.u32 %v3156, %v476
        %3160 = vmatprep.subr.bf16.mxu0 0
        %3161 = vmatpush1.bf16.msra.mxu0 %v3158
        %3162 = vmatprep.subr.bf16.mxu0 0
        %3163 = vmatpush1.bf16.msra.mxu0 0
        %3164 = vmatprep.subr.bf16.mxu0 0
        %3165 = vmatpush1.bf16.msra.mxu0 0
        %3166 = vmatprep.subr.bf16.mxu0 0
        %3167 = vmatpush1.bf16.msra.mxu0 0
        %3168 = vmatprep.subr.bf16.mxu0 0
        %3169 = vmatpush1.bf16.msra.mxu0 0
        %3170 = vmatprep.subr.bf16.mxu0 0
        %3171 = vmatpush1.bf16.msra.mxu0 0
        %3172 = vmatprep.subr.bf16.mxu0 0
        %3173 = vmatpush1.bf16.msra.mxu0 0
        %3174 = vmatprep.subr.bf16.mxu0 0
        %3175 = vmatpush1.bf16.msra.mxu0 0
        %3176 = vmatprep.subr.bf16.mxu0 0
        %3177 = vmatpush1.bf16.msra.mxu0 0
        %3178 = vmatprep.subr.bf16.mxu0 0
        %3179 = vmatpush1.bf16.msra.mxu0 0
        %3180 = vmatprep.subr.bf16.mxu0 0
        %3181 = vmatpush1.bf16.msra.mxu0 0
        %3182 = vmatprep.subr.bf16.mxu0 0
        %3183 = vmatpush1.bf16.msra.mxu0 0
        %3184 = vmatprep.subr.bf16.mxu0 0
        %3185 = vmatpush1.bf16.msra.mxu0 0
        %3186 = vmatprep.subr.bf16.mxu0 0
        %3187 = vmatpush1.bf16.msra.mxu0 0
        %3188 = vmatprep.subr.bf16.mxu0 0
        %3189 = vmatpush1.bf16.msra.mxu0 0
        %3190 = vmatprep.subr.bf16.mxu0 0
        %3191 = vmatpush1.bf16.msra.mxu0 0
        %3192 = vmatprep.mubr.bf16.mxu0 0
        %3193 = vmatmul.mubr.bf16.gmra.mrb[0].mxu0 %v837
        %v3194 = vpop.f32.mrb[0].mxu0
        %v3195 = vadd.f32 0.0, %v3194
        %v3196 = vpop.f32.mrb[0].mxu0
        %v3197 = vpop.f32.mrb[0].mxu0
        %v3198 = vadd.f32 0.0, %v3197
        %v3199 = vpop.f32.mrb[0].mxu0
        %3200 = vmatprep.mubr.bf16.mxu0 0
        %3201 = vmatmul.mubr.bf16.gmra.mrb[0].mxu0 %v840
        %v3202 = vpop.f32.mrb[0].mxu0
        %v3203 = vadd.f32 0.0, %v3202
        %v3204 = vpop.f32.mrb[0].mxu0
        %v3205 = vpop.f32.mrb[0].mxu0
        %v3206 = vadd.f32 0.0, %v3205
        %v3207 = vpop.f32.mrb[0].mxu0
        %3208 = vmatprep.mubr.bf16.mxu0 0
        %3209 = vmatmul.mubr.bf16.gmra.mrb[0].mxu0 %v843
        %v3210 = vpop.f32.mrb[0].mxu0
        %v3211 = vadd.f32 0.0, %v3210
        %v3212 = vpop.f32.mrb[0].mxu0
        %v3213 = vpop.f32.mrb[0].mxu0
        %v3214 = vadd.f32 0.0, %v3213
        %v3215 = vpop.f32.mrb[0].mxu0
        %3216 = vmatprep.mubr.bf16.mxu0 0
        %3217 = vmatmul.mubr.bf16.gmra.mrb[0].mxu0 %v846
        %v3218 = vpop.f32.mrb[0].mxu0
        %v3219 = vadd.f32 0.0, %v3218
        %v3220 = vpop.f32.mrb[0].mxu0
        %v3221 = vpop.f32.mrb[0].mxu0
        %v3222 = vadd.f32 0.0, %v3221
        %v3223 = vpop.f32.mrb[0].mxu0
        %3224 = vmatprep.mubr.bf16.mxu0 0
        %3225 = vmatmul.mubr.bf16.gmra.mrb[0].mxu0 %v849
        %v3226 = vpop.f32.mrb[0].mxu0
        %v3227 = vadd.f32 0.0, %v3226
        %v3228 = vpop.f32.mrb[0].mxu0
        %v3229 = vpop.f32.mrb[0].mxu0
        %v3230 = vadd.f32 0.0, %v3229
        %v3231 = vpop.f32.mrb[0].mxu0
        %3232 = vmatprep.mubr.bf16.mxu0 0
        %3233 = vmatmul.mubr.bf16.gmra.mrb[0].mxu0 %v852
        %v3234 = vpop.f32.mrb[0].mxu0
        %v3235 = vadd.f32 0.0, %v3234
        %v3236 = vpop.f32.mrb[0].mxu0
        %v3237 = vpop.f32.mrb[0].mxu0
        %v3238 = vadd.f32 0.0, %v3237
        %v3239 = vpop.f32.mrb[0].mxu0
        %3240 = vdwg.mxu0
        %v3242 = vsel %vm1077, %v3149, 0
        %v3245 = vsel %vm1077, %v3150, 0
        %v3248 = vsel %vm1077, %v3151, 0
        %v3251 = vsel %vm1077, %v3152, 0
        %v3254 = vsel %vm1077, %v3153, 0
        %v3257 = vsel %vm1077, %v3154, 0
        %3259 = vmatprep.subr.bf16.mxu0 0
        %3260 = vmatpush1.bf16.msra.mxu0 %v1097
        %3261 = vmatprep.subr.bf16.mxu0 0
        %3262 = vmatpush1.bf16.msra.mxu0 0
        %3263 = vmatprep.subr.bf16.mxu0 0
        %3264 = vmatpush1.bf16.msra.mxu0 0
        %3265 = vmatprep.subr.bf16.mxu0 0
        %3266 = vmatpush1.bf16.msra.mxu0 0
        %3267 = vmatprep.subr.bf16.mxu0 0
        %3268 = vmatpush1.bf16.msra.mxu0 0
        %3269 = vmatprep.subr.bf16.mxu0 0
        %3270 = vmatpush1.bf16.msra.mxu0 0
        %3271 = vmatprep.subr.bf16.mxu0 0
        %3272 = vmatpush1.bf16.msra.mxu0 0
        %3273 = vmatprep.subr.bf16.mxu0 0
        %3274 = vmatpush1.bf16.msra.mxu0 0
        %3275 = vmatprep.subr.bf16.mxu0 0
        %3276 = vmatpush1.bf16.msra.mxu0 0
        %3277 = vmatprep.subr.bf16.mxu0 0
        %3278 = vmatpush1.bf16.msra.mxu0 0
        %3279 = vmatprep.subr.bf16.mxu0 0
        %3280 = vmatpush1.bf16.msra.mxu0 0
        %3281 = vmatprep.subr.bf16.mxu0 0
        %3282 = vmatpush1.bf16.msra.mxu0 0
        %3283 = vmatprep.subr.bf16.mxu0 0
        %3284 = vmatpush1.bf16.msra.mxu0 0
        %3285 = vmatprep.subr.bf16.mxu0 0
        %3286 = vmatpush1.bf16.msra.mxu0 0
        %3287 = vmatprep.subr.bf16.mxu0 0
        %3288 = vmatpush1.bf16.msra.mxu0 0
        %3289 = vmatprep.subr.bf16.mxu0 0
        %3290 = vmatpush1.bf16.msra.mxu0 0
        %3291 = vmatprep.mubr.bf16.mxu0 0
        %3292 = vmatmul.mubr.bf16.gmra.mrb[0].mxu0 %v3242
        %v3293 = vpop.f32.mrb[0].mxu0
        %v3294 = vadd.f32 %v1075, %v3293
        %v3295 = vpop.f32.mrb[0].mxu0
        %v3296 = vpop.f32.mrb[0].mxu0
        %v3297 = vadd.f32 %v1075, %v3296
        %v3298 = vpop.f32.mrb[0].mxu0
        %3299 = vmatprep.mubr.bf16.mxu0 0
        %3300 = vmatmul.mubr.bf16.gmra.mrb[0].mxu0 %v3245
        %v3301 = vpop.f32.mrb[0].mxu0
        %v3302 = vadd.f32 %v1075, %v3301
        %v3303 = vpop.f32.mrb[0].mxu0
        %v3304 = vpop.f32.mrb[0].mxu0
        %v3305 = vadd.f32 %v1075, %v3304
        %v3306 = vpop.f32.mrb[0].mxu0
        %3307 = vmatprep.mubr.bf16.mxu0 0
        %3308 = vmatmul.mubr.bf16.gmra.mrb[0].mxu0 %v3248
        %v3309 = vpop.f32.mrb[0].mxu0
        %v3310 = vadd.f32 %v1075, %v3309
        %v3311 = vpop.f32.mrb[0].mxu0
        %v3312 = vpop.f32.mrb[0].mxu0
        %v3313 = vadd.f32 %v1075, %v3312
        %v3314 = vpop.f32.mrb[0].mxu0
        %3315 = vmatprep.mubr.bf16.mxu0 0
        %3316 = vmatmul.mubr.bf16.gmra.mrb[0].mxu0 %v3251
        %v3317 = vpop.f32.mrb[0].mxu0
        %v3318 = vadd.f32 %v1075, %v3317
        %v3319 = vpop.f32.mrb[0].mxu0
        %v3320 = vpop.f32.mrb[0].mxu0
        %v3321 = vadd.f32 %v1075, %v3320
        %v3322 = vpop.f32.mrb[0].mxu0
        %3323 = vmatprep.mubr.bf16.mxu0 0
        %3324 = vmatmul.mubr.bf16.gmra.mrb[0].mxu0 %v3254
        %v3325 = vpop.f32.mrb[0].mxu0
        %v3326 = vadd.f32 %v1075, %v3325
        %v3327 = vpop.f32.mrb[0].mxu0
        %v3328 = vpop.f32.mrb[0].mxu0
        %v3329 = vadd.f32 %v1075, %v3328
        %v3330 = vpop.f32.mrb[0].mxu0
        %3331 = vmatprep.mubr.bf16.mxu0 0
        %3332 = vmatmul.mubr.bf16.gmra.mrb[0].mxu0 %v3257
        %v3333 = vpop.f32.mrb[0].mxu0
        %v3334 = vadd.f32 %v1075, %v3333
        %v3335 = vpop.f32.mrb[0].mxu0
        %v3336 = vpop.f32.mrb[0].mxu0
        %v3337 = vadd.f32 %v1075, %v3336
        %v3338 = vpop.f32.mrb[0].mxu0
        %3339 = vdwg.mxu0
        %v3340 = vadd.f32 %v3294, %v3195
        %v3341 = vadd.f32 %v3297, %v3198
        %v3342 = vadd.f32 %v3302, %v3203
        %v3343 = vadd.f32 %v3305, %v3206
        %v3344 = vadd.f32 %v3310, %v3211
        %v3345 = vadd.f32 %v3313, %v3214
        %v3346 = vadd.f32 %v3318, %v3219
        %v3347 = vadd.f32 %v3321, %v3222
        %v3348 = vadd.f32 %v3326, %v3227
        %v3349 = vadd.f32 %v3329, %v3230
        %v3350 = vadd.f32 %v3334, %v3235
        %v3351 = vadd.f32 %v3337, %v3238
        %v3352 = vmax.f32 %v3340, 0.0
        %v3353 = vmax.f32 %v3341, 0.0
        %v3354 = vmax.f32 %v3342, 0.0
        %v3355 = vmax.f32 %v3343, 0.0
        %v3356 = vmax.f32 %v3344, 0.0
        %v3357 = vmax.f32 %v3345, 0.0
        %v3358 = vmax.f32 %v3346, 0.0
        %v3359 = vmax.f32 %v3347, 0.0
        %v3360 = vmax.f32 %v3348, 0.0
        %v3361 = vmax.f32 %v3349, 0.0
        %v3362 = vmax.f32 %v3350, 0.0
        %v3363 = vmax.f32 %v3351, 0.0
        %v3364 = vpack.c.bf16 %v3353, %v3352
        %v3365 = vpack.c.bf16 %v3355, %v3354
        %v3366 = vpack.c.bf16 %v3357, %v3356
        %v3367 = vpack.c.bf16 %v3359, %v3358
        %v3368 = vpack.c.bf16 %v3361, %v3360
        %v3369 = vpack.c.bf16 %v3363, %v3362
        %v3376 = vunpack.c.l.b16 %v3364
        %v3377 = vunpack.c.h.b16 %v3364
        %v3378 = vunpack.c.l.b16 %v3365
        %v3379 = vunpack.c.h.b16 %v3365
        %v3380 = vunpack.c.l.b16 %v3366
        %v3381 = vunpack.c.h.b16 %v3366
        %v3382 = vunpack.c.l.b16 %v3367
        %v3383 = vunpack.c.h.b16 %v3367
        %v3384 = vunpack.c.l.b16 %v3368
        %v3385 = vunpack.c.h.b16 %v3368
        %v3386 = vunpack.c.l.b16 %v3369
        %v3387 = vunpack.c.h.b16 %v3369
        %v3388 = vpack.c.b16 %v3376, %v3376
        %v3389 = vpack.c.b16 %v3377, %v3377
        %v3390 = vpack.c.b16 %v3378, %v3378
        %v3391 = vpack.c.b16 %v3379, %v3379
        %v3392 = vpack.c.b16 %v3380, %v3380
        %v3393 = vpack.c.b16 %v3381, %v3381
        %v3394 = vpack.c.b16 %v3382, %v3382
        %v3395 = vpack.c.b16 %v3383, %v3383
        %v3396 = vpack.c.b16 %v3384, %v3384
        %v3397 = vpack.c.b16 %v3385, %v3385
        %v3398 = vpack.c.b16 %v3386, %v3386
        %v3399 = vpack.c.b16 %v3387, %v3387
        %s3412 = scalar_lea.vmem %s336, 144 [#allocation13]
        %3413 = vst.msk [vmem:[%s3412] sm:$0xf] %vm1252, %v3388
        %3414 = vst.msk [vmem:[%s3412 + $0x4] sm:$0xf] %vm1252, %v3389
        %3415 = vst.msk [vmem:[%s3412 + $0x8] sm:$0xf] %vm1252, %v3390
        %3416 = vst.msk [vmem:[%s3412 + $0xc] sm:$0xf] %vm1252, %v3391
        %3417 = vst.msk [vmem:[%s3412 + $0x10] sm:$0xf] %vm1252, %v3392
        %3418 = vst.msk [vmem:[%s3412 + $0x14] sm:$0xf] %vm1252, %v3393
        %3419 = vst.msk [vmem:[%s3412 + $0x18] sm:$0xf] %vm1252, %v3394
        %3420 = vst.msk [vmem:[%s3412 + $0x1c] sm:$0xf] %vm1252, %v3395
        %3421 = vst.msk [vmem:[%s3412 + $0x20] sm:$0xf] %vm1252, %v3396
        %3422 = vst.msk [vmem:[%s3412 + $0x24] sm:$0xf] %vm1252, %v3397
        %3423 = vst.msk [vmem:[%s3412 + $0x28] sm:$0xf] %vm1252, %v3398
        %3424 = vst.msk [vmem:[%s3412 + $0x2c] sm:$0xf] %vm1252, %v3399
        %s3425 = sand.u32 %s165, 1
        %s3426 = scalar_lea.sflag [#allocation4], %s3425
        %s3427 = sand.u32 %s165, 1
        %s3428 = smul.addr %s3427, 192
        %s3429 = scalar_lea.vmem [#allocation13], %s3428
        // Predicated region
        $region69: #{tpu_custom_call.1} parent=43 // pred_check
          %p3430 = pneg %p175
        $region70: #{tpu_custom_call.1} parent=43 // pred_check_branch
          %3432 = sbr.rel (%p3430) target = $region72
        $region71: #{tpu_custom_call.1} parent=43 // pred_region
          %s3434 = ssub.s32 3072, 3072
          %3435 = vsyncadd %s3426, %s3434
          %s3436 = smul.addr %s26, 48
          %s3437 = smul.addr %s3436, 64
          %s3438 = scalar_lea.hbm %s6, %s3437
          %s3439 = sshll.u32 %s3429, 4
          %s3440 = int_to_ptr.vmem [resolvable:$true] %s3439
          %3445 = dma.vmem_to_hbm [thread:$0]  %s3440, 3072, %s3438, %s3426, 64, 64, 4
        $region72: #{tpu_custom_call.1} parent=43 // pred_fallthru
          _
      $region44: #{tpu_custom_call.1} parent=5 // pred_fallthru
        _
      %p3446 = scmp.le.s32.totalorder 2, %s21
      // Predicated region
      $region73: #{tpu_custom_call.1} parent=5 // pred_check
        %p3447 = pneg %p3446
      $region74: #{tpu_custom_call.1} parent=5 // pred_check_branch
        %3449 = sbr.rel (%p3447) target = $region76
      $region75: #{tpu_custom_call.1} parent=5 // pred_region
        %s3450 = ssub.s32 %s21, 2
        // Predicated region
        $region77: #{tpu_custom_call.1} parent=75 // pred_check
          %p3451 = pneg %p181
        $region78: #{tpu_custom_call.1} parent=75 // pred_check_branch
          %3453 = sbr.rel (%p3451) target = $region80
        $region79: #{tpu_custom_call.1} parent=75 // pred_region
          %s3454 = sand.u32 %s166, 1
          %s3455 = scalar_lea.sflag [#allocation4], %s3454
          %s3456 = sand.u32 %s166, 1
          %s3457 = smul.addr %s3456, 192
          %s3458 = scalar_lea.vmem [#allocation13], %s3457
          %3459 = dma.done %s3455, 3072
        $region80: #{tpu_custom_call.1} parent=75 // pred_fallthru
          _
      $region76: #{tpu_custom_call.1} parent=5 // pred_fallthru
        _
    $region6: #{tpu_custom_call.1} parent=1 // loop_footer
      %s25 = sadd.s32 1, %s21
    $region7: #{tpu_custom_call.1} parent=1 // loop_footer_branch
      %20 = sbr.rel target = $region3
    $region8: #{tpu_custom_call.1} parent=1 // loop_exit
      _
    %3460 = vsyncpa [#allocation3], 1
    %s3461 = scalar_lea.sflag [#allocation3], 1
    %3462 = vsyncpa %s3461, 1
    %3463 = vsyncpa [#allocation6], 1
    %3464 = vsyncpa [#allocation9], 1
    %3465 = vsyncpa [#allocation12], 1
    %3466 = vsyncpa [#allocation4], 1
    %s3467 = scalar_lea.sflag [#allocation4], 1
    %3468 = vsyncpa %s3467, 1

</llo_original>
